<compile_context>
chip_gen: v7x
topology: tpu7x:2x2x1
jax: 0.10.0
libtpu: 0.0.40
codegen_flags: <defaults>
</compile_context>

<pallas_src>
import functools

import jax
import jax.numpy as jnp
from jax.experimental import pallas as pl
from jax.experimental.pallas import tpu as pltpu


def get_padding(kernel_size, dilation=1):
    return int((kernel_size * dilation - dilation) / 2)


# ---------------------------------------------------------------------------
# Probe: can parameters be single-buffered (pipeline_mode=pl.Buffered(1))?
# ---------------------------------------------------------------------------
_PARAM_SINGLE_BUFFER = None


def _single_buffer_params_supported():
    """True if BlockSpec(pipeline_mode=pl.Buffered(1)) lowers & runs here.

    Single-buffering the grid-constant parameter operands halves their
    resident VMEM (important for large-C AMPBlocks inside v7x's 64 MiB).
    Probed once, eagerly, so an unsupported jax/libtpu combination silently
    falls back to default double buffering instead of failing to compile.
    """
    global _PARAM_SINGLE_BUFFER
    if _PARAM_SINGLE_BUFFER is not None:
        return _PARAM_SINGLE_BUFFER
    try:
        with jax.ensure_compile_time_eval():
            def k(w_ref, x_ref, o_ref):
                o_ref[...] = x_ref[...] + w_ref[...]

            f = pl.pallas_call(
                k,
                out_shape=jax.ShapeDtypeStruct((16, 128), jnp.float32),
                grid=(2,),
                in_specs=[
                    pl.BlockSpec((8, 128), lambda i: (0, 0),
                                 pipeline_mode=pl.Buffered(1)),
                    pl.BlockSpec((8, 128), lambda i: (i, 0)),
                ],
                out_specs=pl.BlockSpec((8, 128), lambda i: (i, 0)),
            )
            jax.block_until_ready(
                f(jnp.zeros((8, 128), jnp.float32),
                  jnp.zeros((16, 128), jnp.float32)))
        _PARAM_SINGLE_BUFFER = True
    except Exception:
        _PARAM_SINGLE_BUFFER = False
    return _PARAM_SINGLE_BUFFER


# ---------------------------------------------------------------------------
# Fused AMPBlock kernel: one (batch, time-tile) grid cell runs the whole block.
# ---------------------------------------------------------------------------
def _amp_block_kernel(xw_ref, w1_ref, b1_ref, a1_ref, ib1_ref,
                      w2_ref, b2_ref, a2_ref, ib2_ref, o_ref,
                      *, K, dilations, H, T_total, use_im2col):
    t = pl.program_id(1)
    T_TILE, C = o_ref.shape
    T_WIN = xw_ref.shape[0]          # = T_TILE + 2*H

    cur = xw_ref[...].astype(jnp.float32)                        # (T_WIN, C)

    # Row-validity mask, built once per tile.  Rows whose global time index is
    # outside [0, T_total) must read as zero at every conv input (reproduces
    # PyTorch's per-conv zero padding).  For interior tiles the mask is all
    # ones and each application is a single broadcast multiply.
    g = jax.lax.broadcasted_iota(jnp.int32, (T_WIN, 1), 0) + (t * T_TILE - H)
    valid = ((g >= 0) & (g < T_total)).astype(jnp.float32)       # (T_WIN, 1)

    def conv(act, w_ref, li, b_row, d, t_out):
        """1-D conv over the time (sublane) axis as MXU matmul(s)."""
        wdt = w_ref.dtype
        if use_im2col:
            # Small C: contraction K*C fills the MXU better than C per tap.
            cols = jnp.concatenate(
                [act[k * d:k * d + t_out, :] for k in range(K)], axis=1)
            y = jnp.dot(cols.astype(wdt), w_ref[li],
                        preferred_element_type=jnp.float32)
        else:
            # C >= 128: per-tap accumulation keeps activations in place (no
            # (t_out, K*C) cols buffer / copy traffic).
            y = jnp.zeros((t_out, C), jnp.float32)
            for k in range(K):
                y = y + jnp.dot(act[k * d:k * d + t_out, :].astype(wdt),
                                w_ref[li, k * C:(k + 1) * C, :],
                                preferred_element_type=jnp.float32)
        return y + b_row

    p2 = get_padding(K, 1)
    cur_off, cur_rows = 0, T_WIN
    for li, d in enumerate(dilations):
        p1 = get_padding(K, d)
        shrink = p1 + p2

        # ---- SnakeBeta -> Conv1d(dilation=d), fused ----------------------
        a = a1_ref[li].astype(jnp.float32)
        ib = ib1_ref[li].astype(jnp.float32)
        s = jnp.sin(cur * a)
        act = cur + ib * (s * s)     # NOTE: snake(0) == 0, so zero padding is
        #                              preserved through the activation.
        t1 = cur_rows - 2 * p1
        y = conv(act, w1_ref, li, b1_ref[li].astype(jnp.float32), d, t1)
        y = y * valid[cur_off + p1: cur_off + p1 + t1]

        # ---- SnakeBeta -> Conv1d(dilation=1) + residual -------------------
        a = a2_ref[li].astype(jnp.float32)
        ib = ib2_ref[li].astype(jnp.float32)
        s = jnp.sin(y * a)
        act = y + ib * (s * s)
        t2 = t1 - 2 * p2
        y2 = conv(act, w2_ref, li, b2_ref[li].astype(jnp.float32), 1, t2)

        cur = y2 + cur[shrink: cur_rows - shrink, :]             # x = xt + x
        cur_off += shrink
        cur_rows = t2
        if li + 1 < len(dilations):
            cur = cur * valid[cur_off: cur_off + cur_rows]
        # Last layer: the remaining window is exactly the tile, all rows valid.

    o_ref[...] = cur.astype(o_ref.dtype)


# ---------------------------------------------------------------------------
# Host-side helpers / wrapper
# ---------------------------------------------------------------------------
def _derive_time_tile(T, C, H, K, n_layers, target, x_bytes, p_bytes,
                      vmem_limit_bytes, param_buffers):
    """Largest time tile (multiple of 8, or full T) fitting ~75% of VMEM limit."""
    def est(tile):
        t_win = tile + 2 * H
        io = 2 * t_win * C * x_bytes + 2 * tile * C * x_bytes    # dbl-buffered in/out
        prm = param_buffers * n_layers * (2 * K * C * C + 6 * C) * p_bytes
        extra = K if C < 128 else 1                              # im2col cols buffer
        inter = (3 + extra) * t_win * C * 4                      # f32 intermediates
        return io + prm + inter

    budget = int(0.75 * vmem_limit_bytes)
    if T <= target and est(T) <= budget:
        return T                      # single tile; block dim == full array dim
    tile = max(8, min(target, T) - (min(target, T) % 8))
    while tile > 8 and est(tile) > budget:
        tile -= 8
    return tile


def amp_block_forward(x_ncl, params, *, kernel_size=3, dilations=(1, 3, 5),
                      time_tile=1024, vmem_limit_bytes=64 * 1024 * 1024,
                      single_buffer_params=True):
    """AMPBlock forward.  x_ncl: (B, C, T) (PyTorch NCL).  Returns (B, C, T).

    Generation notes:
      * v5e/v6e (128 MiB VMEM): the 64 MiB default limit and time_tile=1024
        are comfortable; sweep time_tile upward for long sequences.
      * v7x (64 MiB VMEM/TC): pass vmem_limit_bytes ~ 48-56 MiB and (for
        C >= 512) time_tile ~ 512; bf16 params recommended.  Keep B*nT even so
        both TensorCores stay busy under the parallel grid.
    """
    assert kernel_size % 2 == 1 and kernel_size >= 3, "odd kernel_size required"
    B, C, T = x_ncl.shape
    K = kernel_size
    n = len(dilations)
    H = sum(get_padding(K, d) + get_padding(K, 1) for d in dilations)

    x = jnp.transpose(x_ncl, (0, 2, 1))       # (B, T, C): time->sublanes, C->lanes
    x_bytes = x.dtype.itemsize
    p_bytes = jnp.dtype(params["w1"].dtype).itemsize
    use_single = single_buffer_params and _single_buffer_params_supported()

    T_TILE = _derive_time_tile(T, C, H, K, n, time_tile, x_bytes, p_bytes,
                               vmem_limit_bytes, 1 if use_single else 2)
    nT = -(-T // T_TILE)                      # ceil
    T_round = nT * T_TILE
    T_WIN = T_TILE + 2 * H

    # Once-padded input + host-side overlapping windows: removes the in-kernel
    # halo concatenate and the second halo DMA stream.
    x_pad = jnp.pad(x, ((0, 0), (H, H + (T_round - T)), (0, 0)))
    idx = jnp.arange(nT)[:, None] * T_TILE + jnp.arange(T_WIN)[None, :]
    xw = jnp.take(x_pad, idx, axis=1)                  # (B, nT, T_WIN, C)

    kernel = functools.partial(
        _amp_block_kernel, K=K, dilations=tuple(dilations), H=H,
        T_total=T, use_im2col=(C < 128))

    const3 = lambda b, t: (0, 0, 0)
    if use_single:
        # Grid-constant parameters: single buffer (halves resident-weight VMEM).
        pspec = lambda shp: pl.BlockSpec(shp, const3, pipeline_mode=pl.Buffered(1))
    else:
        pspec = lambda shp: pl.BlockSpec(shp, const3)

    out = pl.pallas_call(
        kernel,
        out_shape=jax.ShapeDtypeStruct((B, T_round, C), x.dtype),
        grid=(B, nT),
        in_specs=[
            pl.BlockSpec((None, None, T_WIN, C), lambda b, t: (b, t, 0, 0)),  # window
            pspec((n, K * C, C)),   # w1 (resident across the whole grid)
            pspec((n, 1, C)),       # b1
            pspec((n, 1, C)),       # alpha1
            pspec((n, 1, C)),       # inv_beta1
            pspec((n, K * C, C)),   # w2
            pspec((n, 1, C)),       # b2
            pspec((n, 1, C)),       # alpha2
            pspec((n, 1, C)),       # inv_beta2
        ],
        out_specs=pl.BlockSpec((None, T_TILE, C), lambda b, t: (b, t, 0)),
        compiler_params=pltpu.CompilerParams(
            dimension_semantics=("parallel", "parallel"),   # megacore on v7x
            vmem_limit_bytes=vmem_limit_bytes),
    )(xw, params["w1"], params["b1"], params["alpha1"], params["inv_beta1"],
      params["w2"], params["b2"], params["alpha2"], params["inv_beta2"])

    out = out[:, :T, :]
    return jnp.transpose(out, (0, 2, 1))      # back to NCL (B, C, T)


# ---------------------------------------------------------------------------
# Parameter construction (deterministic; weight_norm folded, init N(0, 0.01))
# ---------------------------------------------------------------------------
def init_amp_block_params(key, channels, kernel_size=3, dilations=(1, 3, 5),
                          dtype=jnp.bfloat16):
    """bf16 by default (v6e/v7x MXU peak is bf16); pass dtype=float32 for exact
    parity with the f32 PyTorch reference."""
    n = len(dilations)
    K = kernel_size
    keys = iter(jax.random.split(key, 6 * n))

    def conv_w(k_):
        # stored in im2col layout (K*C_in, C_out); equals PyTorch weight[co, ci, k]
        # at [k*C + ci, co].  weight_norm folded into the effective weight.
        w = 0.01 * jax.random.normal(k_, (K, channels, channels), jnp.float32)
        return w.reshape(K * channels, channels).astype(dtype)

    def conv_b(k_):
        return (0.01 * jax.random.normal(k_, (1, channels), jnp.float32)).astype(dtype)

    def snake_ab(k_):
        # SnakeBeta(alpha_logscale=True): forward uses exp(log_alpha), exp(log_beta);
        # inv_beta = 1/(exp(log_beta) + 1e-9) is precomputed host-side.
        la, lb = 0.1 * jax.random.normal(k_, (2, 1, channels), jnp.float32)
        return jnp.exp(la).astype(dtype), (1.0 / (jnp.exp(lb) + 1e-9)).astype(dtype)

    w1, b1, w2, b2 = [], [], [], []
    a1, ib1, a2, ib2 = [], [], [], []
    for _ in range(n):
        w1.append(conv_w(next(keys))); b1.append(conv_b(next(keys)))
        w2.append(conv_w(next(keys))); b2.append(conv_b(next(keys)))
    for _ in range(n):
        a, ib = snake_ab(next(keys)); a1.append(a); ib1.append(ib)
        a, ib = snake_ab(next(keys)); a2.append(a); ib2.append(ib)

    return {
        "w1": jnp.stack(w1), "b1": jnp.stack(b1),
        "alpha1": jnp.stack(a1), "inv_beta1": jnp.stack(ib1),
        "w2": jnp.stack(w2), "b2": jnp.stack(b2),
        "alpha2": jnp.stack(a2), "inv_beta2": jnp.stack(ib2),
    }


# ---------------------------------------------------------------------------
# Pure-JAX reference (mirrors the PyTorch module) for correctness checking
# ---------------------------------------------------------------------------
def ref_amp_block(x_ncl, params, kernel_size, dilations):
    K = kernel_size
    x = x_ncl.astype(jnp.float32)
    B, C, T = x.shape

    def conv(v, w2d, b, d):
        w = w2d.astype(jnp.float32).reshape(K, C, C).transpose(2, 1, 0)  # (Cout,Cin,K)
        p = get_padding(K, d)
        y = jax.lax.conv_general_dilated(
            v, w, window_strides=(1,), padding=[(p, p)], rhs_dilation=(d,),
            dimension_numbers=("NCH", "OIH", "NCH"),
            precision=jax.lax.Precision.HIGHEST)
        return y + b.astype(jnp.float32).reshape(1, C, 1)

    def snake(v, a, ib):
        a = a.astype(jnp.float32).reshape(1, C, 1)
        ib = ib.astype(jnp.float32).reshape(1, C, 1)
        s = jnp.sin(a * v)
        return v + ib * s * s

    for i, d in enumerate(dilations):
        xt = snake(x, params["alpha1"][i], params["inv_beta1"][i])
        xt = conv(xt, params["w1"][i], params["b1"][i], d)
        xt = snake(xt, params["alpha2"][i], params["inv_beta2"][i])
        xt = conv(xt, params["w2"][i], params["b2"][i], 1)
        x = xt + x
    return x


# ---------------------------------------------------------------------------
if __name__ == "__main__":
    kernel_size, dilations = 3, (1, 3, 5)
    key = jax.random.PRNGKey(0)
    k1, k2, k3, k4 = jax.random.split(key, 4)

    # --- Config A: small-C (im2col path), f32 params, tiled time axis with a
    #     non-divisible sequence length (exercises padding + boundary masks).
    C_a, B_a, T_a = 64, 2, 120
    params_a = init_amp_block_params(k1, C_a, kernel_size, dilations,
                                     dtype=jnp.float32)
    x_a = jax.random.normal(k2, (B_a, C_a, T_a), jnp.float32)   # PyTorch NCL
    fwd_a = jax.jit(functools.partial(
        amp_block_forward, kernel_size=kernel_size, dilations=dilations,
        time_tile=32))   # tiny tile so the demo exercises the tiled path
    y_a = jax.block_until_ready(fwd_a(x_a, params_a))
    assert y_a.shape == (B_a, C_a, T_a), y_a.shape
    assert bool(jnp.all(jnp.isfinite(y_a)))
    err_a = float(jnp.max(jnp.abs(y_a - ref_amp_block(x_a, params_a,
                                                      kernel_size, dilations))))
    assert err_a < 2e-3, err_a

    # --- Config B: C >= 128 (per-tap MXU path) with bf16 weights (inference
    #     default); looser tolerance for the bf16 matmul inputs.
    C_b, B_b, T_b = 128, 1, 64
    params_b = init_amp_block_params(k3, C_b, kernel_size, dilations)  # bf16
    x_b = jax.random.normal(k4, (B_b, C_b, T_b), jnp.float32)
    fwd_b = jax.jit(functools.partial(
        amp_block_forward, kernel_size=kernel_size, dilations=dilations))
    y_b = jax.block_until_ready(fwd_b(x_b, params_b))
    assert y_b.shape == (B_b, C_b, T_b), y_b.shape
    assert bool(jnp.all(jnp.isfinite(y_b)))
    err_b = float(jnp.max(jnp.abs(y_b - ref_amp_block(x_b, params_b,
                                                      kernel_size, dilations))))
    assert err_b < 5e-2, err_b

    print("KERNEL_OK")
</pallas_src>

<mosaic_0001>
module attributes {stable_mosaic.version = 11 : i64} {
  func.func @_amp_block_kernel(%arg0: i32, %arg1: i32, %arg2: memref<1x1x56x64xf32, #tpu.memory_space<vmem>>, %arg3: memref<3x192x64xf32, #tpu.memory_space<vmem>>, %arg4: memref<3x1x64xf32, #tpu.memory_space<vmem>>, %arg5: memref<3x1x64xf32, #tpu.memory_space<vmem>>, %arg6: memref<3x1x64xf32, #tpu.memory_space<vmem>>, %arg7: memref<3x192x64xf32, #tpu.memory_space<vmem>>, %arg8: memref<3x1x64xf32, #tpu.memory_space<vmem>>, %arg9: memref<3x1x64xf32, #tpu.memory_space<vmem>>, %arg10: memref<3x1x64xf32, #tpu.memory_space<vmem>>, %arg11: memref<1x32x64xf32, #tpu.memory_space<vmem>>) attributes {dimension_semantics = [#tpu.dimension_semantics<parallel>, #tpu.dimension_semantics<parallel>], iteration_bounds = array<i64: 2, 4>, scalar_prefetch = 0 : i64, scratch_operands = 0 : i64, tpu.core_type = #tpu.core_type<tc>, window_params = [{transform_indices = @transform_0, window_bounds = array<i64: 1, 1, 56, 64>}, {pipeline_mode = #tpu.pipeline_mode<synchronous>, transform_indices = @transform_1, window_bounds = array<i64: 3, 192, 64>}, {pipeline_mode = #tpu.pipeline_mode<synchronous>, transform_indices = @transform_2, window_bounds = array<i64: 3, 1, 64>}, {pipeline_mode = #tpu.pipeline_mode<synchronous>, transform_indices = @transform_3, window_bounds = array<i64: 3, 1, 64>}, {pipeline_mode = #tpu.pipeline_mode<synchronous>, transform_indices = @transform_4, window_bounds = array<i64: 3, 1, 64>}, {pipeline_mode = #tpu.pipeline_mode<synchronous>, transform_indices = @transform_5, window_bounds = array<i64: 3, 192, 64>}, {pipeline_mode = #tpu.pipeline_mode<synchronous>, transform_indices = @transform_6, window_bounds = array<i64: 3, 1, 64>}, {pipeline_mode = #tpu.pipeline_mode<synchronous>, transform_indices = @transform_7, window_bounds = array<i64: 3, 1, 64>}, {pipeline_mode = #tpu.pipeline_mode<synchronous>, transform_indices = @transform_8, window_bounds = array<i64: 3, 1, 64>}, {transform_indices = @transform_9, window_bounds = array<i64: 1, 32, 64>}]} {
    %c0 = arith.constant 0 : index
    %c0_0 = arith.constant 0 : index
    %c0_1 = arith.constant 0 : index
    %c0_2 = arith.constant 0 : index
    %0 = vector.load %arg2[%c0, %c0_0, %c0_1, %c0_2] : memref<1x1x56x64xf32, #tpu.memory_space<vmem>>, vector<1x1x56x64xf32>
    %1 = vector.shape_cast %0 : vector<1x1x56x64xf32> to vector<56x64xf32>
    %2 = tpu.iota {dimensions = array<i32: 0>} : vector<56x1xi32>
    %c32_i32 = arith.constant 32 : i32
    %3 = arith.muli %arg1, %c32_i32 : i32
    %c12_i32 = arith.constant 12 : i32
    %4 = arith.subi %3, %c12_i32 : i32
    %5 = vector.broadcast %4 : i32 to vector<56x1xi32>
    %6 = arith.addi %2, %5 : vector<56x1xi32>
    %c0_i32 = arith.constant 0 : i32
    %7 = vector.broadcast %c0_i32 : i32 to vector<56x1xi32>
    %8 = arith.cmpi sge, %6, %7 : vector<56x1xi32>
    %c120_i32 = arith.constant 120 : i32
    %9 = vector.broadcast %c120_i32 : i32 to vector<56x1xi32>
    %10 = arith.cmpi slt, %6, %9 : vector<56x1xi32>
    %11 = arith.andi %8, %10 : vector<56x1xi1>
    %12 = arith.extui %11 : vector<56x1xi1> to vector<56x1xi32>
    %13 = arith.sitofp %12 : vector<56x1xi32> to vector<56x1xf32>
    %c0_3 = arith.constant 0 : index
    %c0_4 = arith.constant 0 : index
    %c0_5 = arith.constant 0 : index
    %14 = vector.load %arg5[%c0_3, %c0_4, %c0_5] : memref<3x1x64xf32, #tpu.memory_space<vmem>>, vector<1x1x64xf32>
    %15 = vector.shape_cast %14 : vector<1x1x64xf32> to vector<1x64xf32>
    %c0_6 = arith.constant 0 : index
    %c0_7 = arith.constant 0 : index
    %c0_8 = arith.constant 0 : index
    %16 = vector.load %arg6[%c0_6, %c0_7, %c0_8] : memref<3x1x64xf32, #tpu.memory_space<vmem>>, vector<1x1x64xf32>
    %17 = vector.shape_cast %16 : vector<1x1x64xf32> to vector<1x64xf32>
    %18 = vector.broadcast %15 : vector<1x64xf32> to vector<56x64xf32>
    %19 = arith.mulf %1, %18 : vector<56x64xf32>
    %20 = math.sin %19 : vector<56x64xf32>
    %21 = arith.mulf %20, %20 : vector<56x64xf32>
    %22 = vector.broadcast %17 : vector<1x64xf32> to vector<56x64xf32>
    %23 = arith.mulf %22, %21 : vector<56x64xf32>
    %24 = arith.addf %1, %23 : vector<56x64xf32>
    %c0_9 = arith.constant 0 : index
    %c0_10 = arith.constant 0 : index
    %c0_11 = arith.constant 0 : index
    %25 = vector.load %arg4[%c0_9, %c0_10, %c0_11] : memref<3x1x64xf32, #tpu.memory_space<vmem>>, vector<1x1x64xf32>
    %26 = vector.shape_cast %25 : vector<1x1x64xf32> to vector<1x64xf32>
    %27 = vector.extract_strided_slice %24 {offsets = [0, 0], sizes = [54, 64], strides = [1, 1]} : vector<56x64xf32> to vector<54x64xf32>
    %28 = vector.extract_strided_slice %24 {offsets = [1, 0], sizes = [54, 64], strides = [1, 1]} : vector<56x64xf32> to vector<54x64xf32>
    %29 = vector.extract_strided_slice %24 {offsets = [2, 0], sizes = [54, 64], strides = [1, 1]} : vector<56x64xf32> to vector<54x64xf32>
    %30 = tpu.concatenate %27, %28, %29 in 1 : vector<54x64xf32>, vector<54x64xf32>, vector<54x64xf32> -> vector<54x192xf32>
    %c0_12 = arith.constant 0 : index
    %c0_13 = arith.constant 0 : index
    %c0_14 = arith.constant 0 : index
    %31 = vector.load %arg3[%c0_12, %c0_13, %c0_14] : memref<3x192x64xf32, #tpu.memory_space<vmem>>, vector<1x192x64xf32>
    %32 = vector.shape_cast %31 : vector<1x192x64xf32> to vector<192x64xf32>
    %cst = arith.constant dense<0.000000e+00> : vector<54x64xf32>
    %33 = tpu.matmul %30, %32, %cst {dimension_numbers = #tpu.dot_dimension_numbers<[1], [0], [0], [1], [0, 0, 1, 1], [], []>} : vector<54x192xf32>, vector<192x64xf32>, vector<54x64xf32> -> vector<54x64xf32>
    %34 = vector.broadcast %26 : vector<1x64xf32> to vector<54x64xf32>
    %35 = arith.addf %33, %34 : vector<54x64xf32>
    %36 = vector.extract_strided_slice %13 {offsets = [1, 0], sizes = [54, 1], strides = [1, 1]} : vector<56x1xf32> to vector<54x1xf32>
    %37 = vector.broadcast %36 : vector<54x1xf32> to vector<54x64xf32>
    %38 = arith.mulf %35, %37 : vector<54x64xf32>
    %c0_15 = arith.constant 0 : index
    %c0_16 = arith.constant 0 : index
    %c0_17 = arith.constant 0 : index
    %39 = vector.load %arg9[%c0_15, %c0_16, %c0_17] : memref<3x1x64xf32, #tpu.memory_space<vmem>>, vector<1x1x64xf32>
    %40 = vector.shape_cast %39 : vector<1x1x64xf32> to vector<1x64xf32>
    %c0_18 = arith.constant 0 : index
    %c0_19 = arith.constant 0 : index
    %c0_20 = arith.constant 0 : index
    %41 = vector.load %arg10[%c0_18, %c0_19, %c0_20] : memref<3x1x64xf32, #tpu.memory_space<vmem>>, vector<1x1x64xf32>
    %42 = vector.shape_cast %41 : vector<1x1x64xf32> to vector<1x64xf32>
    %43 = vector.broadcast %40 : vector<1x64xf32> to vector<54x64xf32>
    %44 = arith.mulf %38, %43 : vector<54x64xf32>
    %45 = math.sin %44 : vector<54x64xf32>
    %46 = arith.mulf %45, %45 : vector<54x64xf32>
    %47 = vector.broadcast %42 : vector<1x64xf32> to vector<54x64xf32>
    %48 = arith.mulf %47, %46 : vector<54x64xf32>
    %49 = arith.addf %38, %48 : vector<54x64xf32>
    %c0_21 = arith.constant 0 : index
    %c0_22 = arith.constant 0 : index
    %c0_23 = arith.constant 0 : index
    %50 = vector.load %arg8[%c0_21, %c0_22, %c0_23] : memref<3x1x64xf32, #tpu.memory_space<vmem>>, vector<1x1x64xf32>
    %51 = vector.shape_cast %50 : vector<1x1x64xf32> to vector<1x64xf32>
    %52 = vector.extract_strided_slice %49 {offsets = [0, 0], sizes = [52, 64], strides = [1, 1]} : vector<54x64xf32> to vector<52x64xf32>
    %53 = vector.extract_strided_slice %49 {offsets = [1, 0], sizes = [52, 64], strides = [1, 1]} : vector<54x64xf32> to vector<52x64xf32>
    %54 = vector.extract_strided_slice %49 {offsets = [2, 0], sizes = [52, 64], strides = [1, 1]} : vector<54x64xf32> to vector<52x64xf32>
    %55 = tpu.concatenate %52, %53, %54 in 1 : vector<52x64xf32>, vector<52x64xf32>, vector<52x64xf32> -> vector<52x192xf32>
    %c0_24 = arith.constant 0 : index
    %c0_25 = arith.constant 0 : index
    %c0_26 = arith.constant 0 : index
    %56 = vector.load %arg7[%c0_24, %c0_25, %c0_26] : memref<3x192x64xf32, #tpu.memory_space<vmem>>, vector<1x192x64xf32>
    %57 = vector.shape_cast %56 : vector<1x192x64xf32> to vector<192x64xf32>
    %cst_27 = arith.constant dense<0.000000e+00> : vector<52x64xf32>
    %58 = tpu.matmul %55, %57, %cst_27 {dimension_numbers = #tpu.dot_dimension_numbers<[1], [0], [0], [1], [0, 0, 1, 1], [], []>} : vector<52x192xf32>, vector<192x64xf32>, vector<52x64xf32> -> vector<52x64xf32>
    %59 = vector.broadcast %51 : vector<1x64xf32> to vector<52x64xf32>
    %60 = arith.addf %58, %59 : vector<52x64xf32>
    %61 = vector.extract_strided_slice %1 {offsets = [2, 0], sizes = [52, 64], strides = [1, 1]} : vector<56x64xf32> to vector<52x64xf32>
    %62 = arith.addf %60, %61 : vector<52x64xf32>
    %63 = vector.extract_strided_slice %13 {offsets = [2, 0], sizes = [52, 1], strides = [1, 1]} : vector<56x1xf32> to vector<52x1xf32>
    %64 = vector.broadcast %63 : vector<52x1xf32> to vector<52x64xf32>
    %65 = arith.mulf %62, %64 : vector<52x64xf32>
    %c1 = arith.constant 1 : index
    %c0_28 = arith.constant 0 : index
    %c0_29 = arith.constant 0 : index
    %66 = vector.load %arg5[%c1, %c0_28, %c0_29] : memref<3x1x64xf32, #tpu.memory_space<vmem>>, vector<1x1x64xf32>
    %67 = vector.shape_cast %66 : vector<1x1x64xf32> to vector<1x64xf32>
    %c1_30 = arith.constant 1 : index
    %c0_31 = arith.constant 0 : index
    %c0_32 = arith.constant 0 : index
    %68 = vector.load %arg6[%c1_30, %c0_31, %c0_32] : memref<3x1x64xf32, #tpu.memory_space<vmem>>, vector<1x1x64xf32>
    %69 = vector.shape_cast %68 : vector<1x1x64xf32> to vector<1x64xf32>
    %70 = vector.broadcast %67 : vector<1x64xf32> to vector<52x64xf32>
    %71 = arith.mulf %65, %70 : vector<52x64xf32>
    %72 = math.sin %71 : vector<52x64xf32>
    %73 = arith.mulf %72, %72 : vector<52x64xf32>
    %74 = vector.broadcast %69 : vector<1x64xf32> to vector<52x64xf32>
    %75 = arith.mulf %74, %73 : vector<52x64xf32>
    %76 = arith.addf %65, %75 : vector<52x64xf32>
    %c1_33 = arith.constant 1 : index
    %c0_34 = arith.constant 0 : index
    %c0_35 = arith.constant 0 : index
    %77 = vector.load %arg4[%c1_33, %c0_34, %c0_35] : memref<3x1x64xf32, #tpu.memory_space<vmem>>, vector<1x1x64xf32>
    %78 = vector.shape_cast %77 : vector<1x1x64xf32> to vector<1x64xf32>
    %79 = vector.extract_strided_slice %76 {offsets = [0, 0], sizes = [46, 64], strides = [1, 1]} : vector<52x64xf32> to vector<46x64xf32>
    %80 = vector.extract_strided_slice %76 {offsets = [3, 0], sizes = [46, 64], strides = [1, 1]} : vector<52x64xf32> to vector<46x64xf32>
    %81 = vector.extract_strided_slice %76 {offsets = [6, 0], sizes = [46, 64], strides = [1, 1]} : vector<52x64xf32> to vector<46x64xf32>
    %82 = tpu.concatenate %79, %80, %81 in 1 : vector<46x64xf32>, vector<46x64xf32>, vector<46x64xf32> -> vector<46x192xf32>
    %c1_36 = arith.constant 1 : index
    %c0_37 = arith.constant 0 : index
    %c0_38 = arith.constant 0 : index
    %83 = vector.load %arg3[%c1_36, %c0_37, %c0_38] : memref<3x192x64xf32, #tpu.memory_space<vmem>>, vector<1x192x64xf32>
    %84 = vector.shape_cast %83 : vector<1x192x64xf32> to vector<192x64xf32>
    %cst_39 = arith.constant dense<0.000000e+00> : vector<46x64xf32>
    %85 = tpu.matmul %82, %84, %cst_39 {dimension_numbers = #tpu.dot_dimension_numbers<[1], [0], [0], [1], [0, 0, 1, 1], [], []>} : vector<46x192xf32>, vector<192x64xf32>, vector<46x64xf32> -> vector<46x64xf32>
    %86 = vector.broadcast %78 : vector<1x64xf32> to vector<46x64xf32>
    %87 = arith.addf %85, %86 : vector<46x64xf32>
    %88 = vector.extract_strided_slice %13 {offsets = [5, 0], sizes = [46, 1], strides = [1, 1]} : vector<56x1xf32> to vector<46x1xf32>
    %89 = vector.broadcast %88 : vector<46x1xf32> to vector<46x64xf32>
    %90 = arith.mulf %87, %89 : vector<46x64xf32>
    %c1_40 = arith.constant 1 : index
    %c0_41 = arith.constant 0 : index
    %c0_42 = arith.constant 0 : index
    %91 = vector.load %arg9[%c1_40, %c0_41, %c0_42] : memref<3x1x64xf32, #tpu.memory_space<vmem>>, vector<1x1x64xf32>
    %92 = vector.shape_cast %91 : vector<1x1x64xf32> to vector<1x64xf32>
    %c1_43 = arith.constant 1 : index
    %c0_44 = arith.constant 0 : index
    %c0_45 = arith.constant 0 : index
    %93 = vector.load %arg10[%c1_43, %c0_44, %c0_45] : memref<3x1x64xf32, #tpu.memory_space<vmem>>, vector<1x1x64xf32>
    %94 = vector.shape_cast %93 : vector<1x1x64xf32> to vector<1x64xf32>
    %95 = vector.broadcast %92 : vector<1x64xf32> to vector<46x64xf32>
    %96 = arith.mulf %90, %95 : vector<46x64xf32>
    %97 = math.sin %96 : vector<46x64xf32>
    %98 = arith.mulf %97, %97 : vector<46x64xf32>
    %99 = vector.broadcast %94 : vector<1x64xf32> to vector<46x64xf32>
    %100 = arith.mulf %99, %98 : vector<46x64xf32>
    %101 = arith.addf %90, %100 : vector<46x64xf32>
    %c1_46 = arith.constant 1 : index
    %c0_47 = arith.constant 0 : index
    %c0_48 = arith.constant 0 : index
    %102 = vector.load %arg8[%c1_46, %c0_47, %c0_48] : memref<3x1x64xf32, #tpu.memory_space<vmem>>, vector<1x1x64xf32>
    %103 = vector.shape_cast %102 : vector<1x1x64xf32> to vector<1x64xf32>
    %104 = vector.extract_strided_slice %101 {offsets = [0, 0], sizes = [44, 64], strides = [1, 1]} : vector<46x64xf32> to vector<44x64xf32>
    %105 = vector.extract_strided_slice %101 {offsets = [1, 0], sizes = [44, 64], strides = [1, 1]} : vector<46x64xf32> to vector<44x64xf32>
    %106 = vector.extract_strided_slice %101 {offsets = [2, 0], sizes = [44, 64], strides = [1, 1]} : vector<46x64xf32> to vector<44x64xf32>
    %107 = tpu.concatenate %104, %105, %106 in 1 : vector<44x64xf32>, vector<44x64xf32>, vector<44x64xf32> -> vector<44x192xf32>
    %c1_49 = arith.constant 1 : index
    %c0_50 = arith.constant 0 : index
    %c0_51 = arith.constant 0 : index
    %108 = vector.load %arg7[%c1_49, %c0_50, %c0_51] : memref<3x192x64xf32, #tpu.memory_space<vmem>>, vector<1x192x64xf32>
    %109 = vector.shape_cast %108 : vector<1x192x64xf32> to vector<192x64xf32>
    %cst_52 = arith.constant dense<0.000000e+00> : vector<44x64xf32>
    %110 = tpu.matmul %107, %109, %cst_52 {dimension_numbers = #tpu.dot_dimension_numbers<[1], [0], [0], [1], [0, 0, 1, 1], [], []>} : vector<44x192xf32>, vector<192x64xf32>, vector<44x64xf32> -> vector<44x64xf32>
    %111 = vector.broadcast %103 : vector<1x64xf32> to vector<44x64xf32>
    %112 = arith.addf %110, %111 : vector<44x64xf32>
    %113 = vector.extract_strided_slice %65 {offsets = [4, 0], sizes = [44, 64], strides = [1, 1]} : vector<52x64xf32> to vector<44x64xf32>
    %114 = arith.addf %112, %113 : vector<44x64xf32>
    %115 = vector.extract_strided_slice %13 {offsets = [6, 0], sizes = [44, 1], strides = [1, 1]} : vector<56x1xf32> to vector<44x1xf32>
    %116 = vector.broadcast %115 : vector<44x1xf32> to vector<44x64xf32>
    %117 = arith.mulf %114, %116 : vector<44x64xf32>
    %c2 = arith.constant 2 : index
    %c0_53 = arith.constant 0 : index
    %c0_54 = arith.constant 0 : index
    %118 = vector.load %arg5[%c2, %c0_53, %c0_54] : memref<3x1x64xf32, #tpu.memory_space<vmem>>, vector<1x1x64xf32>
    %119 = vector.shape_cast %118 : vector<1x1x64xf32> to vector<1x64xf32>
    %c2_55 = arith.constant 2 : index
    %c0_56 = arith.constant 0 : index
    %c0_57 = arith.constant 0 : index
    %120 = vector.load %arg6[%c2_55, %c0_56, %c0_57] : memref<3x1x64xf32, #tpu.memory_space<vmem>>, vector<1x1x64xf32>
    %121 = vector.shape_cast %120 : vector<1x1x64xf32> to vector<1x64xf32>
    %122 = vector.broadcast %119 : vector<1x64xf32> to vector<44x64xf32>
    %123 = arith.mulf %117, %122 : vector<44x64xf32>
    %124 = math.sin %123 : vector<44x64xf32>
    %125 = arith.mulf %124, %124 : vector<44x64xf32>
    %126 = vector.broadcast %121 : vector<1x64xf32> to vector<44x64xf32>
    %127 = arith.mulf %126, %125 : vector<44x64xf32>
    %128 = arith.addf %117, %127 : vector<44x64xf32>
    %c2_58 = arith.constant 2 : index
    %c0_59 = arith.constant 0 : index
    %c0_60 = arith.constant 0 : index
    %129 = vector.load %arg4[%c2_58, %c0_59, %c0_60] : memref<3x1x64xf32, #tpu.memory_space<vmem>>, vector<1x1x64xf32>
    %130 = vector.shape_cast %129 : vector<1x1x64xf32> to vector<1x64xf32>
    %131 = vector.extract_strided_slice %128 {offsets = [0, 0], sizes = [34, 64], strides = [1, 1]} : vector<44x64xf32> to vector<34x64xf32>
    %132 = vector.extract_strided_slice %128 {offsets = [5, 0], sizes = [34, 64], strides = [1, 1]} : vector<44x64xf32> to vector<34x64xf32>
    %133 = vector.extract_strided_slice %128 {offsets = [10, 0], sizes = [34, 64], strides = [1, 1]} : vector<44x64xf32> to vector<34x64xf32>
    %134 = tpu.concatenate %131, %132, %133 in 1 : vector<34x64xf32>, vector<34x64xf32>, vector<34x64xf32> -> vector<34x192xf32>
    %c2_61 = arith.constant 2 : index
    %c0_62 = arith.constant 0 : index
    %c0_63 = arith.constant 0 : index
    %135 = vector.load %arg3[%c2_61, %c0_62, %c0_63] : memref<3x192x64xf32, #tpu.memory_space<vmem>>, vector<1x192x64xf32>
    %136 = vector.shape_cast %135 : vector<1x192x64xf32> to vector<192x64xf32>
    %cst_64 = arith.constant dense<0.000000e+00> : vector<34x64xf32>
    %137 = tpu.matmul %134, %136, %cst_64 {dimension_numbers = #tpu.dot_dimension_numbers<[1], [0], [0], [1], [0, 0, 1, 1], [], []>} : vector<34x192xf32>, vector<192x64xf32>, vector<34x64xf32> -> vector<34x64xf32>
    %138 = vector.broadcast %130 : vector<1x64xf32> to vector<34x64xf32>
    %139 = arith.addf %137, %138 : vector<34x64xf32>
    %140 = vector.extract_strided_slice %13 {offsets = [11, 0], sizes = [34, 1], strides = [1, 1]} : vector<56x1xf32> to vector<34x1xf32>
    %141 = vector.broadcast %140 : vector<34x1xf32> to vector<34x64xf32>
    %142 = arith.mulf %139, %141 : vector<34x64xf32>
    %c2_65 = arith.constant 2 : index
    %c0_66 = arith.constant 0 : index
    %c0_67 = arith.constant 0 : index
    %143 = vector.load %arg9[%c2_65, %c0_66, %c0_67] : memref<3x1x64xf32, #tpu.memory_space<vmem>>, vector<1x1x64xf32>
    %144 = vector.shape_cast %143 : vector<1x1x64xf32> to vector<1x64xf32>
    %c2_68 = arith.constant 2 : index
    %c0_69 = arith.constant 0 : index
    %c0_70 = arith.constant 0 : index
    %145 = vector.load %arg10[%c2_68, %c0_69, %c0_70] : memref<3x1x64xf32, #tpu.memory_space<vmem>>, vector<1x1x64xf32>
    %146 = vector.shape_cast %145 : vector<1x1x64xf32> to vector<1x64xf32>
    %147 = vector.broadcast %144 : vector<1x64xf32> to vector<34x64xf32>
    %148 = arith.mulf %142, %147 : vector<34x64xf32>
    %149 = math.sin %148 : vector<34x64xf32>
    %150 = arith.mulf %149, %149 : vector<34x64xf32>
    %151 = vector.broadcast %146 : vector<1x64xf32> to vector<34x64xf32>
    %152 = arith.mulf %151, %150 : vector<34x64xf32>
    %153 = arith.addf %142, %152 : vector<34x64xf32>
    %c2_71 = arith.constant 2 : index
    %c0_72 = arith.constant 0 : index
    %c0_73 = arith.constant 0 : index
    %154 = vector.load %arg8[%c2_71, %c0_72, %c0_73] : memref<3x1x64xf32, #tpu.memory_space<vmem>>, vector<1x1x64xf32>
    %155 = vector.shape_cast %154 : vector<1x1x64xf32> to vector<1x64xf32>
    %156 = vector.extract_strided_slice %153 {offsets = [0, 0], sizes = [32, 64], strides = [1, 1]} : vector<34x64xf32> to vector<32x64xf32>
    %157 = vector.extract_strided_slice %153 {offsets = [1, 0], sizes = [32, 64], strides = [1, 1]} : vector<34x64xf32> to vector<32x64xf32>
    %158 = vector.extract_strided_slice %153 {offsets = [2, 0], sizes = [32, 64], strides = [1, 1]} : vector<34x64xf32> to vector<32x64xf32>
    %159 = tpu.concatenate %156, %157, %158 in 1 : vector<32x64xf32>, vector<32x64xf32>, vector<32x64xf32> -> vector<32x192xf32>
    %c2_74 = arith.constant 2 : index
    %c0_75 = arith.constant 0 : index
    %c0_76 = arith.constant 0 : index
    %160 = vector.load %arg7[%c2_74, %c0_75, %c0_76] : memref<3x192x64xf32, #tpu.memory_space<vmem>>, vector<1x192x64xf32>
    %161 = vector.shape_cast %160 : vector<1x192x64xf32> to vector<192x64xf32>
    %cst_77 = arith.constant dense<0.000000e+00> : vector<32x64xf32>
    %162 = tpu.matmul %159, %161, %cst_77 {dimension_numbers = #tpu.dot_dimension_numbers<[1], [0], [0], [1], [0, 0, 1, 1], [], []>} : vector<32x192xf32>, vector<192x64xf32>, vector<32x64xf32> -> vector<32x64xf32>
    %163 = vector.broadcast %155 : vector<1x64xf32> to vector<32x64xf32>
    %164 = arith.addf %162, %163 : vector<32x64xf32>
    %165 = vector.extract_strided_slice %117 {offsets = [6, 0], sizes = [32, 64], strides = [1, 1]} : vector<44x64xf32> to vector<32x64xf32>
    %166 = arith.addf %164, %165 : vector<32x64xf32>
    %c0_78 = arith.constant 0 : index
    %c0_79 = arith.constant 0 : index
    %c0_80 = arith.constant 0 : index
    %167 = vector.load %arg11[%c0_78, %c0_79, %c0_80] : memref<1x32x64xf32, #tpu.memory_space<vmem>>, vector<1x32x64xf32>
    %168 = vector.shape_cast %167 : vector<1x32x64xf32> to vector<32x64xf32>
    %169 = vector.shape_cast %166 : vector<32x64xf32> to vector<1x32x64xf32>
    tpu.vector_store %arg11[%c0_78, %c0_79, %c0_80], %169 {strides = array<i32>} : memref<1x32x64xf32, #tpu.memory_space<vmem>>, vector<1x32x64xf32>,
    return
  }
  func.func @transform_0(%arg0: i32, %arg1: i32) -> (i32, i32, i32, i32) {
    %c0_i32 = arith.constant 0 : i32
    %c0_i32_0 = arith.constant 0 : i32
    %c0_i32_1 = arith.constant 0 : i32
    return %arg0, %arg1, %c0_i32, %c0_i32_0 : i32, i32, i32, i32
  }
  func.func @transform_1(%arg0: i32, %arg1: i32) -> (i32, i32, i32) {
    %c0_i32 = arith.constant 0 : i32
    %c0_i32_0 = arith.constant 0 : i32
    %c0_i32_1 = arith.constant 0 : i32
    %c0_i32_2 = arith.constant 0 : i32
    return %c0_i32, %c0_i32_0, %c0_i32_1 : i32, i32, i32
  }
  func.func @transform_2(%arg0: i32, %arg1: i32) -> (i32, i32, i32) {
    %c0_i32 = arith.constant 0 : i32
    %c0_i32_0 = arith.constant 0 : i32
    %c0_i32_1 = arith.constant 0 : i32
    %c0_i32_2 = arith.constant 0 : i32
    return %c0_i32, %c0_i32_0, %c0_i32_1 : i32, i32, i32
  }
  func.func @transform_3(%arg0: i32, %arg1: i32) -> (i32, i32, i32) {
    %c0_i32 = arith.constant 0 : i32
    %c0_i32_0 = arith.constant 0 : i32
    %c0_i32_1 = arith.constant 0 : i32
    %c0_i32_2 = arith.constant 0 : i32
    return %c0_i32, %c0_i32_0, %c0_i32_1 : i32, i32, i32
  }
  func.func @transform_4(%arg0: i32, %arg1: i32) -> (i32, i32, i32) {
    %c0_i32 = arith.constant 0 : i32
    %c0_i32_0 = arith.constant 0 : i32
    %c0_i32_1 = arith.constant 0 : i32
    %c0_i32_2 = arith.constant 0 : i32
    return %c0_i32, %c0_i32_0, %c0_i32_1 : i32, i32, i32
  }
  func.func @transform_5(%arg0: i32, %arg1: i32) -> (i32, i32, i32) {
    %c0_i32 = arith.constant 0 : i32
    %c0_i32_0 = arith.constant 0 : i32
    %c0_i32_1 = arith.constant 0 : i32
    %c0_i32_2 = arith.constant 0 : i32
    return %c0_i32, %c0_i32_0, %c0_i32_1 : i32, i32, i32
  }
  func.func @transform_6(%arg0: i32, %arg1: i32) -> (i32, i32, i32) {
    %c0_i32 = arith.constant 0 : i32
    %c0_i32_0 = arith.constant 0 : i32
    %c0_i32_1 = arith.constant 0 : i32
    %c0_i32_2 = arith.constant 0 : i32
    return %c0_i32, %c0_i32_0, %c0_i32_1 : i32, i32, i32
  }
  func.func @transform_7(%arg0: i32, %arg1: i32) -> (i32, i32, i32) {
    %c0_i32 = arith.constant 0 : i32
    %c0_i32_0 = arith.constant 0 : i32
    %c0_i32_1 = arith.constant 0 : i32
    %c0_i32_2 = arith.constant 0 : i32
    return %c0_i32, %c0_i32_0, %c0_i32_1 : i32, i32, i32
  }
  func.func @transform_8(%arg0: i32, %arg1: i32) -> (i32, i32, i32) {
    %c0_i32 = arith.constant 0 : i32
    %c0_i32_0 = arith.constant 0 : i32
    %c0_i32_1 = arith.constant 0 : i32
    %c0_i32_2 = arith.constant 0 : i32
    return %c0_i32, %c0_i32_0, %c0_i32_1 : i32, i32, i32
  }
  func.func @transform_9(%arg0: i32, %arg1: i32) -> (i32, i32, i32) {
    %c0_i32 = arith.constant 0 : i32
    %c0_i32_0 = arith.constant 0 : i32
    return %arg0, %arg1, %c0_i32 : i32, i32, i32
  }
}

</mosaic_0001>

<llo_original>
// kernel: amp_block_forward.1
$region0: #{amp_block_forward.1}
  #allocation0 [shape = 'u32[]', space=smem, size = 0x4, offset = 0x4, fixed_abs, tag = 'smem constant byte address 0x4 - core index']
  #allocation1 [shape = 'u32[144,128]{1,0:T(1,128)}', space=vmem, size = 0x12000, scoped, tag = 'internal scratch']
  %s0 = inlined_call_operand.hbm [shape: f32[2,4,56,64], index: 0, kind: input, shape index: {}]
  %s1 = inlined_call_operand.hbm [shape: f32[3,192,64], index: 1, kind: input, shape index: {}]
  %s2 = inlined_call_operand.hbm [shape: f32[3,1,64], index: 2, kind: input, shape index: {}]
  %s3 = inlined_call_operand.hbm [shape: f32[3,1,64], index: 3, kind: input, shape index: {}]
  %s4 = inlined_call_operand.hbm [shape: f32[3,1,64], index: 4, kind: input, shape index: {}]
  %s5 = inlined_call_operand.hbm [shape: f32[3,192,64], index: 5, kind: input, shape index: {}]
  %s6 = inlined_call_operand.hbm [shape: f32[3,1,64], index: 6, kind: input, shape index: {}]
  %s7 = inlined_call_operand.hbm [shape: f32[3,1,64], index: 7, kind: input, shape index: {}]
  %s8 = inlined_call_operand.hbm [shape: f32[3,1,64], index: 8, kind: input, shape index: {}]
  %s9 = inlined_call_operand.hbm [shape: f32[2,128,64], index: 9, kind: output, shape index: {}]
  %s10 = sld [smem:[#allocation0]]
  $region105: #{amp_block_forward.1} parent=0
    _
  %s12 = ssub.s32 1, %s10
  %s13 = scalar_select 0, %s12, %s10
  $region1: #{amp_block_forward.1} parent=0
    #allocation2 [shape = 'u8[57344]{0}', space=vmem, size = 0xe000, scoped, tag = 'input window, operand 0']
    #allocation3 [shape = 's32[2]{0}', space=sflag, size = 0x8, scoped, tag = 'scoped memory for amp_block_forward.1']
    #allocation4 [shape = 's32[2]{0}', space=sflag, size = 0x8, scoped, tag = 'scoped memory for amp_block_forward.1']
    #allocation5 [shape = 'u8[294912]{0}', space=vmem, size = 0x48000, scoped, tag = 'input window, operand 1, single buffered']
    #allocation6 [shape = 's32[1]{0}', space=sflag, size = 0x4, scoped, tag = 'scoped memory for amp_block_forward.1']
    #allocation7 [shape = 'u8[1536]{0}', space=vmem, size = 0x800, scoped, tag = 'input window, operand 2, single buffered']
    #allocation8 [shape = 'u8[1536]{0}', space=vmem, size = 0x800, scoped, tag = 'input window, operand 3, single buffered']
    #allocation9 [shape = 's32[1]{0}', space=sflag, size = 0x4, scoped, tag = 'scoped memory for amp_block_forward.1']
    #allocation10 [shape = 'u8[1536]{0}', space=vmem, size = 0x800, scoped, tag = 'input window, operand 4, single buffered']
    #allocation11 [shape = 'u8[294912]{0}', space=vmem, size = 0x48000, scoped, tag = 'input window, operand 5, single buffered']
    #allocation12 [shape = 's32[1]{0}', space=sflag, size = 0x4, scoped, tag = 'scoped memory for amp_block_forward.1']
    #allocation13 [shape = 'u8[1536]{0}', space=vmem, size = 0x800, scoped, tag = 'input window, operand 6, single buffered']
    #allocation14 [shape = 'u8[1536]{0}', space=vmem, size = 0x800, scoped, tag = 'input window, operand 7, single buffered']
    #allocation15 [shape = 's32[1]{0}', space=sflag, size = 0x4, scoped, tag = 'scoped memory for amp_block_forward.1']
    #allocation16 [shape = 'u8[1536]{0}', space=vmem, size = 0x800, scoped, tag = 'input window, operand 8, single buffered']
    #allocation17 [shape = 'u8[32768]{0}', space=vmem, size = 0x8000, scoped, tag = 'output window, operand 0']
    %14 = vsyncpa [#allocation3], 0
    %s15 = scalar_lea.sflag [#allocation3], 1
    %16 = vsyncpa %s15, 0
    %17 = vsyncpa [#allocation6], 0
    %18 = vsyncpa [#allocation9], 0
    %19 = vsyncpa [#allocation12], 0
    %20 = vsyncpa [#allocation15], 0
    %21 = vsyncpa [#allocation4], 0
    %s22 = scalar_lea.sflag [#allocation4], 1
    %23 = vsyncpa %s22, 0
    loop: start=0, step=1, limit=10
    $region2: #{amp_block_forward.1} parent=1 // loop_pre_header
      _
    $region3: #{amp_block_forward.1} parent=1 // loop_header
      %s25 = sphi 0, %s29
      %p26 = scmp.ge.s32.totalorder %s25, 10
      %s32 = sphi 0, %s44
      %s33 = sphi 0, %s40
      %s34 = sphi 0, %s32
      %s35 = sphi 0, %s33
      %s36 = sphi 0, %s34
      %s37 = sphi 0, %s35
      %s49 = sphi 0, %s51
      %s52 = sphi 0, %s49
      %s53 = sphi 0, %s52
      %s69 = sphi 0, %s53
      %s73 = sphi 0, %s73
      %s75 = sphi 0, %s73
      %s76 = sphi 0, %s75
      %s90 = sphi 0, %s76
      %s94 = sphi 0, %s94
      %s96 = sphi 0, %s94
      %s97 = sphi 0, %s96
      %s111 = sphi 0, %s97
      %s115 = sphi 0, %s115
      %s117 = sphi 0, %s115
      %s118 = sphi 0, %s117
      %s132 = sphi 0, %s118
      %s136 = sphi 0, %s136
      %s138 = sphi 0, %s136
      %s139 = sphi 0, %s138
      %s153 = sphi 0, %s139
      %s157 = sphi 0, %s157
      %s159 = sphi 0, %s157
      %s160 = sphi 0, %s159
      %s174 = sphi 0, %s160
      %s178 = sphi 0, %s178
      %s180 = sphi 0, %s178
      %s181 = sphi 0, %s180
      %s195 = sphi 0, %s181
      %s199 = sphi 0, %s199
      %s201 = sphi 0, %s199
      %s202 = sphi 0, %s201
      %s216 = sphi 0, %s202
      %s220 = sphi 0, %s220
      %s222 = sphi 0, %s220
      %s223 = sphi 0, %s222
      %s237 = sphi 0, %s223
      %s245 = sphi 0, %s247
      %s248 = sphi 0, %s245
      %s249 = sphi 0, %s248
      %s265 = sphi 0, %s249
    $region4: #{amp_block_forward.1} parent=1 // loop_header_branch
      %28 = sbr.rel (%p26) target = $region8
    $region5: #{amp_block_forward.1} parent=1 // loop_body
      %s30 = ssub.s32 %s25, 1
      %s31 = ssub.s32 %s25, 2
      %s38 = sadd.s32 1, %s33
      %p39 = scmp.ge.s32.totalorder %s38, 4
      %s40 = scalar_select %p39, 0, %s38
      %s41 = sadd.s32 1, %s32
      %s42 = scalar_select %p39, %s41, %s32
      %p43 = scmp.ge.s32.totalorder %s42, 2
      %s44 = scalar_select %p43, 0, %s42
      %s45 = ssub.s32 %s32, %s44
      %s46 = ssub.s32 %s33, %s40
      %s47 = sor.u32 %s45, %s46
      %p48 = scmp.eq.s32.totalorder %s47, 0
      %s50 = sadd.s32 %s49, 1
      %s51 = scalar_select %p48, %s49, %s50
      %p54 = pneg %p48
      %p55 = scmp.eq.s32.totalorder %s25, 7
      %p56 = por %p54, %p55
      %p57 = scmp.ne.s32.totalorder %s49, %s52
      %p58 = scmp.eq.s32.totalorder %s25, 0
      %p59 = por %p57, %p58
      %p60 = scmp.ne.s32.totalorder %s49, %s52
      %p61 = scmp.eq.s32.totalorder %s30, 7
      %p62 = por %p60, %p61
      %p63 = scmp.ne.s32.totalorder %s52, %s53
      %p64 = scmp.eq.s32.totalorder %s30, 0
      %p65 = por %p63, %p64
      %p66 = scmp.ne.s32.totalorder %s52, %s53
      %p67 = scmp.eq.s32.totalorder %s31, 7
      %p68 = por %p66, %p67
      %p70 = scmp.ne.s32.totalorder %s53, %s69
      %p71 = scmp.eq.s32.totalorder %s31, 0
      %p72 = por %p70, %p71
      %s74 = sadd.s32 %s73, 1
      %p77 = scmp.eq.s32.totalorder %s25, 7
      %p78 = scmp.ne.s32.totalorder %s73, %s75
      %p79 = scmp.eq.s32.totalorder %s25, 0
      %p80 = por %p78, %p79
      %p81 = scmp.ne.s32.totalorder %s73, %s75
      %p82 = scmp.eq.s32.totalorder %s30, 7
      %p83 = por %p81, %p82
      %p84 = scmp.ne.s32.totalorder %s75, %s76
      %p85 = scmp.eq.s32.totalorder %s30, 0
      %p86 = por %p84, %p85
      %p87 = scmp.ne.s32.totalorder %s75, %s76
      %p88 = scmp.eq.s32.totalorder %s31, 7
      %p89 = por %p87, %p88
      %p91 = scmp.ne.s32.totalorder %s76, %s90
      %p92 = scmp.eq.s32.totalorder %s31, 0
      %p93 = por %p91, %p92
      %s95 = sadd.s32 %s94, 1
      %p98 = scmp.eq.s32.totalorder %s25, 7
      %p99 = scmp.ne.s32.totalorder %s94, %s96
      %p100 = scmp.eq.s32.totalorder %s25, 0
      %p101 = por %p99, %p100
      %p102 = scmp.ne.s32.totalorder %s94, %s96
      %p103 = scmp.eq.s32.totalorder %s30, 7
      %p104 = por %p102, %p103
      %p105 = scmp.ne.s32.totalorder %s96, %s97
      %p106 = scmp.eq.s32.totalorder %s30, 0
      %p107 = por %p105, %p106
      %p108 = scmp.ne.s32.totalorder %s96, %s97
      %p109 = scmp.eq.s32.totalorder %s31, 7
      %p110 = por %p108, %p109
      %p112 = scmp.ne.s32.totalorder %s97, %s111
      %p113 = scmp.eq.s32.totalorder %s31, 0
      %p114 = por %p112, %p113
      %s116 = sadd.s32 %s115, 1
      %p119 = scmp.eq.s32.totalorder %s25, 7
      %p120 = scmp.ne.s32.totalorder %s115, %s117
      %p121 = scmp.eq.s32.totalorder %s25, 0
      %p122 = por %p120, %p121
      %p123 = scmp.ne.s32.totalorder %s115, %s117
      %p124 = scmp.eq.s32.totalorder %s30, 7
      %p125 = por %p123, %p124
      %p126 = scmp.ne.s32.totalorder %s117, %s118
      %p127 = scmp.eq.s32.totalorder %s30, 0
      %p128 = por %p126, %p127
      %p129 = scmp.ne.s32.totalorder %s117, %s118
      %p130 = scmp.eq.s32.totalorder %s31, 7
      %p131 = por %p129, %p130
      %p133 = scmp.ne.s32.totalorder %s118, %s132
      %p134 = scmp.eq.s32.totalorder %s31, 0
      %p135 = por %p133, %p134
      %s137 = sadd.s32 %s136, 1
      %p140 = scmp.eq.s32.totalorder %s25, 7
      %p141 = scmp.ne.s32.totalorder %s136, %s138
      %p142 = scmp.eq.s32.totalorder %s25, 0
      %p143 = por %p141, %p142
      %p144 = scmp.ne.s32.totalorder %s136, %s138
      %p145 = scmp.eq.s32.totalorder %s30, 7
      %p146 = por %p144, %p145
      %p147 = scmp.ne.s32.totalorder %s138, %s139
      %p148 = scmp.eq.s32.totalorder %s30, 0
      %p149 = por %p147, %p148
      %p150 = scmp.ne.s32.totalorder %s138, %s139
      %p151 = scmp.eq.s32.totalorder %s31, 7
      %p152 = por %p150, %p151
      %p154 = scmp.ne.s32.totalorder %s139, %s153
      %p155 = scmp.eq.s32.totalorder %s31, 0
      %p156 = por %p154, %p155
      %s158 = sadd.s32 %s157, 1
      %p161 = scmp.eq.s32.totalorder %s25, 7
      %p162 = scmp.ne.s32.totalorder %s157, %s159
      %p163 = scmp.eq.s32.totalorder %s25, 0
      %p164 = por %p162, %p163
      %p165 = scmp.ne.s32.totalorder %s157, %s159
      %p166 = scmp.eq.s32.totalorder %s30, 7
      %p167 = por %p165, %p166
      %p168 = scmp.ne.s32.totalorder %s159, %s160
      %p169 = scmp.eq.s32.totalorder %s30, 0
      %p170 = por %p168, %p169
      %p171 = scmp.ne.s32.totalorder %s159, %s160
      %p172 = scmp.eq.s32.totalorder %s31, 7
      %p173 = por %p171, %p172
      %p175 = scmp.ne.s32.totalorder %s160, %s174
      %p176 = scmp.eq.s32.totalorder %s31, 0
      %p177 = por %p175, %p176
      %s179 = sadd.s32 %s178, 1
      %p182 = scmp.eq.s32.totalorder %s25, 7
      %p183 = scmp.ne.s32.totalorder %s178, %s180
      %p184 = scmp.eq.s32.totalorder %s25, 0
      %p185 = por %p183, %p184
      %p186 = scmp.ne.s32.totalorder %s178, %s180
      %p187 = scmp.eq.s32.totalorder %s30, 7
      %p188 = por %p186, %p187
      %p189 = scmp.ne.s32.totalorder %s180, %s181
      %p190 = scmp.eq.s32.totalorder %s30, 0
      %p191 = por %p189, %p190
      %p192 = scmp.ne.s32.totalorder %s180, %s181
      %p193 = scmp.eq.s32.totalorder %s31, 7
      %p194 = por %p192, %p193
      %p196 = scmp.ne.s32.totalorder %s181, %s195
      %p197 = scmp.eq.s32.totalorder %s31, 0
      %p198 = por %p196, %p197
      %s200 = sadd.s32 %s199, 1
      %p203 = scmp.eq.s32.totalorder %s25, 7
      %p204 = scmp.ne.s32.totalorder %s199, %s201
      %p205 = scmp.eq.s32.totalorder %s25, 0
      %p206 = por %p204, %p205
      %p207 = scmp.ne.s32.totalorder %s199, %s201
      %p208 = scmp.eq.s32.totalorder %s30, 7
      %p209 = por %p207, %p208
      %p210 = scmp.ne.s32.totalorder %s201, %s202
      %p211 = scmp.eq.s32.totalorder %s30, 0
      %p212 = por %p210, %p211
      %p213 = scmp.ne.s32.totalorder %s201, %s202
      %p214 = scmp.eq.s32.totalorder %s31, 7
      %p215 = por %p213, %p214
      %p217 = scmp.ne.s32.totalorder %s202, %s216
      %p218 = scmp.eq.s32.totalorder %s31, 0
      %p219 = por %p217, %p218
      %s221 = sadd.s32 %s220, 1
      %p224 = scmp.eq.s32.totalorder %s25, 7
      %p225 = scmp.ne.s32.totalorder %s220, %s222
      %p226 = scmp.eq.s32.totalorder %s25, 0
      %p227 = por %p225, %p226
      %p228 = scmp.ne.s32.totalorder %s220, %s222
      %p229 = scmp.eq.s32.totalorder %s30, 7
      %p230 = por %p228, %p229
      %p231 = scmp.ne.s32.totalorder %s222, %s223
      %p232 = scmp.eq.s32.totalorder %s30, 0
      %p233 = por %p231, %p232
      %p234 = scmp.ne.s32.totalorder %s222, %s223
      %p235 = scmp.eq.s32.totalorder %s31, 7
      %p236 = por %p234, %p235
      %p238 = scmp.ne.s32.totalorder %s223, %s237
      %p239 = scmp.eq.s32.totalorder %s31, 0
      %p240 = por %p238, %p239
      %s241 = ssub.s32 %s32, %s44
      %s242 = ssub.s32 %s33, %s40
      %s243 = sor.u32 %s241, %s242
      %p244 = scmp.eq.s32.totalorder %s243, 0
      %s246 = sadd.s32 %s245, 1
      %s247 = scalar_select %p244, %s245, %s246
      %p250 = pneg %p244
      %p251 = scmp.eq.s32.totalorder %s25, 7
      %p252 = por %p250, %p251
      %p253 = scmp.ne.s32.totalorder %s245, %s248
      %p254 = scmp.eq.s32.totalorder %s25, 0
      %p255 = por %p253, %p254
      %p256 = scmp.ne.s32.totalorder %s245, %s248
      %p257 = scmp.eq.s32.totalorder %s30, 7
      %p258 = por %p256, %p257
      %p259 = scmp.ne.s32.totalorder %s248, %s249
      %p260 = scmp.eq.s32.totalorder %s30, 0
      %p261 = por %p259, %p260
      %p262 = scmp.ne.s32.totalorder %s248, %s249
      %p263 = scmp.eq.s32.totalorder %s31, 7
      %p264 = por %p262, %p263
      %p266 = scmp.ne.s32.totalorder %s249, %s265
      %p267 = scmp.eq.s32.totalorder %s31, 0
      %p268 = por %p266, %p267
      %p269 = scmp.le.s32.totalorder 1, %s25
      %p270 = scmp.lt.s32.totalorder %s25, 9
      %p271 = pnand %p269, %p270
      %p272 = pneg %p271
      // Predicated region
      $region9: #{amp_block_forward.1} parent=5 // pred_check
        _
      $region10: #{amp_block_forward.1} parent=5 // pred_check_branch
        %274 = sbr.rel (%p271) target = $region12
      $region11: #{amp_block_forward.1} parent=5 // pred_region
        %s275 = ssub.s32 %s25, 1
        // Predicated region
        $region13: #{amp_block_forward.1} parent=11 // pred_check
          %p276 = pneg %p86
        $region14: #{amp_block_forward.1} parent=11 // pred_check_branch
          %278 = sbr.rel (%p276) target = $region16
        $region15: #{amp_block_forward.1} parent=11 // pred_region
          %s280 = ssub.s32 9216, 9216
          %281 = vsyncadd [#allocation6], %s280
          %s282 = sshll.u32 [#allocation5], 4
          %s283 = int_to_ptr.vmem [resolvable:$true] %s282
          %288 = dma.hbm_to_vmem [thread:$0]  %s1, 9216, %s283, [#allocation6], 128, 128, 8
        $region16: #{amp_block_forward.1} parent=11 // pred_fallthru
          _
        // Predicated region
        $region17: #{amp_block_forward.1} parent=11 // pred_check
          %p289 = pneg %p107
        $region18: #{amp_block_forward.1} parent=11 // pred_check_branch
          %291 = sbr.rel (%p289) target = $region20
        $region19: #{amp_block_forward.1} parent=11 // pred_region
          %s293 = ssub.s32 48, 48
          %294 = vsyncadd [#allocation6], %s293
          %s295 = sshll.u32 [#allocation7], 4
          %s296 = int_to_ptr.vmem [resolvable:$true] %s295
          %301 = dma.hbm_to_vmem [thread:$0]  %s2, 48, %s296, [#allocation6], 16, 16, 1
        $region20: #{amp_block_forward.1} parent=11 // pred_fallthru
          _
        // Predicated region
        $region21: #{amp_block_forward.1} parent=11 // pred_check
          %p302 = pneg %p128
        $region22: #{amp_block_forward.1} parent=11 // pred_check_branch
          %304 = sbr.rel (%p302) target = $region24
        $region23: #{amp_block_forward.1} parent=11 // pred_region
          %s306 = ssub.s32 48, 48
          %307 = vsyncadd [#allocation9], %s306
          %s308 = sshll.u32 [#allocation8], 4
          %s309 = int_to_ptr.vmem [resolvable:$true] %s308
          %314 = dma.hbm_to_vmem [thread:$0]  %s3, 48, %s309, [#allocation9], 16, 16, 1
        $region24: #{amp_block_forward.1} parent=11 // pred_fallthru
          _
        // Predicated region
        $region25: #{amp_block_forward.1} parent=11 // pred_check
          %p315 = pneg %p149
        $region26: #{amp_block_forward.1} parent=11 // pred_check_branch
          %317 = sbr.rel (%p315) target = $region28
        $region27: #{amp_block_forward.1} parent=11 // pred_region
          %s319 = ssub.s32 48, 48
          %320 = vsyncadd [#allocation9], %s319
          %s321 = sshll.u32 [#allocation10], 4
          %s322 = int_to_ptr.vmem [resolvable:$true] %s321
          %327 = dma.hbm_to_vmem [thread:$0]  %s4, 48, %s322, [#allocation9], 16, 16, 1
        $region28: #{amp_block_forward.1} parent=11 // pred_fallthru
          _
        // Predicated region
        $region29: #{amp_block_forward.1} parent=11 // pred_check
          %p328 = pneg %p170
        $region30: #{amp_block_forward.1} parent=11 // pred_check_branch
          %330 = sbr.rel (%p328) target = $region32
        $region31: #{amp_block_forward.1} parent=11 // pred_region
          %s332 = ssub.s32 9216, 9216
          %333 = vsyncadd [#allocation12], %s332
          %s334 = sshll.u32 [#allocation11], 4
          %s335 = int_to_ptr.vmem [resolvable:$true] %s334
          %340 = dma.hbm_to_vmem [thread:$0]  %s5, 9216, %s335, [#allocation12], 128, 128, 8
        $region32: #{amp_block_forward.1} parent=11 // pred_fallthru
          _
        // Predicated region
        $region33: #{amp_block_forward.1} parent=11 // pred_check
          %p341 = pneg %p191
        $region34: #{amp_block_forward.1} parent=11 // pred_check_branch
          %343 = sbr.rel (%p341) target = $region36
        $region35: #{amp_block_forward.1} parent=11 // pred_region
          %s345 = ssub.s32 48, 48
          %346 = vsyncadd [#allocation12], %s345
          %s347 = sshll.u32 [#allocation13], 4
          %s348 = int_to_ptr.vmem [resolvable:$true] %s347
          %353 = dma.hbm_to_vmem [thread:$0]  %s6, 48, %s348, [#allocation12], 16, 16, 1
        $region36: #{amp_block_forward.1} parent=11 // pred_fallthru
          _
        // Predicated region
        $region37: #{amp_block_forward.1} parent=11 // pred_check
          %p354 = pneg %p212
        $region38: #{amp_block_forward.1} parent=11 // pred_check_branch
          %356 = sbr.rel (%p354) target = $region40
        $region39: #{amp_block_forward.1} parent=11 // pred_region
          %s358 = ssub.s32 48, 48
          %359 = vsyncadd [#allocation15], %s358
          %s360 = sshll.u32 [#allocation14], 4
          %s361 = int_to_ptr.vmem [resolvable:$true] %s360
          %366 = dma.hbm_to_vmem [thread:$0]  %s7, 48, %s361, [#allocation15], 16, 16, 1
        $region40: #{amp_block_forward.1} parent=11 // pred_fallthru
          _
        // Predicated region
        $region41: #{amp_block_forward.1} parent=11 // pred_check
          %p367 = pneg %p233
        $region42: #{amp_block_forward.1} parent=11 // pred_check_branch
          %369 = sbr.rel (%p367) target = $region44
        $region43: #{amp_block_forward.1} parent=11 // pred_region
          %s371 = ssub.s32 48, 48
          %372 = vsyncadd [#allocation15], %s371
          %s373 = sshll.u32 [#allocation16], 4
          %s374 = int_to_ptr.vmem [resolvable:$true] %s373
          %379 = dma.hbm_to_vmem [thread:$0]  %s8, 48, %s374, [#allocation15], 16, 16, 1
        $region44: #{amp_block_forward.1} parent=11 // pred_fallthru
          _
      $region12: #{amp_block_forward.1} parent=5 // pred_fallthru
        _
      %p380 = scmp.lt.s32.totalorder %s25, 8
      // Predicated region
      $region45: #{amp_block_forward.1} parent=5 // pred_check
        %p381 = pneg %p380
      $region46: #{amp_block_forward.1} parent=5 // pred_check_branch
        %383 = sbr.rel (%p381) target = $region48
      $region47: #{amp_block_forward.1} parent=5 // pred_region
        // Predicated region
        $region49: #{amp_block_forward.1} parent=47 // pred_check
          %p384 = pneg %p59
        $region50: #{amp_block_forward.1} parent=47 // pred_check_branch
          %386 = sbr.rel (%p384) target = $region52
        $region51: #{amp_block_forward.1} parent=47 // pred_region
          %s387 = sand.u32 %s49, 1
          %s388 = scalar_lea.sflag [#allocation3], %s387
          %s389 = sand.u32 %s49, 1
          %s390 = smul.addr %s389, 56
          %s391 = scalar_lea.vmem [#allocation2], %s390
          %s393 = ssub.s32 896, 896
          %394 = vsyncadd %s388, %s393
          %s395 = smul.addr %s33, 7
          %s396 = smul.addr %s32, 28
          %s397 = sadd.s32 %s395, %s396
          %s398 = smul.addr %s397, 128
          %s399 = scalar_lea.hbm %s0, %s398
          %s400 = sshll.u32 %s391, 4
          %s401 = int_to_ptr.vmem [resolvable:$true] %s400
          %406 = dma.hbm_to_vmem [thread:$0]  %s399, 896, %s401, %s388, 128, 128, 8
        $region52: #{amp_block_forward.1} parent=47 // pred_fallthru
          _
      $region48: #{amp_block_forward.1} parent=5 // pred_fallthru
        _
      %p407 = scmp.le.s32.totalorder 1, %s25
      %p408 = scmp.lt.s32.totalorder %s25, 9
      %p409 = pnand %p407, %p408
      %p410 = pneg %p409
      // Predicated region
      $region53: #{amp_block_forward.1} parent=5 // pred_check
        _
      $region54: #{amp_block_forward.1} parent=5 // pred_check_branch
        %412 = sbr.rel (%p409) target = $region56
      $region55: #{amp_block_forward.1} parent=5 // pred_region
        %s413 = ssub.s32 %s25, 1
        %s414 = sand.u32 %s52, 1
        %s415 = scalar_lea.sflag [#allocation3], %s414
        %s416 = sand.u32 %s52, 1
        %s417 = smul.addr %s416, 56
        %s418 = scalar_lea.vmem [#allocation2], %s417
        // Predicated region
        $region57: #{amp_block_forward.1} parent=55 // pred_check
          %p419 = pneg %p65
        $region58: #{amp_block_forward.1} parent=55 // pred_check_branch
          %421 = sbr.rel (%p419) target = $region60
        $region59: #{amp_block_forward.1} parent=55 // pred_region
          %422 = dma.done %s415, 896
        $region60: #{amp_block_forward.1} parent=55 // pred_fallthru
          _
        // Predicated region
        $region61: #{amp_block_forward.1} parent=55 // pred_check
          %p423 = pneg %p86
        $region62: #{amp_block_forward.1} parent=55 // pred_check_branch
          %425 = sbr.rel (%p423) target = $region64
        $region63: #{amp_block_forward.1} parent=55 // pred_region
          %426 = dma.done [#allocation6], 9216
        $region64: #{amp_block_forward.1} parent=55 // pred_fallthru
          _
        // Predicated region
        $region65: #{amp_block_forward.1} parent=55 // pred_check
          %p427 = pneg %p107
        $region66: #{amp_block_forward.1} parent=55 // pred_check_branch
          %429 = sbr.rel (%p427) target = $region68
        $region67: #{amp_block_forward.1} parent=55 // pred_region
          %430 = dma.done [#allocation6], 48
        $region68: #{amp_block_forward.1} parent=55 // pred_fallthru
          _
        // Predicated region
        $region69: #{amp_block_forward.1} parent=55 // pred_check
          %p431 = pneg %p128
        $region70: #{amp_block_forward.1} parent=55 // pred_check_branch
          %433 = sbr.rel (%p431) target = $region72
        $region71: #{amp_block_forward.1} parent=55 // pred_region
          %434 = dma.done [#allocation9], 48
        $region72: #{amp_block_forward.1} parent=55 // pred_fallthru
          _
        // Predicated region
        $region73: #{amp_block_forward.1} parent=55 // pred_check
          %p435 = pneg %p149
        $region74: #{amp_block_forward.1} parent=55 // pred_check_branch
          %437 = sbr.rel (%p435) target = $region76
        $region75: #{amp_block_forward.1} parent=55 // pred_region
          %438 = dma.done [#allocation9], 48
        $region76: #{amp_block_forward.1} parent=55 // pred_fallthru
          _
        // Predicated region
        $region77: #{amp_block_forward.1} parent=55 // pred_check
          %p439 = pneg %p170
        $region78: #{amp_block_forward.1} parent=55 // pred_check_branch
          %441 = sbr.rel (%p439) target = $region80
        $region79: #{amp_block_forward.1} parent=55 // pred_region
          %442 = dma.done [#allocation12], 9216
        $region80: #{amp_block_forward.1} parent=55 // pred_fallthru
          _
        // Predicated region
        $region81: #{amp_block_forward.1} parent=55 // pred_check
          %p443 = pneg %p191
        $region82: #{amp_block_forward.1} parent=55 // pred_check_branch
          %445 = sbr.rel (%p443) target = $region84
        $region83: #{amp_block_forward.1} parent=55 // pred_region
          %446 = dma.done [#allocation12], 48
        $region84: #{amp_block_forward.1} parent=55 // pred_fallthru
          _
        // Predicated region
        $region85: #{amp_block_forward.1} parent=55 // pred_check
          %p447 = pneg %p212
        $region86: #{amp_block_forward.1} parent=55 // pred_check_branch
          %449 = sbr.rel (%p447) target = $region88
        $region87: #{amp_block_forward.1} parent=55 // pred_region
          %450 = dma.done [#allocation15], 48
        $region88: #{amp_block_forward.1} parent=55 // pred_fallthru
          _
        // Predicated region
        $region89: #{amp_block_forward.1} parent=55 // pred_check
          %p451 = pneg %p233
        $region90: #{amp_block_forward.1} parent=55 // pred_check_branch
          %453 = sbr.rel (%p451) target = $region92
        $region91: #{amp_block_forward.1} parent=55 // pred_region
          %454 = dma.done [#allocation15], 48
        $region92: #{amp_block_forward.1} parent=55 // pred_fallthru
          _
        %s455 = sand.u32 %s52, 1
        %s456 = scalar_lea.sflag [#allocation3], %s455
        %s457 = sand.u32 %s52, 1
        %s458 = smul.addr %s457, 56
        %s459 = scalar_lea.vmem [#allocation2], %s458
        %p460 = pneg %p65
        %p461 = pneg %p62
        %p462 = pneg %p86
        %p463 = pneg %p83
        %p464 = pneg %p107
        %p465 = pneg %p104
        %p466 = pneg %p128
        %p467 = pneg %p125
        %p468 = pneg %p149
        %p469 = pneg %p146
        %p470 = pneg %p170
        %p471 = pneg %p167
        %p472 = pneg %p191
        %p473 = pneg %p188
        %p474 = pneg %p212
        %p475 = pneg %p209
        %p476 = pneg %p233
        %p477 = pneg %p230
        %p478 = pneg %p261
        %p479 = pneg %p258
        %s480 = sand.u32 %s248, 1
        %s481 = scalar_lea.sflag [#allocation4], %s480
        %s482 = sand.u32 %s248, 1
        %s483 = smul.addr %s482, 32
        %s484 = scalar_lea.vmem [#allocation17], %s483
        %s485 = smul.u32 4, %s35
        %v486 = vld [vmem:[%s418] sm:$0xff]
        %v487 = vld [vmem:[%s418 + $0x8] sm:$0xff]
        %v488 = vld [vmem:[%s418 + $0x10] sm:$0xff]
        %v489 = vld [vmem:[%s418 + $0x18] sm:$0xff]
        %v490 = vld [vmem:[%s418 + $0x20] sm:$0xff]
        %v491 = vld [vmem:[%s418 + $0x28] sm:$0xff]
        %v492 = vld [vmem:[%s418 + $0x30] sm:$0xff]
        %v493 = vlaneseq
        %v494 = vshrl.u32 %v493, 7
        %v495 = vadd.s32 %v494, 8
        %v496 = vadd.s32 %v494, 16
        %v497 = vadd.s32 %v494, 24
        %v498 = vadd.s32 %v494, 32
        %v499 = vadd.s32 %v494, 40
        %v500 = vadd.s32 %v494, 48
        %s501 = smul.u32 %s35, 32
        %s502 = ssub.s32 %s501, 12
        %v503 = vstv %s502
        %v504 = vadd.s32 %v494, %v503
        %v505 = vadd.s32 %v495, %v503
        %v506 = vadd.s32 %v496, %v503
        %v507 = vadd.s32 %v497, %v503
        %v508 = vadd.s32 %v498, %v503
        %v509 = vadd.s32 %v499, %v503
        %v510 = vadd.s32 %v500, %v503
        %vm511 = vcmp.ge.s32.totalorder %v504, 0
        %vm512 = vcmp.ge.s32.totalorder %v505, 0
        %vm513 = vcmp.ge.s32.totalorder %v506, 0
        %vm514 = vcmp.ge.s32.totalorder %v507, 0
        %vm515 = vcmp.ge.s32.totalorder %v508, 0
        %vm516 = vcmp.ge.s32.totalorder %v509, 0
        %vm517 = vcmp.ge.s32.totalorder %v510, 0
        %vm518 = vcmp.lt.s32.totalorder %v504, 120
        %vm519 = vcmp.lt.s32.totalorder %v505, 120
        %vm520 = vcmp.lt.s32.totalorder %v506, 120
        %vm521 = vcmp.lt.s32.totalorder %v507, 120
        %vm522 = vcmp.lt.s32.totalorder %v508, 120
        %vm523 = vcmp.lt.s32.totalorder %v509, 120
        %vm524 = vcmp.lt.s32.totalorder %v510, 120
        %vm525 = vmand %vm511, %vm518
        %vm526 = vmand %vm512, %vm519
        %vm527 = vmand %vm513, %vm520
        %vm528 = vmand %vm514, %vm521
        %vm529 = vmand %vm515, %vm522
        %vm530 = vmand %vm516, %vm523
        %vm531 = vmand %vm517, %vm524
        %v532 = vsel %vm525, 1, 0
        %v533 = vsel %vm526, 1, 0
        %v534 = vsel %vm527, 1, 0
        %v535 = vsel %vm528, 1, 0
        %v536 = vsel %vm529, 1, 0
        %v537 = vsel %vm530, 1, 0
        %v538 = vsel %vm531, 1, 0
        %v539 = vcvt.s32.f32 %v532
        %v540 = vcvt.s32.f32 %v533
        %v541 = vcvt.s32.f32 %v534
        %v542 = vcvt.s32.f32 %v535
        %v543 = vcvt.s32.f32 %v536
        %v544 = vcvt.s32.f32 %v537
        %v545 = vcvt.s32.f32 %v538
        %v546 = vld [vmem:[#allocation8] sm:$0x1]
        %v547 = vld [vmem:[#allocation10] sm:$0x1]
        %v549 = vlaneseq
        %v550 = vshrl.u32 %v549, 7
        %v551 = vsub.s32 0, %v550
        %v552 = vrot.slane %v546, %v551
        %v554 = vmul.f32 %v486, %v552
        %v555 = vmul.f32 %v487, %v552
        %v556 = vmul.f32 %v488, %v552
        %v557 = vmul.f32 %v489, %v552
        %v558 = vmul.f32 %v490, %v552
        %v559 = vmul.f32 %v491, %v552
        %v560 = vmul.f32 %v492, %v552
        %v561 = vand.u32 2147483647, %v554
        %vm562 = vcmp.le.f32.partialorder %v561, 0.7853982
        %vm563 = vcmp.lt.s32.totalorder %v554, 0
        %v564 = vand.u32 %v554, 2139095040
        %v565 = vshrl.u32 %v564, 23
        %v566 = vsub.s32 %v565, 127
        %v567 = vand.u32 2147483647, %v554
        %v568 = vand.u32 %v567, 8388607
        %v569 = vor.u32 %v568, 8388608
        %v570 = vsub.s32 0, %v569
        %v571 = vadd.s32 %v566, 1
        %vm572 = vcmp.gt.s32.totalorder %v571, 0
        %v573 = vsel %vm572, %v571, 0
        %v574 = vshrl.u32 %v573, 5
        %v575 = vand.u32 %v573, 31
        %v576 = vsub.s32 32, %v575
        %v577 = vshrl.u32 683565275, %v576
        %v578 = vshll.u32 683565275, %v575
        %v579 = vshrl.u32 2475754826, %v576
        %v580 = vor.u32 %v578, %v579
        %v581 = vshll.u32 2475754826, %v575
        %v582 = vshrl.u32 2131351028, %v576
        %v583 = vor.u32 %v581, %v582
        %v584 = vshll.u32 2131351028, %v575
        %v585 = vshrl.u32 2102212464, %v576
        %v586 = vor.u32 %v584, %v585
        %v587 = vshll.u32 2102212464, %v575
        %v588 = vshrl.u32 920167782, %v576
        %v589 = vor.u32 %v587, %v588
        %v590 = vshll.u32 920167782, %v575
        %v591 = vshrl.u32 1326507024, %v576
        %v592 = vor.u32 %v590, %v591
        %vm593 = vcmp.lt.s32.totalorder %v574, 1
        %vm594 = vcmp.lt.s32.totalorder %v574, 2
        %vm595 = vcmp.lt.s32.totalorder %v574, 3
        %vm596 = vcmp.lt.s32.totalorder %v574, 4
        %v597 = vsel %vm593, %v577, %v580
        %v598 = vsel %vm596, %v586, 2102212464
        %v599 = vsel %vm595, %v583, %v598
        %v600 = vsel %vm594, %v597, %v599
        %v601 = vsel %vm593, %v580, %v583
        %v602 = vsel %vm596, %v589, 920167782
        %v603 = vsel %vm595, %v586, %v602
        %v604 = vsel %vm594, %v601, %v603
        %v605 = vsel %vm593, %v583, %v586
        %v606 = vsel %vm596, %v592, 1326507024
        %v607 = vsel %vm595, %v589, %v606
        %v608 = vsel %vm594, %v605, %v607
        %v609 = vshll.u32 %v569, 8
        %v610 = vmul.u32.u64.compose %v609, %v608
        %v611 = vextract.low.u32 %v610
        %v612 = vextract.high.u32 %v610
        %v613 = vmul.u32.u64.compose %v609, %v604
        %v614 = vextract.low.u32 %v613
        %v615 = vextract.high.u32 %v613
        %v616 = vmul.u32 %v609, %v600
        %v617 = vadd.s32 %v612, %v614
        %vm618 = vc.u32 %v612, %v614
        %v619 = vadd.s32 %v615, 1
        %v620 = vsel %vm618, %v619, %v615
        %v621 = vadd.s32 %v616, %v620
        %v622 = vadd.s32 %v621, 536870912
        %v623 = vshrl.u32 %v622, 30
        %v624 = vshll.u32 %v623, 30
        %v625 = vsub.s32 %v621, %v624
        %vm626 = vcmp.lt.s32.totalorder %v625, 0
        %v627 = vsub.s32 0, %v625
        %v628 = vsel %vm626, %v627, %v625
        %v629 = vclz %v628
        %v630 = vsub.s32 %v629, 2
        %vm631 = vcmp.gt.s32.totalorder 0, %v630
        %v632 = vsel %vm631, 0, %v630
        %v633 = vsub.s32 32, %v632
        %v634 = vshll.u32 %v625, %v632
        %v635 = vshrl.u32 %v617, %v633
        %v636 = vor.u32 %v634, %v635
        %v637 = vsub.s32 4294967266, %v632
        %v638 = vadd.s32 %v637, 127
        %v639 = vshll.u32 %v638, 23
        %v640 = vor.u32 4788187, %v639
        %v641 = vand.u32 2147483647, %v640
        %v643 = vcvt.s32.f32 %v636
        %v644 = vmul.f32 %v643, %v641
        %v645 = vxor.u32 %v644, 2147483648
        %v646 = vsel %vm563, %v645, %v644
        %v647 = vsub.s32 4, %v623
        %v648 = vsel %vm563, %v647, %v623
        %v649 = vsel %vm562, %v554, %v646
        %v650 = vsel %vm562, 0, %v648
        %v651 = vcosq.f32.pop %v649
        %v652 = vsinq.f32.pop %v649
        %vm653 = vweird.f32 %v554
        %v654 = vadd.s32 %v650, 3
        %v655 = vand.u32 %v654, 3
        %vm656 = vcmp.lt.s32.totalorder %v655, 2
        %vm657 = vcmp.eq.s32.totalorder %v655, 0
        %v658 = vxor.u32 %v652, 2147483648
        %v659 = vsel %vm657, %v651, %v658
        %vm660 = vcmp.eq.s32.totalorder %v655, 2
        %v661 = vxor.u32 %v651, 2147483648
        %v662 = vsel %vm660, %v661, %v652
        %v663 = vsel %vm656, %v659, %v662
        %v664 = vsel %vm653, nan, %v663
        %v665 = vand.u32 2147483647, %v555
        %vm666 = vcmp.le.f32.partialorder %v665, 0.7853982
        %vm667 = vcmp.lt.s32.totalorder %v555, 0
        %v668 = vand.u32 %v555, 2139095040
        %v669 = vshrl.u32 %v668, 23
        %v670 = vsub.s32 %v669, 127
        %v671 = vand.u32 2147483647, %v555
        %v672 = vand.u32 %v671, 8388607
        %v673 = vor.u32 %v672, 8388608
        %v674 = vsub.s32 0, %v673
        %v675 = vadd.s32 %v670, 1
        %vm676 = vcmp.gt.s32.totalorder %v675, 0
        %v677 = vsel %vm676, %v675, 0
        %v678 = vshrl.u32 %v677, 5
        %v679 = vand.u32 %v677, 31
        %v680 = vsub.s32 32, %v679
        %v681 = vshrl.u32 683565275, %v680
        %v682 = vshll.u32 683565275, %v679
        %v683 = vshrl.u32 2475754826, %v680
        %v684 = vor.u32 %v682, %v683
        %v685 = vshll.u32 2475754826, %v679
        %v686 = vshrl.u32 2131351028, %v680
        %v687 = vor.u32 %v685, %v686
        %v688 = vshll.u32 2131351028, %v679
        %v689 = vshrl.u32 2102212464, %v680
        %v690 = vor.u32 %v688, %v689
        %v691 = vshll.u32 2102212464, %v679
        %v692 = vshrl.u32 920167782, %v680
        %v693 = vor.u32 %v691, %v692
        %v694 = vshll.u32 920167782, %v679
        %v695 = vshrl.u32 1326507024, %v680
        %v696 = vor.u32 %v694, %v695
        %vm697 = vcmp.lt.s32.totalorder %v678, 1
        %vm698 = vcmp.lt.s32.totalorder %v678, 2
        %vm699 = vcmp.lt.s32.totalorder %v678, 3
        %vm700 = vcmp.lt.s32.totalorder %v678, 4
        %v701 = vsel %vm697, %v681, %v684
        %v702 = vsel %vm700, %v690, 2102212464
        %v703 = vsel %vm699, %v687, %v702
        %v704 = vsel %vm698, %v701, %v703
        %v705 = vsel %vm697, %v684, %v687
        %v706 = vsel %vm700, %v693, 920167782
        %v707 = vsel %vm699, %v690, %v706
        %v708 = vsel %vm698, %v705, %v707
        %v709 = vsel %vm697, %v687, %v690
        %v710 = vsel %vm700, %v696, 1326507024
        %v711 = vsel %vm699, %v693, %v710
        %v712 = vsel %vm698, %v709, %v711
        %v713 = vshll.u32 %v673, 8
        %v714 = vmul.u32.u64.compose %v713, %v712
        %v715 = vextract.low.u32 %v714
        %v716 = vextract.high.u32 %v714
        %v717 = vmul.u32.u64.compose %v713, %v708
        %v718 = vextract.low.u32 %v717
        %v719 = vextract.high.u32 %v717
        %v720 = vmul.u32 %v713, %v704
        %v721 = vadd.s32 %v716, %v718
        %vm722 = vc.u32 %v716, %v718
        %v723 = vadd.s32 %v719, 1
        %v724 = vsel %vm722, %v723, %v719
        %v725 = vadd.s32 %v720, %v724
        %v726 = vadd.s32 %v725, 536870912
        %v727 = vshrl.u32 %v726, 30
        %v728 = vshll.u32 %v727, 30
        %v729 = vsub.s32 %v725, %v728
        %vm730 = vcmp.lt.s32.totalorder %v729, 0
        %v731 = vsub.s32 0, %v729
        %v732 = vsel %vm730, %v731, %v729
        %v733 = vclz %v732
        %v734 = vsub.s32 %v733, 2
        %vm735 = vcmp.gt.s32.totalorder 0, %v734
        %v736 = vsel %vm735, 0, %v734
        %v737 = vsub.s32 32, %v736
        %v738 = vshll.u32 %v729, %v736
        %v739 = vshrl.u32 %v721, %v737
        %v740 = vor.u32 %v738, %v739
        %v741 = vsub.s32 4294967266, %v736
        %v742 = vadd.s32 %v741, 127
        %v743 = vshll.u32 %v742, 23
        %v744 = vor.u32 4788187, %v743
        %v745 = vand.u32 2147483647, %v744
        %v747 = vcvt.s32.f32 %v740
        %v748 = vmul.f32 %v747, %v745
        %v749 = vxor.u32 %v748, 2147483648
        %v750 = vsel %vm667, %v749, %v748
        %v751 = vsub.s32 4, %v727
        %v752 = vsel %vm667, %v751, %v727
        %v753 = vsel %vm666, %v555, %v750
        %v754 = vsel %vm666, 0, %v752
        %v755 = vcosq.f32.pop %v753
        %v756 = vsinq.f32.pop %v753
        %vm757 = vweird.f32 %v555
        %v758 = vadd.s32 %v754, 3
        %v759 = vand.u32 %v758, 3
        %vm760 = vcmp.lt.s32.totalorder %v759, 2
        %vm761 = vcmp.eq.s32.totalorder %v759, 0
        %v762 = vxor.u32 %v756, 2147483648
        %v763 = vsel %vm761, %v755, %v762
        %vm764 = vcmp.eq.s32.totalorder %v759, 2
        %v765 = vxor.u32 %v755, 2147483648
        %v766 = vsel %vm764, %v765, %v756
        %v767 = vsel %vm760, %v763, %v766
        %v768 = vsel %vm757, nan, %v767
        %v769 = vand.u32 2147483647, %v556
        %vm770 = vcmp.le.f32.partialorder %v769, 0.7853982
        %vm771 = vcmp.lt.s32.totalorder %v556, 0
        %v772 = vand.u32 %v556, 2139095040
        %v773 = vshrl.u32 %v772, 23
        %v774 = vsub.s32 %v773, 127
        %v775 = vand.u32 2147483647, %v556
        %v776 = vand.u32 %v775, 8388607
        %v777 = vor.u32 %v776, 8388608
        %v778 = vsub.s32 0, %v777
        %v779 = vadd.s32 %v774, 1
        %vm780 = vcmp.gt.s32.totalorder %v779, 0
        %v781 = vsel %vm780, %v779, 0
        %v782 = vshrl.u32 %v781, 5
        %v783 = vand.u32 %v781, 31
        %v784 = vsub.s32 32, %v783
        %v785 = vshrl.u32 683565275, %v784
        %v786 = vshll.u32 683565275, %v783
        %v787 = vshrl.u32 2475754826, %v784
        %v788 = vor.u32 %v786, %v787
        %v789 = vshll.u32 2475754826, %v783
        %v790 = vshrl.u32 2131351028, %v784
        %v791 = vor.u32 %v789, %v790
        %v792 = vshll.u32 2131351028, %v783
        %v793 = vshrl.u32 2102212464, %v784
        %v794 = vor.u32 %v792, %v793
        %v795 = vshll.u32 2102212464, %v783
        %v796 = vshrl.u32 920167782, %v784
        %v797 = vor.u32 %v795, %v796
        %v798 = vshll.u32 920167782, %v783
        %v799 = vshrl.u32 1326507024, %v784
        %v800 = vor.u32 %v798, %v799
        %vm801 = vcmp.lt.s32.totalorder %v782, 1
        %vm802 = vcmp.lt.s32.totalorder %v782, 2
        %vm803 = vcmp.lt.s32.totalorder %v782, 3
        %vm804 = vcmp.lt.s32.totalorder %v782, 4
        %v805 = vsel %vm801, %v785, %v788
        %v806 = vsel %vm804, %v794, 2102212464
        %v807 = vsel %vm803, %v791, %v806
        %v808 = vsel %vm802, %v805, %v807
        %v809 = vsel %vm801, %v788, %v791
        %v810 = vsel %vm804, %v797, 920167782
        %v811 = vsel %vm803, %v794, %v810
        %v812 = vsel %vm802, %v809, %v811
        %v813 = vsel %vm801, %v791, %v794
        %v814 = vsel %vm804, %v800, 1326507024
        %v815 = vsel %vm803, %v797, %v814
        %v816 = vsel %vm802, %v813, %v815
        %v817 = vshll.u32 %v777, 8
        %v818 = vmul.u32.u64.compose %v817, %v816
        %v819 = vextract.low.u32 %v818
        %v820 = vextract.high.u32 %v818
        %v821 = vmul.u32.u64.compose %v817, %v812
        %v822 = vextract.low.u32 %v821
        %v823 = vextract.high.u32 %v821
        %v824 = vmul.u32 %v817, %v808
        %v825 = vadd.s32 %v820, %v822
        %vm826 = vc.u32 %v820, %v822
        %v827 = vadd.s32 %v823, 1
        %v828 = vsel %vm826, %v827, %v823
        %v829 = vadd.s32 %v824, %v828
        %v830 = vadd.s32 %v829, 536870912
        %v831 = vshrl.u32 %v830, 30
        %v832 = vshll.u32 %v831, 30
        %v833 = vsub.s32 %v829, %v832
        %vm834 = vcmp.lt.s32.totalorder %v833, 0
        %v835 = vsub.s32 0, %v833
        %v836 = vsel %vm834, %v835, %v833
        %v837 = vclz %v836
        %v838 = vsub.s32 %v837, 2
        %vm839 = vcmp.gt.s32.totalorder 0, %v838
        %v840 = vsel %vm839, 0, %v838
        %v841 = vsub.s32 32, %v840
        %v842 = vshll.u32 %v833, %v840
        %v843 = vshrl.u32 %v825, %v841
        %v844 = vor.u32 %v842, %v843
        %v845 = vsub.s32 4294967266, %v840
        %v846 = vadd.s32 %v845, 127
        %v847 = vshll.u32 %v846, 23
        %v848 = vor.u32 4788187, %v847
        %v849 = vand.u32 2147483647, %v848
        %v851 = vcvt.s32.f32 %v844
        %v852 = vmul.f32 %v851, %v849
        %v853 = vxor.u32 %v852, 2147483648
        %v854 = vsel %vm771, %v853, %v852
        %v855 = vsub.s32 4, %v831
        %v856 = vsel %vm771, %v855, %v831
        %v857 = vsel %vm770, %v556, %v854
        %v858 = vsel %vm770, 0, %v856
        %v859 = vcosq.f32.pop %v857
        %v860 = vsinq.f32.pop %v857
        %vm861 = vweird.f32 %v556
        %v862 = vadd.s32 %v858, 3
        %v863 = vand.u32 %v862, 3
        %vm864 = vcmp.lt.s32.totalorder %v863, 2
        %vm865 = vcmp.eq.s32.totalorder %v863, 0
        %v866 = vxor.u32 %v860, 2147483648
        %v867 = vsel %vm865, %v859, %v866
        %vm868 = vcmp.eq.s32.totalorder %v863, 2
        %v869 = vxor.u32 %v859, 2147483648
        %v870 = vsel %vm868, %v869, %v860
        %v871 = vsel %vm864, %v867, %v870
        %v872 = vsel %vm861, nan, %v871
        %v873 = vand.u32 2147483647, %v557
        %vm874 = vcmp.le.f32.partialorder %v873, 0.7853982
        %vm875 = vcmp.lt.s32.totalorder %v557, 0
        %v876 = vand.u32 %v557, 2139095040
        %v877 = vshrl.u32 %v876, 23
        %v878 = vsub.s32 %v877, 127
        %v879 = vand.u32 2147483647, %v557
        %v880 = vand.u32 %v879, 8388607
        %v881 = vor.u32 %v880, 8388608
        %v882 = vsub.s32 0, %v881
        %v883 = vadd.s32 %v878, 1
        %vm884 = vcmp.gt.s32.totalorder %v883, 0
        %v885 = vsel %vm884, %v883, 0
        %v886 = vshrl.u32 %v885, 5
        %v887 = vand.u32 %v885, 31
        %v888 = vsub.s32 32, %v887
        %v889 = vshrl.u32 683565275, %v888
        %v890 = vshll.u32 683565275, %v887
        %v891 = vshrl.u32 2475754826, %v888
        %v892 = vor.u32 %v890, %v891
        %v893 = vshll.u32 2475754826, %v887
        %v894 = vshrl.u32 2131351028, %v888
        %v895 = vor.u32 %v893, %v894
        %v896 = vshll.u32 2131351028, %v887
        %v897 = vshrl.u32 2102212464, %v888
        %v898 = vor.u32 %v896, %v897
        %v899 = vshll.u32 2102212464, %v887
        %v900 = vshrl.u32 920167782, %v888
        %v901 = vor.u32 %v899, %v900
        %v902 = vshll.u32 920167782, %v887
        %v903 = vshrl.u32 1326507024, %v888
        %v904 = vor.u32 %v902, %v903
        %vm905 = vcmp.lt.s32.totalorder %v886, 1
        %vm906 = vcmp.lt.s32.totalorder %v886, 2
        %vm907 = vcmp.lt.s32.totalorder %v886, 3
        %vm908 = vcmp.lt.s32.totalorder %v886, 4
        %v909 = vsel %vm905, %v889, %v892
        %v910 = vsel %vm908, %v898, 2102212464
        %v911 = vsel %vm907, %v895, %v910
        %v912 = vsel %vm906, %v909, %v911
        %v913 = vsel %vm905, %v892, %v895
        %v914 = vsel %vm908, %v901, 920167782
        %v915 = vsel %vm907, %v898, %v914
        %v916 = vsel %vm906, %v913, %v915
        %v917 = vsel %vm905, %v895, %v898
        %v918 = vsel %vm908, %v904, 1326507024
        %v919 = vsel %vm907, %v901, %v918
        %v920 = vsel %vm906, %v917, %v919
        %v921 = vshll.u32 %v881, 8
        %v922 = vmul.u32.u64.compose %v921, %v920
        %v923 = vextract.low.u32 %v922
        %v924 = vextract.high.u32 %v922
        %v925 = vmul.u32.u64.compose %v921, %v916
        %v926 = vextract.low.u32 %v925
        %v927 = vextract.high.u32 %v925
        %v928 = vmul.u32 %v921, %v912
        %v929 = vadd.s32 %v924, %v926
        %vm930 = vc.u32 %v924, %v926
        %v931 = vadd.s32 %v927, 1
        %v932 = vsel %vm930, %v931, %v927
        %v933 = vadd.s32 %v928, %v932
        %v934 = vadd.s32 %v933, 536870912
        %v935 = vshrl.u32 %v934, 30
        %v936 = vshll.u32 %v935, 30
        %v937 = vsub.s32 %v933, %v936
        %vm938 = vcmp.lt.s32.totalorder %v937, 0
        %v939 = vsub.s32 0, %v937
        %v940 = vsel %vm938, %v939, %v937
        %v941 = vclz %v940
        %v942 = vsub.s32 %v941, 2
        %vm943 = vcmp.gt.s32.totalorder 0, %v942
        %v944 = vsel %vm943, 0, %v942
        %v945 = vsub.s32 32, %v944
        %v946 = vshll.u32 %v937, %v944
        %v947 = vshrl.u32 %v929, %v945
        %v948 = vor.u32 %v946, %v947
        %v949 = vsub.s32 4294967266, %v944
        %v950 = vadd.s32 %v949, 127
        %v951 = vshll.u32 %v950, 23
        %v952 = vor.u32 4788187, %v951
        %v953 = vand.u32 2147483647, %v952
        %v955 = vcvt.s32.f32 %v948
        %v956 = vmul.f32 %v955, %v953
        %v957 = vxor.u32 %v956, 2147483648
        %v958 = vsel %vm875, %v957, %v956
        %v959 = vsub.s32 4, %v935
        %v960 = vsel %vm875, %v959, %v935
        %v961 = vsel %vm874, %v557, %v958
        %v962 = vsel %vm874, 0, %v960
        %v963 = vcosq.f32.pop %v961
        %v964 = vsinq.f32.pop %v961
        %vm965 = vweird.f32 %v557
        %v966 = vadd.s32 %v962, 3
        %v967 = vand.u32 %v966, 3
        %vm968 = vcmp.lt.s32.totalorder %v967, 2
        %vm969 = vcmp.eq.s32.totalorder %v967, 0
        %v970 = vxor.u32 %v964, 2147483648
        %v971 = vsel %vm969, %v963, %v970
        %vm972 = vcmp.eq.s32.totalorder %v967, 2
        %v973 = vxor.u32 %v963, 2147483648
        %v974 = vsel %vm972, %v973, %v964
        %v975 = vsel %vm968, %v971, %v974
        %v976 = vsel %vm965, nan, %v975
        %v977 = vand.u32 2147483647, %v558
        %vm978 = vcmp.le.f32.partialorder %v977, 0.7853982
        %vm979 = vcmp.lt.s32.totalorder %v558, 0
        %v980 = vand.u32 %v558, 2139095040
        %v981 = vshrl.u32 %v980, 23
        %v982 = vsub.s32 %v981, 127
        %v983 = vand.u32 2147483647, %v558
        %v984 = vand.u32 %v983, 8388607
        %v985 = vor.u32 %v984, 8388608
        %v986 = vsub.s32 0, %v985
        %v987 = vadd.s32 %v982, 1
        %vm988 = vcmp.gt.s32.totalorder %v987, 0
        %v989 = vsel %vm988, %v987, 0
        %v990 = vshrl.u32 %v989, 5
        %v991 = vand.u32 %v989, 31
        %v992 = vsub.s32 32, %v991
        %v993 = vshrl.u32 683565275, %v992
        %v994 = vshll.u32 683565275, %v991
        %v995 = vshrl.u32 2475754826, %v992
        %v996 = vor.u32 %v994, %v995
        %v997 = vshll.u32 2475754826, %v991
        %v998 = vshrl.u32 2131351028, %v992
        %v999 = vor.u32 %v997, %v998
        %v1000 = vshll.u32 2131351028, %v991
        %v1001 = vshrl.u32 2102212464, %v992
        %v1002 = vor.u32 %v1000, %v1001
        %v1003 = vshll.u32 2102212464, %v991
        %v1004 = vshrl.u32 920167782, %v992
        %v1005 = vor.u32 %v1003, %v1004
        %v1006 = vshll.u32 920167782, %v991
        %v1007 = vshrl.u32 1326507024, %v992
        %v1008 = vor.u32 %v1006, %v1007
        %vm1009 = vcmp.lt.s32.totalorder %v990, 1
        %vm1010 = vcmp.lt.s32.totalorder %v990, 2
        %vm1011 = vcmp.lt.s32.totalorder %v990, 3
        %vm1012 = vcmp.lt.s32.totalorder %v990, 4
        %v1013 = vsel %vm1009, %v993, %v996
        %v1014 = vsel %vm1012, %v1002, 2102212464
        %v1015 = vsel %vm1011, %v999, %v1014
        %v1016 = vsel %vm1010, %v1013, %v1015
        %v1017 = vsel %vm1009, %v996, %v999
        %v1018 = vsel %vm1012, %v1005, 920167782
        %v1019 = vsel %vm1011, %v1002, %v1018
        %v1020 = vsel %vm1010, %v1017, %v1019
        %v1021 = vsel %vm1009, %v999, %v1002
        %v1022 = vsel %vm1012, %v1008, 1326507024
        %v1023 = vsel %vm1011, %v1005, %v1022
        %v1024 = vsel %vm1010, %v1021, %v1023
        %v1025 = vshll.u32 %v985, 8
        %v1026 = vmul.u32.u64.compose %v1025, %v1024
        %v1027 = vextract.low.u32 %v1026
        %v1028 = vextract.high.u32 %v1026
        %v1029 = vmul.u32.u64.compose %v1025, %v1020
        %v1030 = vextract.low.u32 %v1029
        %v1031 = vextract.high.u32 %v1029
        %v1032 = vmul.u32 %v1025, %v1016
        %v1033 = vadd.s32 %v1028, %v1030
        %vm1034 = vc.u32 %v1028, %v1030
        %v1035 = vadd.s32 %v1031, 1
        %v1036 = vsel %vm1034, %v1035, %v1031
        %v1037 = vadd.s32 %v1032, %v1036
        %v1038 = vadd.s32 %v1037, 536870912
        %v1039 = vshrl.u32 %v1038, 30
        %v1040 = vshll.u32 %v1039, 30
        %v1041 = vsub.s32 %v1037, %v1040
        %vm1042 = vcmp.lt.s32.totalorder %v1041, 0
        %v1043 = vsub.s32 0, %v1041
        %v1044 = vsel %vm1042, %v1043, %v1041
        %v1045 = vclz %v1044
        %v1046 = vsub.s32 %v1045, 2
        %vm1047 = vcmp.gt.s32.totalorder 0, %v1046
        %v1048 = vsel %vm1047, 0, %v1046
        %v1049 = vsub.s32 32, %v1048
        %v1050 = vshll.u32 %v1041, %v1048
        %v1051 = vshrl.u32 %v1033, %v1049
        %v1052 = vor.u32 %v1050, %v1051
        %v1053 = vsub.s32 4294967266, %v1048
        %v1054 = vadd.s32 %v1053, 127
        %v1055 = vshll.u32 %v1054, 23
        %v1056 = vor.u32 4788187, %v1055
        %v1057 = vand.u32 2147483647, %v1056
        %v1059 = vcvt.s32.f32 %v1052
        %v1060 = vmul.f32 %v1059, %v1057
        %v1061 = vxor.u32 %v1060, 2147483648
        %v1062 = vsel %vm979, %v1061, %v1060
        %v1063 = vsub.s32 4, %v1039
        %v1064 = vsel %vm979, %v1063, %v1039
        %v1065 = vsel %vm978, %v558, %v1062
        %v1066 = vsel %vm978, 0, %v1064
        %v1067 = vcosq.f32.pop %v1065
        %v1068 = vsinq.f32.pop %v1065
        %vm1069 = vweird.f32 %v558
        %v1070 = vadd.s32 %v1066, 3
        %v1071 = vand.u32 %v1070, 3
        %vm1072 = vcmp.lt.s32.totalorder %v1071, 2
        %vm1073 = vcmp.eq.s32.totalorder %v1071, 0
        %v1074 = vxor.u32 %v1068, 2147483648
        %v1075 = vsel %vm1073, %v1067, %v1074
        %vm1076 = vcmp.eq.s32.totalorder %v1071, 2
        %v1077 = vxor.u32 %v1067, 2147483648
        %v1078 = vsel %vm1076, %v1077, %v1068
        %v1079 = vsel %vm1072, %v1075, %v1078
        %v1080 = vsel %vm1069, nan, %v1079
        %v1081 = vand.u32 2147483647, %v559
        %vm1082 = vcmp.le.f32.partialorder %v1081, 0.7853982
        %vm1083 = vcmp.lt.s32.totalorder %v559, 0
        %v1084 = vand.u32 %v559, 2139095040
        %v1085 = vshrl.u32 %v1084, 23
        %v1086 = vsub.s32 %v1085, 127
        %v1087 = vand.u32 2147483647, %v559
        %v1088 = vand.u32 %v1087, 8388607
        %v1089 = vor.u32 %v1088, 8388608
        %v1090 = vsub.s32 0, %v1089
        %v1091 = vadd.s32 %v1086, 1
        %vm1092 = vcmp.gt.s32.totalorder %v1091, 0
        %v1093 = vsel %vm1092, %v1091, 0
        %v1094 = vshrl.u32 %v1093, 5
        %v1095 = vand.u32 %v1093, 31
        %v1096 = vsub.s32 32, %v1095
        %v1097 = vshrl.u32 683565275, %v1096
        %v1098 = vshll.u32 683565275, %v1095
        %v1099 = vshrl.u32 2475754826, %v1096
        %v1100 = vor.u32 %v1098, %v1099
        %v1101 = vshll.u32 2475754826, %v1095
        %v1102 = vshrl.u32 2131351028, %v1096
        %v1103 = vor.u32 %v1101, %v1102
        %v1104 = vshll.u32 2131351028, %v1095
        %v1105 = vshrl.u32 2102212464, %v1096
        %v1106 = vor.u32 %v1104, %v1105
        %v1107 = vshll.u32 2102212464, %v1095
        %v1108 = vshrl.u32 920167782, %v1096
        %v1109 = vor.u32 %v1107, %v1108
        %v1110 = vshll.u32 920167782, %v1095
        %v1111 = vshrl.u32 1326507024, %v1096
        %v1112 = vor.u32 %v1110, %v1111
        %vm1113 = vcmp.lt.s32.totalorder %v1094, 1
        %vm1114 = vcmp.lt.s32.totalorder %v1094, 2
        %vm1115 = vcmp.lt.s32.totalorder %v1094, 3
        %vm1116 = vcmp.lt.s32.totalorder %v1094, 4
        %v1117 = vsel %vm1113, %v1097, %v1100
        %v1118 = vsel %vm1116, %v1106, 2102212464
        %v1119 = vsel %vm1115, %v1103, %v1118
        %v1120 = vsel %vm1114, %v1117, %v1119
        %v1121 = vsel %vm1113, %v1100, %v1103
        %v1122 = vsel %vm1116, %v1109, 920167782
        %v1123 = vsel %vm1115, %v1106, %v1122
        %v1124 = vsel %vm1114, %v1121, %v1123
        %v1125 = vsel %vm1113, %v1103, %v1106
        %v1126 = vsel %vm1116, %v1112, 1326507024
        %v1127 = vsel %vm1115, %v1109, %v1126
        %v1128 = vsel %vm1114, %v1125, %v1127
        %v1129 = vshll.u32 %v1089, 8
        %v1130 = vmul.u32.u64.compose %v1129, %v1128
        %v1131 = vextract.low.u32 %v1130
        %v1132 = vextract.high.u32 %v1130
        %v1133 = vmul.u32.u64.compose %v1129, %v1124
        %v1134 = vextract.low.u32 %v1133
        %v1135 = vextract.high.u32 %v1133
        %v1136 = vmul.u32 %v1129, %v1120
        %v1137 = vadd.s32 %v1132, %v1134
        %vm1138 = vc.u32 %v1132, %v1134
        %v1139 = vadd.s32 %v1135, 1
        %v1140 = vsel %vm1138, %v1139, %v1135
        %v1141 = vadd.s32 %v1136, %v1140
        %v1142 = vadd.s32 %v1141, 536870912
        %v1143 = vshrl.u32 %v1142, 30
        %v1144 = vshll.u32 %v1143, 30
        %v1145 = vsub.s32 %v1141, %v1144
        %vm1146 = vcmp.lt.s32.totalorder %v1145, 0
        %v1147 = vsub.s32 0, %v1145
        %v1148 = vsel %vm1146, %v1147, %v1145
        %v1149 = vclz %v1148
        %v1150 = vsub.s32 %v1149, 2
        %vm1151 = vcmp.gt.s32.totalorder 0, %v1150
        %v1152 = vsel %vm1151, 0, %v1150
        %v1153 = vsub.s32 32, %v1152
        %v1154 = vshll.u32 %v1145, %v1152
        %v1155 = vshrl.u32 %v1137, %v1153
        %v1156 = vor.u32 %v1154, %v1155
        %v1157 = vsub.s32 4294967266, %v1152
        %v1158 = vadd.s32 %v1157, 127
        %v1159 = vshll.u32 %v1158, 23
        %v1160 = vor.u32 4788187, %v1159
        %v1161 = vand.u32 2147483647, %v1160
        %v1163 = vcvt.s32.f32 %v1156
        %v1164 = vmul.f32 %v1163, %v1161
        %v1165 = vxor.u32 %v1164, 2147483648
        %v1166 = vsel %vm1083, %v1165, %v1164
        %v1167 = vsub.s32 4, %v1143
        %v1168 = vsel %vm1083, %v1167, %v1143
        %v1169 = vsel %vm1082, %v559, %v1166
        %v1170 = vsel %vm1082, 0, %v1168
        %v1171 = vcosq.f32.pop %v1169
        %v1172 = vsinq.f32.pop %v1169
        %vm1173 = vweird.f32 %v559
        %v1174 = vadd.s32 %v1170, 3
        %v1175 = vand.u32 %v1174, 3
        %vm1176 = vcmp.lt.s32.totalorder %v1175, 2
        %vm1177 = vcmp.eq.s32.totalorder %v1175, 0
        %v1178 = vxor.u32 %v1172, 2147483648
        %v1179 = vsel %vm1177, %v1171, %v1178
        %vm1180 = vcmp.eq.s32.totalorder %v1175, 2
        %v1181 = vxor.u32 %v1171, 2147483648
        %v1182 = vsel %vm1180, %v1181, %v1172
        %v1183 = vsel %vm1176, %v1179, %v1182
        %v1184 = vsel %vm1173, nan, %v1183
        %v1185 = vand.u32 2147483647, %v560
        %vm1186 = vcmp.le.f32.partialorder %v1185, 0.7853982
        %vm1187 = vcmp.lt.s32.totalorder %v560, 0
        %v1188 = vand.u32 %v560, 2139095040
        %v1189 = vshrl.u32 %v1188, 23
        %v1190 = vsub.s32 %v1189, 127
        %v1191 = vand.u32 2147483647, %v560
        %v1192 = vand.u32 %v1191, 8388607
        %v1193 = vor.u32 %v1192, 8388608
        %v1194 = vsub.s32 0, %v1193
        %v1195 = vadd.s32 %v1190, 1
        %vm1196 = vcmp.gt.s32.totalorder %v1195, 0
        %v1197 = vsel %vm1196, %v1195, 0
        %v1198 = vshrl.u32 %v1197, 5
        %v1199 = vand.u32 %v1197, 31
        %v1200 = vsub.s32 32, %v1199
        %v1201 = vshrl.u32 683565275, %v1200
        %v1202 = vshll.u32 683565275, %v1199
        %v1203 = vshrl.u32 2475754826, %v1200
        %v1204 = vor.u32 %v1202, %v1203
        %v1205 = vshll.u32 2475754826, %v1199
        %v1206 = vshrl.u32 2131351028, %v1200
        %v1207 = vor.u32 %v1205, %v1206
        %v1208 = vshll.u32 2131351028, %v1199
        %v1209 = vshrl.u32 2102212464, %v1200
        %v1210 = vor.u32 %v1208, %v1209
        %v1211 = vshll.u32 2102212464, %v1199
        %v1212 = vshrl.u32 920167782, %v1200
        %v1213 = vor.u32 %v1211, %v1212
        %v1214 = vshll.u32 920167782, %v1199
        %v1215 = vshrl.u32 1326507024, %v1200
        %v1216 = vor.u32 %v1214, %v1215
        %vm1217 = vcmp.lt.s32.totalorder %v1198, 1
        %vm1218 = vcmp.lt.s32.totalorder %v1198, 2
        %vm1219 = vcmp.lt.s32.totalorder %v1198, 3
        %vm1220 = vcmp.lt.s32.totalorder %v1198, 4
        %v1221 = vsel %vm1217, %v1201, %v1204
        %v1222 = vsel %vm1220, %v1210, 2102212464
        %v1223 = vsel %vm1219, %v1207, %v1222
        %v1224 = vsel %vm1218, %v1221, %v1223
        %v1225 = vsel %vm1217, %v1204, %v1207
        %v1226 = vsel %vm1220, %v1213, 920167782
        %v1227 = vsel %vm1219, %v1210, %v1226
        %v1228 = vsel %vm1218, %v1225, %v1227
        %v1229 = vsel %vm1217, %v1207, %v1210
        %v1230 = vsel %vm1220, %v1216, 1326507024
        %v1231 = vsel %vm1219, %v1213, %v1230
        %v1232 = vsel %vm1218, %v1229, %v1231
        %v1233 = vshll.u32 %v1193, 8
        %v1234 = vmul.u32.u64.compose %v1233, %v1232
        %v1235 = vextract.low.u32 %v1234
        %v1236 = vextract.high.u32 %v1234
        %v1237 = vmul.u32.u64.compose %v1233, %v1228
        %v1238 = vextract.low.u32 %v1237
        %v1239 = vextract.high.u32 %v1237
        %v1240 = vmul.u32 %v1233, %v1224
        %v1241 = vadd.s32 %v1236, %v1238
        %vm1242 = vc.u32 %v1236, %v1238
        %v1243 = vadd.s32 %v1239, 1
        %v1244 = vsel %vm1242, %v1243, %v1239
        %v1245 = vadd.s32 %v1240, %v1244
        %v1246 = vadd.s32 %v1245, 536870912
        %v1247 = vshrl.u32 %v1246, 30
        %v1248 = vshll.u32 %v1247, 30
        %v1249 = vsub.s32 %v1245, %v1248
        %vm1250 = vcmp.lt.s32.totalorder %v1249, 0
        %v1251 = vsub.s32 0, %v1249
        %v1252 = vsel %vm1250, %v1251, %v1249
        %v1253 = vclz %v1252
        %v1254 = vsub.s32 %v1253, 2
        %vm1255 = vcmp.gt.s32.totalorder 0, %v1254
        %v1256 = vsel %vm1255, 0, %v1254
        %v1257 = vsub.s32 32, %v1256
        %v1258 = vshll.u32 %v1249, %v1256
        %v1259 = vshrl.u32 %v1241, %v1257
        %v1260 = vor.u32 %v1258, %v1259
        %v1261 = vsub.s32 4294967266, %v1256
        %v1262 = vadd.s32 %v1261, 127
        %v1263 = vshll.u32 %v1262, 23
        %v1264 = vor.u32 4788187, %v1263
        %v1265 = vand.u32 2147483647, %v1264
        %v1267 = vcvt.s32.f32 %v1260
        %v1268 = vmul.f32 %v1267, %v1265
        %v1269 = vxor.u32 %v1268, 2147483648
        %v1270 = vsel %vm1187, %v1269, %v1268
        %v1271 = vsub.s32 4, %v1247
        %v1272 = vsel %vm1187, %v1271, %v1247
        %v1273 = vsel %vm1186, %v560, %v1270
        %v1274 = vsel %vm1186, 0, %v1272
        %v1275 = vcosq.f32.pop %v1273
        %v1276 = vsinq.f32.pop %v1273
        %vm1277 = vweird.f32 %v560
        %v1278 = vadd.s32 %v1274, 3
        %v1279 = vand.u32 %v1278, 3
        %vm1280 = vcmp.lt.s32.totalorder %v1279, 2
        %vm1281 = vcmp.eq.s32.totalorder %v1279, 0
        %v1282 = vxor.u32 %v1276, 2147483648
        %v1283 = vsel %vm1281, %v1275, %v1282
        %vm1284 = vcmp.eq.s32.totalorder %v1279, 2
        %v1285 = vxor.u32 %v1275, 2147483648
        %v1286 = vsel %vm1284, %v1285, %v1276
        %v1287 = vsel %vm1280, %v1283, %v1286
        %v1288 = vsel %vm1277, nan, %v1287
        %v1289 = vmul.f32 %v664, %v664
        %v1290 = vmul.f32 %v768, %v768
        %v1291 = vmul.f32 %v872, %v872
        %v1292 = vmul.f32 %v976, %v976
        %v1293 = vmul.f32 %v1080, %v1080
        %v1294 = vmul.f32 %v1184, %v1184
        %v1295 = vmul.f32 %v1288, %v1288
        %v1297 = vlaneseq
        %v1298 = vshrl.u32 %v1297, 7
        %v1299 = vsub.s32 0, %v1298
        %v1300 = vrot.slane %v547, %v1299
        %v1302 = vmul.f32 %v1300, %v1289
        %v1303 = vmul.f32 %v1300, %v1290
        %v1304 = vmul.f32 %v1300, %v1291
        %v1305 = vmul.f32 %v1300, %v1292
        %v1306 = vmul.f32 %v1300, %v1293
        %v1307 = vmul.f32 %v1300, %v1294
        %v1308 = vmul.f32 %v1300, %v1295
        %v1309 = vadd.f32 %v486, %v1302
        %v1310 = vadd.f32 %v487, %v1303
        %v1311 = vadd.f32 %v488, %v1304
        %v1312 = vadd.f32 %v489, %v1305
        %v1313 = vadd.f32 %v490, %v1306
        %v1314 = vadd.f32 %v491, %v1307
        %v1315 = vadd.f32 %v492, %v1308
        %v1316 = vld [vmem:[#allocation7] sm:$0x1]
        %vm1324 = vcmask 1046528
        %v1325 = vrot.slane %v1309, 1
        %v1326 = vrot.slane %v1310, 1
        %v1327 = vsel %vm1324, %v1325, %v1326
        %v1328 = vrot.slane %v1311, 1
        %v1329 = vsel %vm1324, %v1326, %v1328
        %v1330 = vrot.slane %v1312, 1
        %v1331 = vsel %vm1324, %v1328, %v1330
        %v1332 = vrot.slane %v1313, 1
        %v1333 = vsel %vm1324, %v1330, %v1332
        %v1334 = vrot.slane %v1314, 1
        %v1335 = vsel %vm1324, %v1332, %v1334
        %v1336 = vrot.slane %v1315, 1
        %v1337 = vsel %vm1324, %v1334, %v1336
        %1338 = vrot.lane.b32.xlu0 %v1327, 64
        %v1339 = vpop.permute.xlu0 %1338
        %1340 = vrot.lane.b32.xlu0 %v1329, 64
        %v1341 = vpop.permute.xlu0 %1340
        %1342 = vrot.lane.b32.xlu0 %v1331, 64
        %v1343 = vpop.permute.xlu0 %1342
        %1344 = vrot.lane.b32.xlu0 %v1333, 64
        %v1345 = vpop.permute.xlu0 %1344
        %1346 = vrot.lane.b32.xlu0 %v1335, 64
        %v1347 = vpop.permute.xlu0 %1346
        %1348 = vrot.lane.b32.xlu0 %v1337, 64
        %v1349 = vpop.permute.xlu0 %1348
        %1350 = vrot.lane.b32.xlu0 %v1336, 64
        %v1351 = vpop.permute.xlu0 %1350
        %vm1359 = vcmask 1045504
        %v1360 = vrot.slane %v1309, 2
        %v1361 = vrot.slane %v1310, 2
        %v1362 = vsel %vm1359, %v1360, %v1361
        %v1363 = vrot.slane %v1311, 2
        %v1364 = vsel %vm1359, %v1361, %v1363
        %v1365 = vrot.slane %v1312, 2
        %v1366 = vsel %vm1359, %v1363, %v1365
        %v1367 = vrot.slane %v1313, 2
        %v1368 = vsel %vm1359, %v1365, %v1367
        %v1369 = vrot.slane %v1314, 2
        %v1370 = vsel %vm1359, %v1367, %v1369
        %v1371 = vrot.slane %v1315, 2
        %v1372 = vsel %vm1359, %v1369, %v1371
        %vm1373 = vcmask 523264
        %v1374 = vsel %vm1373, %v1309, %v1339
        %v1375 = vsel %vm1373, %v1310, %v1341
        %v1376 = vsel %vm1373, %v1311, %v1343
        %v1377 = vsel %vm1373, %v1312, %v1345
        %v1378 = vsel %vm1373, %v1313, %v1347
        %v1379 = vsel %vm1373, %v1314, %v1349
        %v1380 = vsel %vm1373, %v1315, %v1351
        %v1381 = vld [vmem:[#allocation5] sm:$0xff]
        %v1382 = vld [vmem:[#allocation5 + $0x8] sm:$0xff]
        %v1383 = vld [vmem:[#allocation5 + $0x10] sm:$0xff]
        %v1384 = vld [vmem:[#allocation5 + $0x18] sm:$0xff]
        %v1385 = vld [vmem:[#allocation5 + $0x20] sm:$0xff]
        %v1386 = vld [vmem:[#allocation5 + $0x28] sm:$0xff]
        %v1387 = vld [vmem:[#allocation5 + $0x30] sm:$0xff]
        %v1388 = vld [vmem:[#allocation5 + $0x38] sm:$0xff]
        %v1389 = vld [vmem:[#allocation5 + $0x40] sm:$0xff]
        %v1390 = vld [vmem:[#allocation5 + $0x48] sm:$0xff]
        %v1391 = vld [vmem:[#allocation5 + $0x50] sm:$0xff]
        %v1392 = vld [vmem:[#allocation5 + $0x58] sm:$0xff]
        %v1393 = vld [vmem:[#allocation5 + $0x60] sm:$0xff]
        %v1394 = vld [vmem:[#allocation5 + $0x68] sm:$0xff]
        %v1395 = vld [vmem:[#allocation5 + $0x70] sm:$0xff]
        %v1396 = vld [vmem:[#allocation5 + $0x78] sm:$0xff]
        %v1397 = vld [vmem:[#allocation5 + $0x80] sm:$0xff]
        %v1398 = vld [vmem:[#allocation5 + $0x88] sm:$0xff]
        %v1399 = vld [vmem:[#allocation5 + $0x90] sm:$0xff]
        %v1400 = vld [vmem:[#allocation5 + $0x98] sm:$0xff]
        %v1401 = vld [vmem:[#allocation5 + $0xa0] sm:$0xff]
        %v1402 = vld [vmem:[#allocation5 + $0xa8] sm:$0xff]
        %v1403 = vld [vmem:[#allocation5 + $0xb0] sm:$0xff]
        %v1404 = vld [vmem:[#allocation5 + $0xb8] sm:$0xff]
        %v1406 = vlaneseq
        %v1407 = vshrl.u32 %v1406, 7
        %v1408 = vsub.s32 0, %v1407
        %v1409 = vrot.slane %v1316, %v1408
        %v1411 = vsel %vm1373, %v1362, 0
        %v1413 = vsel %vm1373, %v1364, 0
        %v1415 = vsel %vm1373, %v1366, 0
        %v1417 = vsel %vm1373, %v1368, 0
        %v1419 = vsel %vm1373, %v1370, 0
        %v1421 = vsel %vm1373, %v1372, 0
        %v1423 = vsel %vm1373, %v1371, 0
        %1425 = vmatprep.subr.mxu0 0.0
        %1426 = vmatpush1.msra.mxu0 %v1381
        %1427 = vmatprep.subr.mxu0 0.0
        %1428 = vmatpush1.msra.mxu0 %v1382
        %1429 = vmatprep.subr.mxu0 0.0
        %1430 = vmatpush1.msra.mxu0 %v1383
        %1431 = vmatprep.subr.mxu0 0.0
        %1432 = vmatpush1.msra.mxu0 %v1384
        %1433 = vmatprep.subr.mxu0 0.0
        %1434 = vmatpush1.msra.mxu0 %v1385
        %1435 = vmatprep.subr.mxu0 0.0
        %1436 = vmatpush1.msra.mxu0 %v1386
        %1437 = vmatprep.subr.mxu0 0.0
        %1438 = vmatpush1.msra.mxu0 %v1387
        %1439 = vmatprep.subr.mxu0 0.0
        %1440 = vmatpush1.msra.mxu0 %v1388
        %1441 = vmatprep.subr.mxu0 0.0
        %1442 = vmatpush1.msra.mxu0 %v1389
        %1443 = vmatprep.subr.mxu0 0.0
        %1444 = vmatpush1.msra.mxu0 %v1390
        %1445 = vmatprep.subr.mxu0 0.0
        %1446 = vmatpush1.msra.mxu0 %v1391
        %1447 = vmatprep.subr.mxu0 0.0
        %1448 = vmatpush1.msra.mxu0 %v1392
        %1449 = vmatprep.subr.mxu0 0.0
        %1450 = vmatpush1.msra.mxu0 %v1393
        %1451 = vmatprep.subr.mxu0 0.0
        %1452 = vmatpush1.msra.mxu0 %v1394
        %1453 = vmatprep.subr.mxu0 0.0
        %1454 = vmatpush1.msra.mxu0 %v1395
        %1455 = vmatprep.subr.mxu0 0.0
        %1456 = vmatpush1.msra.mxu0 %v1396
        %1457 = vmatprep.subr.mxu0 0.0
        %1458 = vmatpush1.msra.mxu0 %v1397
        %1459 = vmatprep.subr.mxu0 0.0
        %1460 = vmatpush1.msra.mxu0 %v1398
        %1461 = vmatprep.subr.mxu0 0.0
        %1462 = vmatpush1.msra.mxu0 %v1399
        %1463 = vmatprep.subr.mxu0 0.0
        %1464 = vmatpush1.msra.mxu0 %v1400
        %1465 = vmatprep.subr.mxu0 0.0
        %1466 = vmatpush1.msra.mxu0 %v1401
        %1467 = vmatprep.subr.mxu0 0.0
        %1468 = vmatpush1.msra.mxu0 %v1402
        %1469 = vmatprep.subr.mxu0 0.0
        %1470 = vmatpush1.msra.mxu0 %v1403
        %1471 = vmatprep.subr.mxu0 0.0
        %1472 = vmatpush1.msra.mxu0 %v1404
        %1473 = vmatprep.subr.mxu0 0.0
        %1474 = vmatpush1.msra.mxu0 0.0
        %1475 = vmatprep.subr.mxu0 0.0
        %1476 = vmatpush1.msra.mxu0 0.0
        %1477 = vmatprep.subr.mxu0 0.0
        %1478 = vmatpush1.msra.mxu0 0.0
        %1479 = vmatprep.subr.mxu0 0.0
        %1480 = vmatpush1.msra.mxu0 0.0
        %1481 = vmatprep.subr.mxu0 0.0
        %1482 = vmatpush1.msra.mxu0 0.0
        %1483 = vmatprep.subr.mxu0 0.0
        %1484 = vmatpush1.msra.mxu0 0.0
        %1485 = vmatprep.subr.mxu0 0.0
        %1486 = vmatpush1.msra.mxu0 0.0
        %1487 = vmatprep.subr.mxu0 0.0
        %1488 = vmatpush1.msra.mxu0 0.0
        %1489 = vmatprep.mubr.f32.mxu0 %v1411
        %1490 = vmatmul.mubr.f32.gmra.mrb[0].mxu0 %v1374
        %v1491 = vpop.f32.mrb[0].mxu0
        %v1492 = vadd.f32 %v1409, %v1491
        %v1493 = vpop.f32.mrb[0].mxu0
        %1494 = vmatprep.mubr.f32.mxu0 %v1413
        %1495 = vmatmul.mubr.f32.gmra.mrb[0].mxu0 %v1375
        %v1496 = vpop.f32.mrb[0].mxu0
        %v1497 = vadd.f32 %v1409, %v1496
        %v1498 = vpop.f32.mrb[0].mxu0
        %1499 = vmatprep.mubr.f32.mxu0 %v1415
        %1500 = vmatmul.mubr.f32.gmra.mrb[0].mxu0 %v1376
        %v1501 = vpop.f32.mrb[0].mxu0
        %v1502 = vadd.f32 %v1409, %v1501
        %v1503 = vpop.f32.mrb[0].mxu0
        %1504 = vmatprep.mubr.f32.mxu0 %v1417
        %1505 = vmatmul.mubr.f32.gmra.mrb[0].mxu0 %v1377
        %v1506 = vpop.f32.mrb[0].mxu0
        %v1507 = vadd.f32 %v1409, %v1506
        %v1508 = vpop.f32.mrb[0].mxu0
        %1509 = vmatprep.mubr.f32.mxu0 %v1419
        %1510 = vmatmul.mubr.f32.gmra.mrb[0].mxu0 %v1378
        %v1511 = vpop.f32.mrb[0].mxu0
        %v1512 = vadd.f32 %v1409, %v1511
        %v1513 = vpop.f32.mrb[0].mxu0
        %1514 = vmatprep.mubr.f32.mxu0 %v1421
        %1515 = vmatmul.mubr.f32.gmra.mrb[0].mxu0 %v1379
        %v1516 = vpop.f32.mrb[0].mxu0
        %v1517 = vadd.f32 %v1409, %v1516
        %v1518 = vpop.f32.mrb[0].mxu0
        %1519 = vmatprep.mubr.f32.mxu0 %v1423
        %1520 = vmatmul.mubr.f32.gmra.mrb[0].mxu0 %v1380
        %v1521 = vpop.f32.mrb[0].mxu0
        %v1522 = vadd.f32 %v1409, %v1521
        %v1523 = vpop.f32.mrb[0].mxu0
        %1524 = vdwg.mxu0
        %v1532 = vrot.slane %v539, 1
        %v1533 = vrot.slane %v540, 1
        %v1534 = vsel %vm1324, %v1532, %v1533
        %v1535 = vrot.slane %v541, 1
        %v1536 = vsel %vm1324, %v1533, %v1535
        %v1537 = vrot.slane %v542, 1
        %v1538 = vsel %vm1324, %v1535, %v1537
        %v1539 = vrot.slane %v543, 1
        %v1540 = vsel %vm1324, %v1537, %v1539
        %v1541 = vrot.slane %v544, 1
        %v1542 = vsel %vm1324, %v1539, %v1541
        %v1543 = vrot.slane %v545, 1
        %v1544 = vsel %vm1324, %v1541, %v1543
        %v1552 = vmul.f32 %v1492, %v1534
        %v1553 = vmul.f32 %v1497, %v1536
        %v1554 = vmul.f32 %v1502, %v1538
        %v1555 = vmul.f32 %v1507, %v1540
        %v1556 = vmul.f32 %v1512, %v1542
        %v1557 = vmul.f32 %v1517, %v1544
        %v1558 = vmul.f32 %v1522, %v1543
        %v1559 = vld [vmem:[#allocation14] sm:$0x1]
        %v1560 = vld [vmem:[#allocation16] sm:$0x1]
        %v1562 = vlaneseq
        %v1563 = vshrl.u32 %v1562, 7
        %v1564 = vsub.s32 0, %v1563
        %v1565 = vrot.slane %v1559, %v1564
        %v1567 = vmul.f32 %v1552, %v1565
        %v1568 = vmul.f32 %v1553, %v1565
        %v1569 = vmul.f32 %v1554, %v1565
        %v1570 = vmul.f32 %v1555, %v1565
        %v1571 = vmul.f32 %v1556, %v1565
        %v1572 = vmul.f32 %v1557, %v1565
        %v1573 = vmul.f32 %v1558, %v1565
        %v1574 = vand.u32 2147483647, %v1567
        %vm1575 = vcmp.le.f32.partialorder %v1574, 0.7853982
        %vm1576 = vcmp.lt.s32.totalorder %v1567, 0
        %v1577 = vand.u32 %v1567, 2139095040
        %v1578 = vshrl.u32 %v1577, 23
        %v1579 = vsub.s32 %v1578, 127
        %v1580 = vand.u32 2147483647, %v1567
        %v1581 = vand.u32 %v1580, 8388607
        %v1582 = vor.u32 %v1581, 8388608
        %v1583 = vsub.s32 0, %v1582
        %v1584 = vadd.s32 %v1579, 1
        %vm1585 = vcmp.gt.s32.totalorder %v1584, 0
        %v1586 = vsel %vm1585, %v1584, 0
        %v1587 = vshrl.u32 %v1586, 5
        %v1588 = vand.u32 %v1586, 31
        %v1589 = vsub.s32 32, %v1588
        %v1590 = vshrl.u32 683565275, %v1589
        %v1591 = vshll.u32 683565275, %v1588
        %v1592 = vshrl.u32 2475754826, %v1589
        %v1593 = vor.u32 %v1591, %v1592
        %v1594 = vshll.u32 2475754826, %v1588
        %v1595 = vshrl.u32 2131351028, %v1589
        %v1596 = vor.u32 %v1594, %v1595
        %v1597 = vshll.u32 2131351028, %v1588
        %v1598 = vshrl.u32 2102212464, %v1589
        %v1599 = vor.u32 %v1597, %v1598
        %v1600 = vshll.u32 2102212464, %v1588
        %v1601 = vshrl.u32 920167782, %v1589
        %v1602 = vor.u32 %v1600, %v1601
        %v1603 = vshll.u32 920167782, %v1588
        %v1604 = vshrl.u32 1326507024, %v1589
        %v1605 = vor.u32 %v1603, %v1604
        %vm1606 = vcmp.lt.s32.totalorder %v1587, 1
        %vm1607 = vcmp.lt.s32.totalorder %v1587, 2
        %vm1608 = vcmp.lt.s32.totalorder %v1587, 3
        %vm1609 = vcmp.lt.s32.totalorder %v1587, 4
        %v1610 = vsel %vm1606, %v1590, %v1593
        %v1611 = vsel %vm1609, %v1599, 2102212464
        %v1612 = vsel %vm1608, %v1596, %v1611
        %v1613 = vsel %vm1607, %v1610, %v1612
        %v1614 = vsel %vm1606, %v1593, %v1596
        %v1615 = vsel %vm1609, %v1602, 920167782
        %v1616 = vsel %vm1608, %v1599, %v1615
        %v1617 = vsel %vm1607, %v1614, %v1616
        %v1618 = vsel %vm1606, %v1596, %v1599
        %v1619 = vsel %vm1609, %v1605, 1326507024
        %v1620 = vsel %vm1608, %v1602, %v1619
        %v1621 = vsel %vm1607, %v1618, %v1620
        %v1622 = vshll.u32 %v1582, 8
        %v1623 = vmul.u32.u64.compose %v1622, %v1621
        %v1624 = vextract.low.u32 %v1623
        %v1625 = vextract.high.u32 %v1623
        %v1626 = vmul.u32.u64.compose %v1622, %v1617
        %v1627 = vextract.low.u32 %v1626
        %v1628 = vextract.high.u32 %v1626
        %v1629 = vmul.u32 %v1622, %v1613
        %v1630 = vadd.s32 %v1625, %v1627
        %vm1631 = vc.u32 %v1625, %v1627
        %v1632 = vadd.s32 %v1628, 1
        %v1633 = vsel %vm1631, %v1632, %v1628
        %v1634 = vadd.s32 %v1629, %v1633
        %v1635 = vadd.s32 %v1634, 536870912
        %v1636 = vshrl.u32 %v1635, 30
        %v1637 = vshll.u32 %v1636, 30
        %v1638 = vsub.s32 %v1634, %v1637
        %vm1639 = vcmp.lt.s32.totalorder %v1638, 0
        %v1640 = vsub.s32 0, %v1638
        %v1641 = vsel %vm1639, %v1640, %v1638
        %v1642 = vclz %v1641
        %v1643 = vsub.s32 %v1642, 2
        %vm1644 = vcmp.gt.s32.totalorder 0, %v1643
        %v1645 = vsel %vm1644, 0, %v1643
        %v1646 = vsub.s32 32, %v1645
        %v1647 = vshll.u32 %v1638, %v1645
        %v1648 = vshrl.u32 %v1630, %v1646
        %v1649 = vor.u32 %v1647, %v1648
        %v1650 = vsub.s32 4294967266, %v1645
        %v1651 = vadd.s32 %v1650, 127
        %v1652 = vshll.u32 %v1651, 23
        %v1653 = vor.u32 4788187, %v1652
        %v1654 = vand.u32 2147483647, %v1653
        %v1656 = vcvt.s32.f32 %v1649
        %v1657 = vmul.f32 %v1656, %v1654
        %v1658 = vxor.u32 %v1657, 2147483648
        %v1659 = vsel %vm1576, %v1658, %v1657
        %v1660 = vsub.s32 4, %v1636
        %v1661 = vsel %vm1576, %v1660, %v1636
        %v1662 = vsel %vm1575, %v1567, %v1659
        %v1663 = vsel %vm1575, 0, %v1661
        %v1664 = vcosq.f32.pop %v1662
        %v1665 = vsinq.f32.pop %v1662
        %vm1666 = vweird.f32 %v1567
        %v1667 = vadd.s32 %v1663, 3
        %v1668 = vand.u32 %v1667, 3
        %vm1669 = vcmp.lt.s32.totalorder %v1668, 2
        %vm1670 = vcmp.eq.s32.totalorder %v1668, 0
        %v1671 = vxor.u32 %v1665, 2147483648
        %v1672 = vsel %vm1670, %v1664, %v1671
        %vm1673 = vcmp.eq.s32.totalorder %v1668, 2
        %v1674 = vxor.u32 %v1664, 2147483648
        %v1675 = vsel %vm1673, %v1674, %v1665
        %v1676 = vsel %vm1669, %v1672, %v1675
        %v1677 = vsel %vm1666, nan, %v1676
        %v1678 = vand.u32 2147483647, %v1568
        %vm1679 = vcmp.le.f32.partialorder %v1678, 0.7853982
        %vm1680 = vcmp.lt.s32.totalorder %v1568, 0
        %v1681 = vand.u32 %v1568, 2139095040
        %v1682 = vshrl.u32 %v1681, 23
        %v1683 = vsub.s32 %v1682, 127
        %v1684 = vand.u32 2147483647, %v1568
        %v1685 = vand.u32 %v1684, 8388607
        %v1686 = vor.u32 %v1685, 8388608
        %v1687 = vsub.s32 0, %v1686
        %v1688 = vadd.s32 %v1683, 1
        %vm1689 = vcmp.gt.s32.totalorder %v1688, 0
        %v1690 = vsel %vm1689, %v1688, 0
        %v1691 = vshrl.u32 %v1690, 5
        %v1692 = vand.u32 %v1690, 31
        %v1693 = vsub.s32 32, %v1692
        %v1694 = vshrl.u32 683565275, %v1693
        %v1695 = vshll.u32 683565275, %v1692
        %v1696 = vshrl.u32 2475754826, %v1693
        %v1697 = vor.u32 %v1695, %v1696
        %v1698 = vshll.u32 2475754826, %v1692
        %v1699 = vshrl.u32 2131351028, %v1693
        %v1700 = vor.u32 %v1698, %v1699
        %v1701 = vshll.u32 2131351028, %v1692
        %v1702 = vshrl.u32 2102212464, %v1693
        %v1703 = vor.u32 %v1701, %v1702
        %v1704 = vshll.u32 2102212464, %v1692
        %v1705 = vshrl.u32 920167782, %v1693
        %v1706 = vor.u32 %v1704, %v1705
        %v1707 = vshll.u32 920167782, %v1692
        %v1708 = vshrl.u32 1326507024, %v1693
        %v1709 = vor.u32 %v1707, %v1708
        %vm1710 = vcmp.lt.s32.totalorder %v1691, 1
        %vm1711 = vcmp.lt.s32.totalorder %v1691, 2
        %vm1712 = vcmp.lt.s32.totalorder %v1691, 3
        %vm1713 = vcmp.lt.s32.totalorder %v1691, 4
        %v1714 = vsel %vm1710, %v1694, %v1697
        %v1715 = vsel %vm1713, %v1703, 2102212464
        %v1716 = vsel %vm1712, %v1700, %v1715
        %v1717 = vsel %vm1711, %v1714, %v1716
        %v1718 = vsel %vm1710, %v1697, %v1700
        %v1719 = vsel %vm1713, %v1706, 920167782
        %v1720 = vsel %vm1712, %v1703, %v1719
        %v1721 = vsel %vm1711, %v1718, %v1720
        %v1722 = vsel %vm1710, %v1700, %v1703
        %v1723 = vsel %vm1713, %v1709, 1326507024
        %v1724 = vsel %vm1712, %v1706, %v1723
        %v1725 = vsel %vm1711, %v1722, %v1724
        %v1726 = vshll.u32 %v1686, 8
        %v1727 = vmul.u32.u64.compose %v1726, %v1725
        %v1728 = vextract.low.u32 %v1727
        %v1729 = vextract.high.u32 %v1727
        %v1730 = vmul.u32.u64.compose %v1726, %v1721
        %v1731 = vextract.low.u32 %v1730
        %v1732 = vextract.high.u32 %v1730
        %v1733 = vmul.u32 %v1726, %v1717
        %v1734 = vadd.s32 %v1729, %v1731
        %vm1735 = vc.u32 %v1729, %v1731
        %v1736 = vadd.s32 %v1732, 1
        %v1737 = vsel %vm1735, %v1736, %v1732
        %v1738 = vadd.s32 %v1733, %v1737
        %v1739 = vadd.s32 %v1738, 536870912
        %v1740 = vshrl.u32 %v1739, 30
        %v1741 = vshll.u32 %v1740, 30
        %v1742 = vsub.s32 %v1738, %v1741
        %vm1743 = vcmp.lt.s32.totalorder %v1742, 0
        %v1744 = vsub.s32 0, %v1742
        %v1745 = vsel %vm1743, %v1744, %v1742
        %v1746 = vclz %v1745
        %v1747 = vsub.s32 %v1746, 2
        %vm1748 = vcmp.gt.s32.totalorder 0, %v1747
        %v1749 = vsel %vm1748, 0, %v1747
        %v1750 = vsub.s32 32, %v1749
        %v1751 = vshll.u32 %v1742, %v1749
        %v1752 = vshrl.u32 %v1734, %v1750
        %v1753 = vor.u32 %v1751, %v1752
        %v1754 = vsub.s32 4294967266, %v1749
        %v1755 = vadd.s32 %v1754, 127
        %v1756 = vshll.u32 %v1755, 23
        %v1757 = vor.u32 4788187, %v1756
        %v1758 = vand.u32 2147483647, %v1757
        %v1760 = vcvt.s32.f32 %v1753
        %v1761 = vmul.f32 %v1760, %v1758
        %v1762 = vxor.u32 %v1761, 2147483648
        %v1763 = vsel %vm1680, %v1762, %v1761
        %v1764 = vsub.s32 4, %v1740
        %v1765 = vsel %vm1680, %v1764, %v1740
        %v1766 = vsel %vm1679, %v1568, %v1763
        %v1767 = vsel %vm1679, 0, %v1765
        %v1768 = vcosq.f32.pop %v1766
        %v1769 = vsinq.f32.pop %v1766
        %vm1770 = vweird.f32 %v1568
        %v1771 = vadd.s32 %v1767, 3
        %v1772 = vand.u32 %v1771, 3
        %vm1773 = vcmp.lt.s32.totalorder %v1772, 2
        %vm1774 = vcmp.eq.s32.totalorder %v1772, 0
        %v1775 = vxor.u32 %v1769, 2147483648
        %v1776 = vsel %vm1774, %v1768, %v1775
        %vm1777 = vcmp.eq.s32.totalorder %v1772, 2
        %v1778 = vxor.u32 %v1768, 2147483648
        %v1779 = vsel %vm1777, %v1778, %v1769
        %v1780 = vsel %vm1773, %v1776, %v1779
        %v1781 = vsel %vm1770, nan, %v1780
        %v1782 = vand.u32 2147483647, %v1569
        %vm1783 = vcmp.le.f32.partialorder %v1782, 0.7853982
        %vm1784 = vcmp.lt.s32.totalorder %v1569, 0
        %v1785 = vand.u32 %v1569, 2139095040
        %v1786 = vshrl.u32 %v1785, 23
        %v1787 = vsub.s32 %v1786, 127
        %v1788 = vand.u32 2147483647, %v1569
        %v1789 = vand.u32 %v1788, 8388607
        %v1790 = vor.u32 %v1789, 8388608
        %v1791 = vsub.s32 0, %v1790
        %v1792 = vadd.s32 %v1787, 1
        %vm1793 = vcmp.gt.s32.totalorder %v1792, 0
        %v1794 = vsel %vm1793, %v1792, 0
        %v1795 = vshrl.u32 %v1794, 5
        %v1796 = vand.u32 %v1794, 31
        %v1797 = vsub.s32 32, %v1796
        %v1798 = vshrl.u32 683565275, %v1797
        %v1799 = vshll.u32 683565275, %v1796
        %v1800 = vshrl.u32 2475754826, %v1797
        %v1801 = vor.u32 %v1799, %v1800
        %v1802 = vshll.u32 2475754826, %v1796
        %v1803 = vshrl.u32 2131351028, %v1797
        %v1804 = vor.u32 %v1802, %v1803
        %v1805 = vshll.u32 2131351028, %v1796
        %v1806 = vshrl.u32 2102212464, %v1797
        %v1807 = vor.u32 %v1805, %v1806
        %v1808 = vshll.u32 2102212464, %v1796
        %v1809 = vshrl.u32 920167782, %v1797
        %v1810 = vor.u32 %v1808, %v1809
        %v1811 = vshll.u32 920167782, %v1796
        %v1812 = vshrl.u32 1326507024, %v1797
        %v1813 = vor.u32 %v1811, %v1812
        %vm1814 = vcmp.lt.s32.totalorder %v1795, 1
        %vm1815 = vcmp.lt.s32.totalorder %v1795, 2
        %vm1816 = vcmp.lt.s32.totalorder %v1795, 3
        %vm1817 = vcmp.lt.s32.totalorder %v1795, 4
        %v1818 = vsel %vm1814, %v1798, %v1801
        %v1819 = vsel %vm1817, %v1807, 2102212464
        %v1820 = vsel %vm1816, %v1804, %v1819
        %v1821 = vsel %vm1815, %v1818, %v1820
        %v1822 = vsel %vm1814, %v1801, %v1804
        %v1823 = vsel %vm1817, %v1810, 920167782
        %v1824 = vsel %vm1816, %v1807, %v1823
        %v1825 = vsel %vm1815, %v1822, %v1824
        %v1826 = vsel %vm1814, %v1804, %v1807
        %v1827 = vsel %vm1817, %v1813, 1326507024
        %v1828 = vsel %vm1816, %v1810, %v1827
        %v1829 = vsel %vm1815, %v1826, %v1828
        %v1830 = vshll.u32 %v1790, 8
        %v1831 = vmul.u32.u64.compose %v1830, %v1829
        %v1832 = vextract.low.u32 %v1831
        %v1833 = vextract.high.u32 %v1831
        %v1834 = vmul.u32.u64.compose %v1830, %v1825
        %v1835 = vextract.low.u32 %v1834
        %v1836 = vextract.high.u32 %v1834
        %v1837 = vmul.u32 %v1830, %v1821
        %v1838 = vadd.s32 %v1833, %v1835
        %vm1839 = vc.u32 %v1833, %v1835
        %v1840 = vadd.s32 %v1836, 1
        %v1841 = vsel %vm1839, %v1840, %v1836
        %v1842 = vadd.s32 %v1837, %v1841
        %v1843 = vadd.s32 %v1842, 536870912
        %v1844 = vshrl.u32 %v1843, 30
        %v1845 = vshll.u32 %v1844, 30
        %v1846 = vsub.s32 %v1842, %v1845
        %vm1847 = vcmp.lt.s32.totalorder %v1846, 0
        %v1848 = vsub.s32 0, %v1846
        %v1849 = vsel %vm1847, %v1848, %v1846
        %v1850 = vclz %v1849
        %v1851 = vsub.s32 %v1850, 2
        %vm1852 = vcmp.gt.s32.totalorder 0, %v1851
        %v1853 = vsel %vm1852, 0, %v1851
        %v1854 = vsub.s32 32, %v1853
        %v1855 = vshll.u32 %v1846, %v1853
        %v1856 = vshrl.u32 %v1838, %v1854
        %v1857 = vor.u32 %v1855, %v1856
        %v1858 = vsub.s32 4294967266, %v1853
        %v1859 = vadd.s32 %v1858, 127
        %v1860 = vshll.u32 %v1859, 23
        %v1861 = vor.u32 4788187, %v1860
        %v1862 = vand.u32 2147483647, %v1861
        %v1864 = vcvt.s32.f32 %v1857
        %v1865 = vmul.f32 %v1864, %v1862
        %v1866 = vxor.u32 %v1865, 2147483648
        %v1867 = vsel %vm1784, %v1866, %v1865
        %v1868 = vsub.s32 4, %v1844
        %v1869 = vsel %vm1784, %v1868, %v1844
        %v1870 = vsel %vm1783, %v1569, %v1867
        %v1871 = vsel %vm1783, 0, %v1869
        %v1872 = vcosq.f32.pop %v1870
        %v1873 = vsinq.f32.pop %v1870
        %vm1874 = vweird.f32 %v1569
        %v1875 = vadd.s32 %v1871, 3
        %v1876 = vand.u32 %v1875, 3
        %vm1877 = vcmp.lt.s32.totalorder %v1876, 2
        %vm1878 = vcmp.eq.s32.totalorder %v1876, 0
        %v1879 = vxor.u32 %v1873, 2147483648
        %v1880 = vsel %vm1878, %v1872, %v1879
        %vm1881 = vcmp.eq.s32.totalorder %v1876, 2
        %v1882 = vxor.u32 %v1872, 2147483648
        %v1883 = vsel %vm1881, %v1882, %v1873
        %v1884 = vsel %vm1877, %v1880, %v1883
        %v1885 = vsel %vm1874, nan, %v1884
        %v1886 = vand.u32 2147483647, %v1570
        %vm1887 = vcmp.le.f32.partialorder %v1886, 0.7853982
        %vm1888 = vcmp.lt.s32.totalorder %v1570, 0
        %v1889 = vand.u32 %v1570, 2139095040
        %v1890 = vshrl.u32 %v1889, 23
        %v1891 = vsub.s32 %v1890, 127
        %v1892 = vand.u32 2147483647, %v1570
        %v1893 = vand.u32 %v1892, 8388607
        %v1894 = vor.u32 %v1893, 8388608
        %v1895 = vsub.s32 0, %v1894
        %v1896 = vadd.s32 %v1891, 1
        %vm1897 = vcmp.gt.s32.totalorder %v1896, 0
        %v1898 = vsel %vm1897, %v1896, 0
        %v1899 = vshrl.u32 %v1898, 5
        %v1900 = vand.u32 %v1898, 31
        %v1901 = vsub.s32 32, %v1900
        %v1902 = vshrl.u32 683565275, %v1901
        %v1903 = vshll.u32 683565275, %v1900
        %v1904 = vshrl.u32 2475754826, %v1901
        %v1905 = vor.u32 %v1903, %v1904
        %v1906 = vshll.u32 2475754826, %v1900
        %v1907 = vshrl.u32 2131351028, %v1901
        %v1908 = vor.u32 %v1906, %v1907
        %v1909 = vshll.u32 2131351028, %v1900
        %v1910 = vshrl.u32 2102212464, %v1901
        %v1911 = vor.u32 %v1909, %v1910
        %v1912 = vshll.u32 2102212464, %v1900
        %v1913 = vshrl.u32 920167782, %v1901
        %v1914 = vor.u32 %v1912, %v1913
        %v1915 = vshll.u32 920167782, %v1900
        %v1916 = vshrl.u32 1326507024, %v1901
        %v1917 = vor.u32 %v1915, %v1916
        %vm1918 = vcmp.lt.s32.totalorder %v1899, 1
        %vm1919 = vcmp.lt.s32.totalorder %v1899, 2
        %vm1920 = vcmp.lt.s32.totalorder %v1899, 3
        %vm1921 = vcmp.lt.s32.totalorder %v1899, 4
        %v1922 = vsel %vm1918, %v1902, %v1905
        %v1923 = vsel %vm1921, %v1911, 2102212464
        %v1924 = vsel %vm1920, %v1908, %v1923
        %v1925 = vsel %vm1919, %v1922, %v1924
        %v1926 = vsel %vm1918, %v1905, %v1908
        %v1927 = vsel %vm1921, %v1914, 920167782
        %v1928 = vsel %vm1920, %v1911, %v1927
        %v1929 = vsel %vm1919, %v1926, %v1928
        %v1930 = vsel %vm1918, %v1908, %v1911
        %v1931 = vsel %vm1921, %v1917, 1326507024
        %v1932 = vsel %vm1920, %v1914, %v1931
        %v1933 = vsel %vm1919, %v1930, %v1932
        %v1934 = vshll.u32 %v1894, 8
        %v1935 = vmul.u32.u64.compose %v1934, %v1933
        %v1936 = vextract.low.u32 %v1935
        %v1937 = vextract.high.u32 %v1935
        %v1938 = vmul.u32.u64.compose %v1934, %v1929
        %v1939 = vextract.low.u32 %v1938
        %v1940 = vextract.high.u32 %v1938
        %v1941 = vmul.u32 %v1934, %v1925
        %v1942 = vadd.s32 %v1937, %v1939
        %vm1943 = vc.u32 %v1937, %v1939
        %v1944 = vadd.s32 %v1940, 1
        %v1945 = vsel %vm1943, %v1944, %v1940
        %v1946 = vadd.s32 %v1941, %v1945
        %v1947 = vadd.s32 %v1946, 536870912
        %v1948 = vshrl.u32 %v1947, 30
        %v1949 = vshll.u32 %v1948, 30
        %v1950 = vsub.s32 %v1946, %v1949
        %vm1951 = vcmp.lt.s32.totalorder %v1950, 0
        %v1952 = vsub.s32 0, %v1950
        %v1953 = vsel %vm1951, %v1952, %v1950
        %v1954 = vclz %v1953
        %v1955 = vsub.s32 %v1954, 2
        %vm1956 = vcmp.gt.s32.totalorder 0, %v1955
        %v1957 = vsel %vm1956, 0, %v1955
        %v1958 = vsub.s32 32, %v1957
        %v1959 = vshll.u32 %v1950, %v1957
        %v1960 = vshrl.u32 %v1942, %v1958
        %v1961 = vor.u32 %v1959, %v1960
        %v1962 = vsub.s32 4294967266, %v1957
        %v1963 = vadd.s32 %v1962, 127
        %v1964 = vshll.u32 %v1963, 23
        %v1965 = vor.u32 4788187, %v1964
        %v1966 = vand.u32 2147483647, %v1965
        %v1968 = vcvt.s32.f32 %v1961
        %v1969 = vmul.f32 %v1968, %v1966
        %v1970 = vxor.u32 %v1969, 2147483648
        %v1971 = vsel %vm1888, %v1970, %v1969
        %v1972 = vsub.s32 4, %v1948
        %v1973 = vsel %vm1888, %v1972, %v1948
        %v1974 = vsel %vm1887, %v1570, %v1971
        %v1975 = vsel %vm1887, 0, %v1973
        %v1976 = vcosq.f32.pop %v1974
        %v1977 = vsinq.f32.pop %v1974
        %vm1978 = vweird.f32 %v1570
        %v1979 = vadd.s32 %v1975, 3
        %v1980 = vand.u32 %v1979, 3
        %vm1981 = vcmp.lt.s32.totalorder %v1980, 2
        %vm1982 = vcmp.eq.s32.totalorder %v1980, 0
        %v1983 = vxor.u32 %v1977, 2147483648
        %v1984 = vsel %vm1982, %v1976, %v1983
        %vm1985 = vcmp.eq.s32.totalorder %v1980, 2
        %v1986 = vxor.u32 %v1976, 2147483648
        %v1987 = vsel %vm1985, %v1986, %v1977
        %v1988 = vsel %vm1981, %v1984, %v1987
        %v1989 = vsel %vm1978, nan, %v1988
        %v1990 = vand.u32 2147483647, %v1571
        %vm1991 = vcmp.le.f32.partialorder %v1990, 0.7853982
        %vm1992 = vcmp.lt.s32.totalorder %v1571, 0
        %v1993 = vand.u32 %v1571, 2139095040
        %v1994 = vshrl.u32 %v1993, 23
        %v1995 = vsub.s32 %v1994, 127
        %v1996 = vand.u32 2147483647, %v1571
        %v1997 = vand.u32 %v1996, 8388607
        %v1998 = vor.u32 %v1997, 8388608
        %v1999 = vsub.s32 0, %v1998
        %v2000 = vadd.s32 %v1995, 1
        %vm2001 = vcmp.gt.s32.totalorder %v2000, 0
        %v2002 = vsel %vm2001, %v2000, 0
        %v2003 = vshrl.u32 %v2002, 5
        %v2004 = vand.u32 %v2002, 31
        %v2005 = vsub.s32 32, %v2004
        %v2006 = vshrl.u32 683565275, %v2005
        %v2007 = vshll.u32 683565275, %v2004
        %v2008 = vshrl.u32 2475754826, %v2005
        %v2009 = vor.u32 %v2007, %v2008
        %v2010 = vshll.u32 2475754826, %v2004
        %v2011 = vshrl.u32 2131351028, %v2005
        %v2012 = vor.u32 %v2010, %v2011
        %v2013 = vshll.u32 2131351028, %v2004
        %v2014 = vshrl.u32 2102212464, %v2005
        %v2015 = vor.u32 %v2013, %v2014
        %v2016 = vshll.u32 2102212464, %v2004
        %v2017 = vshrl.u32 920167782, %v2005
        %v2018 = vor.u32 %v2016, %v2017
        %v2019 = vshll.u32 920167782, %v2004
        %v2020 = vshrl.u32 1326507024, %v2005
        %v2021 = vor.u32 %v2019, %v2020
        %vm2022 = vcmp.lt.s32.totalorder %v2003, 1
        %vm2023 = vcmp.lt.s32.totalorder %v2003, 2
        %vm2024 = vcmp.lt.s32.totalorder %v2003, 3
        %vm2025 = vcmp.lt.s32.totalorder %v2003, 4
        %v2026 = vsel %vm2022, %v2006, %v2009
        %v2027 = vsel %vm2025, %v2015, 2102212464
        %v2028 = vsel %vm2024, %v2012, %v2027
        %v2029 = vsel %vm2023, %v2026, %v2028
        %v2030 = vsel %vm2022, %v2009, %v2012
        %v2031 = vsel %vm2025, %v2018, 920167782
        %v2032 = vsel %vm2024, %v2015, %v2031
        %v2033 = vsel %vm2023, %v2030, %v2032
        %v2034 = vsel %vm2022, %v2012, %v2015
        %v2035 = vsel %vm2025, %v2021, 1326507024
        %v2036 = vsel %vm2024, %v2018, %v2035
        %v2037 = vsel %vm2023, %v2034, %v2036
        %v2038 = vshll.u32 %v1998, 8
        %v2039 = vmul.u32.u64.compose %v2038, %v2037
        %v2040 = vextract.low.u32 %v2039
        %v2041 = vextract.high.u32 %v2039
        %v2042 = vmul.u32.u64.compose %v2038, %v2033
        %v2043 = vextract.low.u32 %v2042
        %v2044 = vextract.high.u32 %v2042
        %v2045 = vmul.u32 %v2038, %v2029
        %v2046 = vadd.s32 %v2041, %v2043
        %vm2047 = vc.u32 %v2041, %v2043
        %v2048 = vadd.s32 %v2044, 1
        %v2049 = vsel %vm2047, %v2048, %v2044
        %v2050 = vadd.s32 %v2045, %v2049
        %v2051 = vadd.s32 %v2050, 536870912
        %v2052 = vshrl.u32 %v2051, 30
        %v2053 = vshll.u32 %v2052, 30
        %v2054 = vsub.s32 %v2050, %v2053
        %vm2055 = vcmp.lt.s32.totalorder %v2054, 0
        %v2056 = vsub.s32 0, %v2054
        %v2057 = vsel %vm2055, %v2056, %v2054
        %v2058 = vclz %v2057
        %v2059 = vsub.s32 %v2058, 2
        %vm2060 = vcmp.gt.s32.totalorder 0, %v2059
        %v2061 = vsel %vm2060, 0, %v2059
        %v2062 = vsub.s32 32, %v2061
        %v2063 = vshll.u32 %v2054, %v2061
        %v2064 = vshrl.u32 %v2046, %v2062
        %v2065 = vor.u32 %v2063, %v2064
        %v2066 = vsub.s32 4294967266, %v2061
        %v2067 = vadd.s32 %v2066, 127
        %v2068 = vshll.u32 %v2067, 23
        %v2069 = vor.u32 4788187, %v2068
        %v2070 = vand.u32 2147483647, %v2069
        %v2072 = vcvt.s32.f32 %v2065
        %v2073 = vmul.f32 %v2072, %v2070
        %v2074 = vxor.u32 %v2073, 2147483648
        %v2075 = vsel %vm1992, %v2074, %v2073
        %v2076 = vsub.s32 4, %v2052
        %v2077 = vsel %vm1992, %v2076, %v2052
        %v2078 = vsel %vm1991, %v1571, %v2075
        %v2079 = vsel %vm1991, 0, %v2077
        %v2080 = vcosq.f32.pop %v2078
        %v2081 = vsinq.f32.pop %v2078
        %vm2082 = vweird.f32 %v1571
        %v2083 = vadd.s32 %v2079, 3
        %v2084 = vand.u32 %v2083, 3
        %vm2085 = vcmp.lt.s32.totalorder %v2084, 2
        %vm2086 = vcmp.eq.s32.totalorder %v2084, 0
        %v2087 = vxor.u32 %v2081, 2147483648
        %v2088 = vsel %vm2086, %v2080, %v2087
        %vm2089 = vcmp.eq.s32.totalorder %v2084, 2
        %v2090 = vxor.u32 %v2080, 2147483648
        %v2091 = vsel %vm2089, %v2090, %v2081
        %v2092 = vsel %vm2085, %v2088, %v2091
        %v2093 = vsel %vm2082, nan, %v2092
        %v2094 = vand.u32 2147483647, %v1572
        %vm2095 = vcmp.le.f32.partialorder %v2094, 0.7853982
        %vm2096 = vcmp.lt.s32.totalorder %v1572, 0
        %v2097 = vand.u32 %v1572, 2139095040
        %v2098 = vshrl.u32 %v2097, 23
        %v2099 = vsub.s32 %v2098, 127
        %v2100 = vand.u32 2147483647, %v1572
        %v2101 = vand.u32 %v2100, 8388607
        %v2102 = vor.u32 %v2101, 8388608
        %v2103 = vsub.s32 0, %v2102
        %v2104 = vadd.s32 %v2099, 1
        %vm2105 = vcmp.gt.s32.totalorder %v2104, 0
        %v2106 = vsel %vm2105, %v2104, 0
        %v2107 = vshrl.u32 %v2106, 5
        %v2108 = vand.u32 %v2106, 31
        %v2109 = vsub.s32 32, %v2108
        %v2110 = vshrl.u32 683565275, %v2109
        %v2111 = vshll.u32 683565275, %v2108
        %v2112 = vshrl.u32 2475754826, %v2109
        %v2113 = vor.u32 %v2111, %v2112
        %v2114 = vshll.u32 2475754826, %v2108
        %v2115 = vshrl.u32 2131351028, %v2109
        %v2116 = vor.u32 %v2114, %v2115
        %v2117 = vshll.u32 2131351028, %v2108
        %v2118 = vshrl.u32 2102212464, %v2109
        %v2119 = vor.u32 %v2117, %v2118
        %v2120 = vshll.u32 2102212464, %v2108
        %v2121 = vshrl.u32 920167782, %v2109
        %v2122 = vor.u32 %v2120, %v2121
        %v2123 = vshll.u32 920167782, %v2108
        %v2124 = vshrl.u32 1326507024, %v2109
        %v2125 = vor.u32 %v2123, %v2124
        %vm2126 = vcmp.lt.s32.totalorder %v2107, 1
        %vm2127 = vcmp.lt.s32.totalorder %v2107, 2
        %vm2128 = vcmp.lt.s32.totalorder %v2107, 3
        %vm2129 = vcmp.lt.s32.totalorder %v2107, 4
        %v2130 = vsel %vm2126, %v2110, %v2113
        %v2131 = vsel %vm2129, %v2119, 2102212464
        %v2132 = vsel %vm2128, %v2116, %v2131
        %v2133 = vsel %vm2127, %v2130, %v2132
        %v2134 = vsel %vm2126, %v2113, %v2116
        %v2135 = vsel %vm2129, %v2122, 920167782
        %v2136 = vsel %vm2128, %v2119, %v2135
        %v2137 = vsel %vm2127, %v2134, %v2136
        %v2138 = vsel %vm2126, %v2116, %v2119
        %v2139 = vsel %vm2129, %v2125, 1326507024
        %v2140 = vsel %vm2128, %v2122, %v2139
        %v2141 = vsel %vm2127, %v2138, %v2140
        %v2142 = vshll.u32 %v2102, 8
        %v2143 = vmul.u32.u64.compose %v2142, %v2141
        %v2144 = vextract.low.u32 %v2143
        %v2145 = vextract.high.u32 %v2143
        %v2146 = vmul.u32.u64.compose %v2142, %v2137
        %v2147 = vextract.low.u32 %v2146
        %v2148 = vextract.high.u32 %v2146
        %v2149 = vmul.u32 %v2142, %v2133
        %v2150 = vadd.s32 %v2145, %v2147
        %vm2151 = vc.u32 %v2145, %v2147
        %v2152 = vadd.s32 %v2148, 1
        %v2153 = vsel %vm2151, %v2152, %v2148
        %v2154 = vadd.s32 %v2149, %v2153
        %v2155 = vadd.s32 %v2154, 536870912
        %v2156 = vshrl.u32 %v2155, 30
        %v2157 = vshll.u32 %v2156, 30
        %v2158 = vsub.s32 %v2154, %v2157
        %vm2159 = vcmp.lt.s32.totalorder %v2158, 0
        %v2160 = vsub.s32 0, %v2158
        %v2161 = vsel %vm2159, %v2160, %v2158
        %v2162 = vclz %v2161
        %v2163 = vsub.s32 %v2162, 2
        %vm2164 = vcmp.gt.s32.totalorder 0, %v2163
        %v2165 = vsel %vm2164, 0, %v2163
        %v2166 = vsub.s32 32, %v2165
        %v2167 = vshll.u32 %v2158, %v2165
        %v2168 = vshrl.u32 %v2150, %v2166
        %v2169 = vor.u32 %v2167, %v2168
        %v2170 = vsub.s32 4294967266, %v2165
        %v2171 = vadd.s32 %v2170, 127
        %v2172 = vshll.u32 %v2171, 23
        %v2173 = vor.u32 4788187, %v2172
        %v2174 = vand.u32 2147483647, %v2173
        %v2176 = vcvt.s32.f32 %v2169
        %v2177 = vmul.f32 %v2176, %v2174
        %v2178 = vxor.u32 %v2177, 2147483648
        %v2179 = vsel %vm2096, %v2178, %v2177
        %v2180 = vsub.s32 4, %v2156
        %v2181 = vsel %vm2096, %v2180, %v2156
        %v2182 = vsel %vm2095, %v1572, %v2179
        %v2183 = vsel %vm2095, 0, %v2181
        %v2184 = vcosq.f32.pop %v2182
        %v2185 = vsinq.f32.pop %v2182
        %vm2186 = vweird.f32 %v1572
        %v2187 = vadd.s32 %v2183, 3
        %v2188 = vand.u32 %v2187, 3
        %vm2189 = vcmp.lt.s32.totalorder %v2188, 2
        %vm2190 = vcmp.eq.s32.totalorder %v2188, 0
        %v2191 = vxor.u32 %v2185, 2147483648
        %v2192 = vsel %vm2190, %v2184, %v2191
        %vm2193 = vcmp.eq.s32.totalorder %v2188, 2
        %v2194 = vxor.u32 %v2184, 2147483648
        %v2195 = vsel %vm2193, %v2194, %v2185
        %v2196 = vsel %vm2189, %v2192, %v2195
        %v2197 = vsel %vm2186, nan, %v2196
        %v2198 = vand.u32 2147483647, %v1573
        %vm2199 = vcmp.le.f32.partialorder %v2198, 0.7853982
        %vm2200 = vcmp.lt.s32.totalorder %v1573, 0
        %v2201 = vand.u32 %v1573, 2139095040
        %v2202 = vshrl.u32 %v2201, 23
        %v2203 = vsub.s32 %v2202, 127
        %v2204 = vand.u32 2147483647, %v1573
        %v2205 = vand.u32 %v2204, 8388607
        %v2206 = vor.u32 %v2205, 8388608
        %v2207 = vsub.s32 0, %v2206
        %v2208 = vadd.s32 %v2203, 1
        %vm2209 = vcmp.gt.s32.totalorder %v2208, 0
        %v2210 = vsel %vm2209, %v2208, 0
        %v2211 = vshrl.u32 %v2210, 5
        %v2212 = vand.u32 %v2210, 31
        %v2213 = vsub.s32 32, %v2212
        %v2214 = vshrl.u32 683565275, %v2213
        %v2215 = vshll.u32 683565275, %v2212
        %v2216 = vshrl.u32 2475754826, %v2213
        %v2217 = vor.u32 %v2215, %v2216
        %v2218 = vshll.u32 2475754826, %v2212
        %v2219 = vshrl.u32 2131351028, %v2213
        %v2220 = vor.u32 %v2218, %v2219
        %v2221 = vshll.u32 2131351028, %v2212
        %v2222 = vshrl.u32 2102212464, %v2213
        %v2223 = vor.u32 %v2221, %v2222
        %v2224 = vshll.u32 2102212464, %v2212
        %v2225 = vshrl.u32 920167782, %v2213
        %v2226 = vor.u32 %v2224, %v2225
        %v2227 = vshll.u32 920167782, %v2212
        %v2228 = vshrl.u32 1326507024, %v2213
        %v2229 = vor.u32 %v2227, %v2228
        %vm2230 = vcmp.lt.s32.totalorder %v2211, 1
        %vm2231 = vcmp.lt.s32.totalorder %v2211, 2
        %vm2232 = vcmp.lt.s32.totalorder %v2211, 3
        %vm2233 = vcmp.lt.s32.totalorder %v2211, 4
        %v2234 = vsel %vm2230, %v2214, %v2217
        %v2235 = vsel %vm2233, %v2223, 2102212464
        %v2236 = vsel %vm2232, %v2220, %v2235
        %v2237 = vsel %vm2231, %v2234, %v2236
        %v2238 = vsel %vm2230, %v2217, %v2220
        %v2239 = vsel %vm2233, %v2226, 920167782
        %v2240 = vsel %vm2232, %v2223, %v2239
        %v2241 = vsel %vm2231, %v2238, %v2240
        %v2242 = vsel %vm2230, %v2220, %v2223
        %v2243 = vsel %vm2233, %v2229, 1326507024
        %v2244 = vsel %vm2232, %v2226, %v2243
        %v2245 = vsel %vm2231, %v2242, %v2244
        %v2246 = vshll.u32 %v2206, 8
        %v2247 = vmul.u32.u64.compose %v2246, %v2245
        %v2248 = vextract.low.u32 %v2247
        %v2249 = vextract.high.u32 %v2247
        %v2250 = vmul.u32.u64.compose %v2246, %v2241
        %v2251 = vextract.low.u32 %v2250
        %v2252 = vextract.high.u32 %v2250
        %v2253 = vmul.u32 %v2246, %v2237
        %v2254 = vadd.s32 %v2249, %v2251
        %vm2255 = vc.u32 %v2249, %v2251
        %v2256 = vadd.s32 %v2252, 1
        %v2257 = vsel %vm2255, %v2256, %v2252
        %v2258 = vadd.s32 %v2253, %v2257
        %v2259 = vadd.s32 %v2258, 536870912
        %v2260 = vshrl.u32 %v2259, 30
        %v2261 = vshll.u32 %v2260, 30
        %v2262 = vsub.s32 %v2258, %v2261
        %vm2263 = vcmp.lt.s32.totalorder %v2262, 0
        %v2264 = vsub.s32 0, %v2262
        %v2265 = vsel %vm2263, %v2264, %v2262
        %v2266 = vclz %v2265
        %v2267 = vsub.s32 %v2266, 2
        %vm2268 = vcmp.gt.s32.totalorder 0, %v2267
        %v2269 = vsel %vm2268, 0, %v2267
        %v2270 = vsub.s32 32, %v2269
        %v2271 = vshll.u32 %v2262, %v2269
        %v2272 = vshrl.u32 %v2254, %v2270
        %v2273 = vor.u32 %v2271, %v2272
        %v2274 = vsub.s32 4294967266, %v2269
        %v2275 = vadd.s32 %v2274, 127
        %v2276 = vshll.u32 %v2275, 23
        %v2277 = vor.u32 4788187, %v2276
        %v2278 = vand.u32 2147483647, %v2277
        %v2280 = vcvt.s32.f32 %v2273
        %v2281 = vmul.f32 %v2280, %v2278
        %v2282 = vxor.u32 %v2281, 2147483648
        %v2283 = vsel %vm2200, %v2282, %v2281
        %v2284 = vsub.s32 4, %v2260
        %v2285 = vsel %vm2200, %v2284, %v2260
        %v2286 = vsel %vm2199, %v1573, %v2283
        %v2287 = vsel %vm2199, 0, %v2285
        %v2288 = vcosq.f32.pop %v2286
        %v2289 = vsinq.f32.pop %v2286
        %vm2290 = vweird.f32 %v1573
        %v2291 = vadd.s32 %v2287, 3
        %v2292 = vand.u32 %v2291, 3
        %vm2293 = vcmp.lt.s32.totalorder %v2292, 2
        %vm2294 = vcmp.eq.s32.totalorder %v2292, 0
        %v2295 = vxor.u32 %v2289, 2147483648
        %v2296 = vsel %vm2294, %v2288, %v2295
        %vm2297 = vcmp.eq.s32.totalorder %v2292, 2
        %v2298 = vxor.u32 %v2288, 2147483648
        %v2299 = vsel %vm2297, %v2298, %v2289
        %v2300 = vsel %vm2293, %v2296, %v2299
        %v2301 = vsel %vm2290, nan, %v2300
        %v2302 = vmul.f32 %v1677, %v1677
        %v2303 = vmul.f32 %v1781, %v1781
        %v2304 = vmul.f32 %v1885, %v1885
        %v2305 = vmul.f32 %v1989, %v1989
        %v2306 = vmul.f32 %v2093, %v2093
        %v2307 = vmul.f32 %v2197, %v2197
        %v2308 = vmul.f32 %v2301, %v2301
        %v2310 = vlaneseq
        %v2311 = vshrl.u32 %v2310, 7
        %v2312 = vsub.s32 0, %v2311
        %v2313 = vrot.slane %v1560, %v2312
        %v2315 = vmul.f32 %v2313, %v2302
        %v2316 = vmul.f32 %v2313, %v2303
        %v2317 = vmul.f32 %v2313, %v2304
        %v2318 = vmul.f32 %v2313, %v2305
        %v2319 = vmul.f32 %v2313, %v2306
        %v2320 = vmul.f32 %v2313, %v2307
        %v2321 = vmul.f32 %v2313, %v2308
        %v2322 = vadd.f32 %v1552, %v2315
        %v2323 = vadd.f32 %v1553, %v2316
        %v2324 = vadd.f32 %v1554, %v2317
        %v2325 = vadd.f32 %v1555, %v2318
        %v2326 = vadd.f32 %v1556, %v2319
        %v2327 = vadd.f32 %v1557, %v2320
        %v2328 = vadd.f32 %v1558, %v2321
        %v2329 = vld [vmem:[#allocation13] sm:$0x1]
        %v2337 = vrot.slane %v2322, 1
        %v2338 = vrot.slane %v2323, 1
        %v2339 = vsel %vm1324, %v2337, %v2338
        %v2340 = vrot.slane %v2324, 1
        %v2341 = vsel %vm1324, %v2338, %v2340
        %v2342 = vrot.slane %v2325, 1
        %v2343 = vsel %vm1324, %v2340, %v2342
        %v2344 = vrot.slane %v2326, 1
        %v2345 = vsel %vm1324, %v2342, %v2344
        %v2346 = vrot.slane %v2327, 1
        %v2347 = vsel %vm1324, %v2344, %v2346
        %v2348 = vrot.slane %v2328, 1
        %v2349 = vsel %vm1324, %v2346, %v2348
        %2350 = vrot.lane.b32.xlu0 %v2339, 64
        %v2351 = vpop.permute.xlu0 %2350
        %2352 = vrot.lane.b32.xlu0 %v2341, 64
        %v2353 = vpop.permute.xlu0 %2352
        %2354 = vrot.lane.b32.xlu0 %v2343, 64
        %v2355 = vpop.permute.xlu0 %2354
        %2356 = vrot.lane.b32.xlu0 %v2345, 64
        %v2357 = vpop.permute.xlu0 %2356
        %2358 = vrot.lane.b32.xlu0 %v2347, 64
        %v2359 = vpop.permute.xlu0 %2358
        %2360 = vrot.lane.b32.xlu0 %v2349, 64
        %v2361 = vpop.permute.xlu0 %2360
        %2362 = vrot.lane.b32.xlu0 %v2348, 64
        %v2363 = vpop.permute.xlu0 %2362
        %v2371 = vrot.slane %v2322, 2
        %v2372 = vrot.slane %v2323, 2
        %v2373 = vsel %vm1359, %v2371, %v2372
        %v2374 = vrot.slane %v2324, 2
        %v2375 = vsel %vm1359, %v2372, %v2374
        %v2376 = vrot.slane %v2325, 2
        %v2377 = vsel %vm1359, %v2374, %v2376
        %v2378 = vrot.slane %v2326, 2
        %v2379 = vsel %vm1359, %v2376, %v2378
        %v2380 = vrot.slane %v2327, 2
        %v2381 = vsel %vm1359, %v2378, %v2380
        %v2382 = vrot.slane %v2328, 2
        %v2383 = vsel %vm1359, %v2380, %v2382
        %v2384 = vsel %vm1373, %v2322, %v2351
        %v2385 = vsel %vm1373, %v2323, %v2353
        %v2386 = vsel %vm1373, %v2324, %v2355
        %v2387 = vsel %vm1373, %v2325, %v2357
        %v2388 = vsel %vm1373, %v2326, %v2359
        %v2389 = vsel %vm1373, %v2327, %v2361
        %v2390 = vsel %vm1373, %v2328, %v2363
        %v2391 = vld [vmem:[#allocation11] sm:$0xff]
        %v2392 = vld [vmem:[#allocation11 + $0x8] sm:$0xff]
        %v2393 = vld [vmem:[#allocation11 + $0x10] sm:$0xff]
        %v2394 = vld [vmem:[#allocation11 + $0x18] sm:$0xff]
        %v2395 = vld [vmem:[#allocation11 + $0x20] sm:$0xff]
        %v2396 = vld [vmem:[#allocation11 + $0x28] sm:$0xff]
        %v2397 = vld [vmem:[#allocation11 + $0x30] sm:$0xff]
        %v2398 = vld [vmem:[#allocation11 + $0x38] sm:$0xff]
        %v2399 = vld [vmem:[#allocation11 + $0x40] sm:$0xff]
        %v2400 = vld [vmem:[#allocation11 + $0x48] sm:$0xff]
        %v2401 = vld [vmem:[#allocation11 + $0x50] sm:$0xff]
        %v2402 = vld [vmem:[#allocation11 + $0x58] sm:$0xff]
        %v2403 = vld [vmem:[#allocation11 + $0x60] sm:$0xff]
        %v2404 = vld [vmem:[#allocation11 + $0x68] sm:$0xff]
        %v2405 = vld [vmem:[#allocation11 + $0x70] sm:$0xff]
        %v2406 = vld [vmem:[#allocation11 + $0x78] sm:$0xff]
        %v2407 = vld [vmem:[#allocation11 + $0x80] sm:$0xff]
        %v2408 = vld [vmem:[#allocation11 + $0x88] sm:$0xff]
        %v2409 = vld [vmem:[#allocation11 + $0x90] sm:$0xff]
        %v2410 = vld [vmem:[#allocation11 + $0x98] sm:$0xff]
        %v2411 = vld [vmem:[#allocation11 + $0xa0] sm:$0xff]
        %v2412 = vld [vmem:[#allocation11 + $0xa8] sm:$0xff]
        %v2413 = vld [vmem:[#allocation11 + $0xb0] sm:$0xff]
        %v2414 = vld [vmem:[#allocation11 + $0xb8] sm:$0xff]
        %v2416 = vlaneseq
        %v2417 = vshrl.u32 %v2416, 7
        %v2418 = vsub.s32 0, %v2417
        %v2419 = vrot.slane %v2329, %v2418
        %v2421 = vsel %vm1373, %v2373, 0
        %v2423 = vsel %vm1373, %v2375, 0
        %v2425 = vsel %vm1373, %v2377, 0
        %v2427 = vsel %vm1373, %v2379, 0
        %v2429 = vsel %vm1373, %v2381, 0
        %v2431 = vsel %vm1373, %v2383, 0
        %v2433 = vsel %vm1373, %v2382, 0
        %2435 = vmatprep.subr.mxu0 0.0
        %2436 = vmatpush1.msra.mxu0 %v2391
        %2437 = vmatprep.subr.mxu0 0.0
        %2438 = vmatpush1.msra.mxu0 %v2392
        %2439 = vmatprep.subr.mxu0 0.0
        %2440 = vmatpush1.msra.mxu0 %v2393
        %2441 = vmatprep.subr.mxu0 0.0
        %2442 = vmatpush1.msra.mxu0 %v2394
        %2443 = vmatprep.subr.mxu0 0.0
        %2444 = vmatpush1.msra.mxu0 %v2395
        %2445 = vmatprep.subr.mxu0 0.0
        %2446 = vmatpush1.msra.mxu0 %v2396
        %2447 = vmatprep.subr.mxu0 0.0
        %2448 = vmatpush1.msra.mxu0 %v2397
        %2449 = vmatprep.subr.mxu0 0.0
        %2450 = vmatpush1.msra.mxu0 %v2398
        %2451 = vmatprep.subr.mxu0 0.0
        %2452 = vmatpush1.msra.mxu0 %v2399
        %2453 = vmatprep.subr.mxu0 0.0
        %2454 = vmatpush1.msra.mxu0 %v2400
        %2455 = vmatprep.subr.mxu0 0.0
        %2456 = vmatpush1.msra.mxu0 %v2401
        %2457 = vmatprep.subr.mxu0 0.0
        %2458 = vmatpush1.msra.mxu0 %v2402
        %2459 = vmatprep.subr.mxu0 0.0
        %2460 = vmatpush1.msra.mxu0 %v2403
        %2461 = vmatprep.subr.mxu0 0.0
        %2462 = vmatpush1.msra.mxu0 %v2404
        %2463 = vmatprep.subr.mxu0 0.0
        %2464 = vmatpush1.msra.mxu0 %v2405
        %2465 = vmatprep.subr.mxu0 0.0
        %2466 = vmatpush1.msra.mxu0 %v2406
        %2467 = vmatprep.subr.mxu0 0.0
        %2468 = vmatpush1.msra.mxu0 %v2407
        %2469 = vmatprep.subr.mxu0 0.0
        %2470 = vmatpush1.msra.mxu0 %v2408
        %2471 = vmatprep.subr.mxu0 0.0
        %2472 = vmatpush1.msra.mxu0 %v2409
        %2473 = vmatprep.subr.mxu0 0.0
        %2474 = vmatpush1.msra.mxu0 %v2410
        %2475 = vmatprep.subr.mxu0 0.0
        %2476 = vmatpush1.msra.mxu0 %v2411
        %2477 = vmatprep.subr.mxu0 0.0
        %2478 = vmatpush1.msra.mxu0 %v2412
        %2479 = vmatprep.subr.mxu0 0.0
        %2480 = vmatpush1.msra.mxu0 %v2413
        %2481 = vmatprep.subr.mxu0 0.0
        %2482 = vmatpush1.msra.mxu0 %v2414
        %2483 = vmatprep.subr.mxu0 0.0
        %2484 = vmatpush1.msra.mxu0 0.0
        %2485 = vmatprep.subr.mxu0 0.0
        %2486 = vmatpush1.msra.mxu0 0.0
        %2487 = vmatprep.subr.mxu0 0.0
        %2488 = vmatpush1.msra.mxu0 0.0
        %2489 = vmatprep.subr.mxu0 0.0
        %2490 = vmatpush1.msra.mxu0 0.0
        %2491 = vmatprep.subr.mxu0 0.0
        %2492 = vmatpush1.msra.mxu0 0.0
        %2493 = vmatprep.subr.mxu0 0.0
        %2494 = vmatpush1.msra.mxu0 0.0
        %2495 = vmatprep.subr.mxu0 0.0
        %2496 = vmatpush1.msra.mxu0 0.0
        %2497 = vmatprep.subr.mxu0 0.0
        %2498 = vmatpush1.msra.mxu0 0.0
        %2499 = vmatprep.mubr.f32.mxu0 %v2421
        %2500 = vmatmul.mubr.f32.gmra.mrb[0].mxu0 %v2384
        %v2501 = vpop.f32.mrb[0].mxu0
        %v2502 = vadd.f32 %v2419, %v2501
        %v2503 = vpop.f32.mrb[0].mxu0
        %2504 = vmatprep.mubr.f32.mxu0 %v2423
        %2505 = vmatmul.mubr.f32.gmra.mrb[0].mxu0 %v2385
        %v2506 = vpop.f32.mrb[0].mxu0
        %v2507 = vadd.f32 %v2419, %v2506
        %v2508 = vpop.f32.mrb[0].mxu0
        %2509 = vmatprep.mubr.f32.mxu0 %v2425
        %2510 = vmatmul.mubr.f32.gmra.mrb[0].mxu0 %v2386
        %v2511 = vpop.f32.mrb[0].mxu0
        %v2512 = vadd.f32 %v2419, %v2511
        %v2513 = vpop.f32.mrb[0].mxu0
        %2514 = vmatprep.mubr.f32.mxu0 %v2427
        %2515 = vmatmul.mubr.f32.gmra.mrb[0].mxu0 %v2387
        %v2516 = vpop.f32.mrb[0].mxu0
        %v2517 = vadd.f32 %v2419, %v2516
        %v2518 = vpop.f32.mrb[0].mxu0
        %2519 = vmatprep.mubr.f32.mxu0 %v2429
        %2520 = vmatmul.mubr.f32.gmra.mrb[0].mxu0 %v2388
        %v2521 = vpop.f32.mrb[0].mxu0
        %v2522 = vadd.f32 %v2419, %v2521
        %v2523 = vpop.f32.mrb[0].mxu0
        %2524 = vmatprep.mubr.f32.mxu0 %v2431
        %2525 = vmatmul.mubr.f32.gmra.mrb[0].mxu0 %v2389
        %v2526 = vpop.f32.mrb[0].mxu0
        %v2527 = vadd.f32 %v2419, %v2526
        %v2528 = vpop.f32.mrb[0].mxu0
        %2529 = vmatprep.mubr.f32.mxu0 %v2433
        %2530 = vmatmul.mubr.f32.gmra.mrb[0].mxu0 %v2390
        %v2531 = vpop.f32.mrb[0].mxu0
        %v2532 = vadd.f32 %v2419, %v2531
        %v2533 = vpop.f32.mrb[0].mxu0
        %2534 = vdwg.mxu0
        %v2542 = vrot.slane %v486, 2
        %v2543 = vrot.slane %v487, 2
        %v2544 = vsel %vm1359, %v2542, %v2543
        %v2545 = vrot.slane %v488, 2
        %v2546 = vsel %vm1359, %v2543, %v2545
        %v2547 = vrot.slane %v489, 2
        %v2548 = vsel %vm1359, %v2545, %v2547
        %v2549 = vrot.slane %v490, 2
        %v2550 = vsel %vm1359, %v2547, %v2549
        %v2551 = vrot.slane %v491, 2
        %v2552 = vsel %vm1359, %v2549, %v2551
        %v2553 = vrot.slane %v492, 2
        %v2554 = vsel %vm1359, %v2551, %v2553
        %v2562 = vadd.f32 %v2502, %v2544
        %v2563 = vadd.f32 %v2507, %v2546
        %v2564 = vadd.f32 %v2512, %v2548
        %v2565 = vadd.f32 %v2517, %v2550
        %v2566 = vadd.f32 %v2522, %v2552
        %v2567 = vadd.f32 %v2527, %v2554
        %v2568 = vadd.f32 %v2532, %v2553
        %v2569 = vrot.slane %v539, 2
        %v2570 = vrot.slane %v540, 2
        %v2571 = vsel %vm1359, %v2569, %v2570
        %v2572 = vrot.slane %v541, 2
        %v2573 = vsel %vm1359, %v2570, %v2572
        %v2574 = vrot.slane %v542, 2
        %v2575 = vsel %vm1359, %v2572, %v2574
        %v2576 = vrot.slane %v543, 2
        %v2577 = vsel %vm1359, %v2574, %v2576
        %v2578 = vrot.slane %v544, 2
        %v2579 = vsel %vm1359, %v2576, %v2578
        %v2580 = vrot.slane %v545, 2
        %v2581 = vsel %vm1359, %v2578, %v2580
        %v2589 = vmul.f32 %v2562, %v2571
        %v2590 = vmul.f32 %v2563, %v2573
        %v2591 = vmul.f32 %v2564, %v2575
        %v2592 = vmul.f32 %v2565, %v2577
        %v2593 = vmul.f32 %v2566, %v2579
        %v2594 = vmul.f32 %v2567, %v2581
        %v2595 = vmul.f32 %v2568, %v2580
        %s2596 = scalar_lea.vmem [#allocation8], 1
        %v2597 = vld [vmem:[%s2596] sm:$0x1]
        %s2598 = scalar_lea.vmem [#allocation10], 1
        %v2599 = vld [vmem:[%s2598] sm:$0x1]
        %v2601 = vlaneseq
        %v2602 = vshrl.u32 %v2601, 7
        %v2603 = vsub.s32 0, %v2602
        %v2604 = vrot.slane %v2597, %v2603
        %v2606 = vmul.f32 %v2589, %v2604
        %v2607 = vmul.f32 %v2590, %v2604
        %v2608 = vmul.f32 %v2591, %v2604
        %v2609 = vmul.f32 %v2592, %v2604
        %v2610 = vmul.f32 %v2593, %v2604
        %v2611 = vmul.f32 %v2594, %v2604
        %v2612 = vmul.f32 %v2595, %v2604
        %v2613 = vand.u32 2147483647, %v2606
        %vm2614 = vcmp.le.f32.partialorder %v2613, 0.7853982
        %vm2615 = vcmp.lt.s32.totalorder %v2606, 0
        %v2616 = vand.u32 %v2606, 2139095040
        %v2617 = vshrl.u32 %v2616, 23
        %v2618 = vsub.s32 %v2617, 127
        %v2619 = vand.u32 2147483647, %v2606
        %v2620 = vand.u32 %v2619, 8388607
        %v2621 = vor.u32 %v2620, 8388608
        %v2622 = vsub.s32 0, %v2621
        %v2623 = vadd.s32 %v2618, 1
        %vm2624 = vcmp.gt.s32.totalorder %v2623, 0
        %v2625 = vsel %vm2624, %v2623, 0
        %v2626 = vshrl.u32 %v2625, 5
        %v2627 = vand.u32 %v2625, 31
        %v2628 = vsub.s32 32, %v2627
        %v2629 = vshrl.u32 683565275, %v2628
        %v2630 = vshll.u32 683565275, %v2627
        %v2631 = vshrl.u32 2475754826, %v2628
        %v2632 = vor.u32 %v2630, %v2631
        %v2633 = vshll.u32 2475754826, %v2627
        %v2634 = vshrl.u32 2131351028, %v2628
        %v2635 = vor.u32 %v2633, %v2634
        %v2636 = vshll.u32 2131351028, %v2627
        %v2637 = vshrl.u32 2102212464, %v2628
        %v2638 = vor.u32 %v2636, %v2637
        %v2639 = vshll.u32 2102212464, %v2627
        %v2640 = vshrl.u32 920167782, %v2628
        %v2641 = vor.u32 %v2639, %v2640
        %v2642 = vshll.u32 920167782, %v2627
        %v2643 = vshrl.u32 1326507024, %v2628
        %v2644 = vor.u32 %v2642, %v2643
        %vm2645 = vcmp.lt.s32.totalorder %v2626, 1
        %vm2646 = vcmp.lt.s32.totalorder %v2626, 2
        %vm2647 = vcmp.lt.s32.totalorder %v2626, 3
        %vm2648 = vcmp.lt.s32.totalorder %v2626, 4
        %v2649 = vsel %vm2645, %v2629, %v2632
        %v2650 = vsel %vm2648, %v2638, 2102212464
        %v2651 = vsel %vm2647, %v2635, %v2650
        %v2652 = vsel %vm2646, %v2649, %v2651
        %v2653 = vsel %vm2645, %v2632, %v2635
        %v2654 = vsel %vm2648, %v2641, 920167782
        %v2655 = vsel %vm2647, %v2638, %v2654
        %v2656 = vsel %vm2646, %v2653, %v2655
        %v2657 = vsel %vm2645, %v2635, %v2638
        %v2658 = vsel %vm2648, %v2644, 1326507024
        %v2659 = vsel %vm2647, %v2641, %v2658
        %v2660 = vsel %vm2646, %v2657, %v2659
        %v2661 = vshll.u32 %v2621, 8
        %v2662 = vmul.u32.u64.compose %v2661, %v2660
        %v2663 = vextract.low.u32 %v2662
        %v2664 = vextract.high.u32 %v2662
        %v2665 = vmul.u32.u64.compose %v2661, %v2656
        %v2666 = vextract.low.u32 %v2665
        %v2667 = vextract.high.u32 %v2665
        %v2668 = vmul.u32 %v2661, %v2652
        %v2669 = vadd.s32 %v2664, %v2666
        %vm2670 = vc.u32 %v2664, %v2666
        %v2671 = vadd.s32 %v2667, 1
        %v2672 = vsel %vm2670, %v2671, %v2667
        %v2673 = vadd.s32 %v2668, %v2672
        %v2674 = vadd.s32 %v2673, 536870912
        %v2675 = vshrl.u32 %v2674, 30
        %v2676 = vshll.u32 %v2675, 30
        %v2677 = vsub.s32 %v2673, %v2676
        %vm2678 = vcmp.lt.s32.totalorder %v2677, 0
        %v2679 = vsub.s32 0, %v2677
        %v2680 = vsel %vm2678, %v2679, %v2677
        %v2681 = vclz %v2680
        %v2682 = vsub.s32 %v2681, 2
        %vm2683 = vcmp.gt.s32.totalorder 0, %v2682
        %v2684 = vsel %vm2683, 0, %v2682
        %v2685 = vsub.s32 32, %v2684
        %v2686 = vshll.u32 %v2677, %v2684
        %v2687 = vshrl.u32 %v2669, %v2685
        %v2688 = vor.u32 %v2686, %v2687
        %v2689 = vsub.s32 4294967266, %v2684
        %v2690 = vadd.s32 %v2689, 127
        %v2691 = vshll.u32 %v2690, 23
        %v2692 = vor.u32 4788187, %v2691
        %v2693 = vand.u32 2147483647, %v2692
        %v2695 = vcvt.s32.f32 %v2688
        %v2696 = vmul.f32 %v2695, %v2693
        %v2697 = vxor.u32 %v2696, 2147483648
        %v2698 = vsel %vm2615, %v2697, %v2696
        %v2699 = vsub.s32 4, %v2675
        %v2700 = vsel %vm2615, %v2699, %v2675
        %v2701 = vsel %vm2614, %v2606, %v2698
        %v2702 = vsel %vm2614, 0, %v2700
        %v2703 = vcosq.f32.pop %v2701
        %v2704 = vsinq.f32.pop %v2701
        %vm2705 = vweird.f32 %v2606
        %v2706 = vadd.s32 %v2702, 3
        %v2707 = vand.u32 %v2706, 3
        %vm2708 = vcmp.lt.s32.totalorder %v2707, 2
        %vm2709 = vcmp.eq.s32.totalorder %v2707, 0
        %v2710 = vxor.u32 %v2704, 2147483648
        %v2711 = vsel %vm2709, %v2703, %v2710
        %vm2712 = vcmp.eq.s32.totalorder %v2707, 2
        %v2713 = vxor.u32 %v2703, 2147483648
        %v2714 = vsel %vm2712, %v2713, %v2704
        %v2715 = vsel %vm2708, %v2711, %v2714
        %v2716 = vsel %vm2705, nan, %v2715
        %v2717 = vand.u32 2147483647, %v2607
        %vm2718 = vcmp.le.f32.partialorder %v2717, 0.7853982
        %vm2719 = vcmp.lt.s32.totalorder %v2607, 0
        %v2720 = vand.u32 %v2607, 2139095040
        %v2721 = vshrl.u32 %v2720, 23
        %v2722 = vsub.s32 %v2721, 127
        %v2723 = vand.u32 2147483647, %v2607
        %v2724 = vand.u32 %v2723, 8388607
        %v2725 = vor.u32 %v2724, 8388608
        %v2726 = vsub.s32 0, %v2725
        %v2727 = vadd.s32 %v2722, 1
        %vm2728 = vcmp.gt.s32.totalorder %v2727, 0
        %v2729 = vsel %vm2728, %v2727, 0
        %v2730 = vshrl.u32 %v2729, 5
        %v2731 = vand.u32 %v2729, 31
        %v2732 = vsub.s32 32, %v2731
        %v2733 = vshrl.u32 683565275, %v2732
        %v2734 = vshll.u32 683565275, %v2731
        %v2735 = vshrl.u32 2475754826, %v2732
        %v2736 = vor.u32 %v2734, %v2735
        %v2737 = vshll.u32 2475754826, %v2731
        %v2738 = vshrl.u32 2131351028, %v2732
        %v2739 = vor.u32 %v2737, %v2738
        %v2740 = vshll.u32 2131351028, %v2731
        %v2741 = vshrl.u32 2102212464, %v2732
        %v2742 = vor.u32 %v2740, %v2741
        %v2743 = vshll.u32 2102212464, %v2731
        %v2744 = vshrl.u32 920167782, %v2732
        %v2745 = vor.u32 %v2743, %v2744
        %v2746 = vshll.u32 920167782, %v2731
        %v2747 = vshrl.u32 1326507024, %v2732
        %v2748 = vor.u32 %v2746, %v2747
        %vm2749 = vcmp.lt.s32.totalorder %v2730, 1
        %vm2750 = vcmp.lt.s32.totalorder %v2730, 2
        %vm2751 = vcmp.lt.s32.totalorder %v2730, 3
        %vm2752 = vcmp.lt.s32.totalorder %v2730, 4
        %v2753 = vsel %vm2749, %v2733, %v2736
        %v2754 = vsel %vm2752, %v2742, 2102212464
        %v2755 = vsel %vm2751, %v2739, %v2754
        %v2756 = vsel %vm2750, %v2753, %v2755
        %v2757 = vsel %vm2749, %v2736, %v2739
        %v2758 = vsel %vm2752, %v2745, 920167782
        %v2759 = vsel %vm2751, %v2742, %v2758
        %v2760 = vsel %vm2750, %v2757, %v2759
        %v2761 = vsel %vm2749, %v2739, %v2742
        %v2762 = vsel %vm2752, %v2748, 1326507024
        %v2763 = vsel %vm2751, %v2745, %v2762
        %v2764 = vsel %vm2750, %v2761, %v2763
        %v2765 = vshll.u32 %v2725, 8
        %v2766 = vmul.u32.u64.compose %v2765, %v2764
        %v2767 = vextract.low.u32 %v2766
        %v2768 = vextract.high.u32 %v2766
        %v2769 = vmul.u32.u64.compose %v2765, %v2760
        %v2770 = vextract.low.u32 %v2769
        %v2771 = vextract.high.u32 %v2769
        %v2772 = vmul.u32 %v2765, %v2756
        %v2773 = vadd.s32 %v2768, %v2770
        %vm2774 = vc.u32 %v2768, %v2770
        %v2775 = vadd.s32 %v2771, 1
        %v2776 = vsel %vm2774, %v2775, %v2771
        %v2777 = vadd.s32 %v2772, %v2776
        %v2778 = vadd.s32 %v2777, 536870912
        %v2779 = vshrl.u32 %v2778, 30
        %v2780 = vshll.u32 %v2779, 30
        %v2781 = vsub.s32 %v2777, %v2780
        %vm2782 = vcmp.lt.s32.totalorder %v2781, 0
        %v2783 = vsub.s32 0, %v2781
        %v2784 = vsel %vm2782, %v2783, %v2781
        %v2785 = vclz %v2784
        %v2786 = vsub.s32 %v2785, 2
        %vm2787 = vcmp.gt.s32.totalorder 0, %v2786
        %v2788 = vsel %vm2787, 0, %v2786
        %v2789 = vsub.s32 32, %v2788
        %v2790 = vshll.u32 %v2781, %v2788
        %v2791 = vshrl.u32 %v2773, %v2789
        %v2792 = vor.u32 %v2790, %v2791
        %v2793 = vsub.s32 4294967266, %v2788
        %v2794 = vadd.s32 %v2793, 127
        %v2795 = vshll.u32 %v2794, 23
        %v2796 = vor.u32 4788187, %v2795
        %v2797 = vand.u32 2147483647, %v2796
        %v2799 = vcvt.s32.f32 %v2792
        %v2800 = vmul.f32 %v2799, %v2797
        %v2801 = vxor.u32 %v2800, 2147483648
        %v2802 = vsel %vm2719, %v2801, %v2800
        %v2803 = vsub.s32 4, %v2779
        %v2804 = vsel %vm2719, %v2803, %v2779
        %v2805 = vsel %vm2718, %v2607, %v2802
        %v2806 = vsel %vm2718, 0, %v2804
        %v2807 = vcosq.f32.pop %v2805
        %v2808 = vsinq.f32.pop %v2805
        %vm2809 = vweird.f32 %v2607
        %v2810 = vadd.s32 %v2806, 3
        %v2811 = vand.u32 %v2810, 3
        %vm2812 = vcmp.lt.s32.totalorder %v2811, 2
        %vm2813 = vcmp.eq.s32.totalorder %v2811, 0
        %v2814 = vxor.u32 %v2808, 2147483648
        %v2815 = vsel %vm2813, %v2807, %v2814
        %vm2816 = vcmp.eq.s32.totalorder %v2811, 2
        %v2817 = vxor.u32 %v2807, 2147483648
        %v2818 = vsel %vm2816, %v2817, %v2808
        %v2819 = vsel %vm2812, %v2815, %v2818
        %v2820 = vsel %vm2809, nan, %v2819
        %v2821 = vand.u32 2147483647, %v2608
        %vm2822 = vcmp.le.f32.partialorder %v2821, 0.7853982
        %vm2823 = vcmp.lt.s32.totalorder %v2608, 0
        %v2824 = vand.u32 %v2608, 2139095040
        %v2825 = vshrl.u32 %v2824, 23
        %v2826 = vsub.s32 %v2825, 127
        %v2827 = vand.u32 2147483647, %v2608
        %v2828 = vand.u32 %v2827, 8388607
        %v2829 = vor.u32 %v2828, 8388608
        %v2830 = vsub.s32 0, %v2829
        %v2831 = vadd.s32 %v2826, 1
        %vm2832 = vcmp.gt.s32.totalorder %v2831, 0
        %v2833 = vsel %vm2832, %v2831, 0
        %v2834 = vshrl.u32 %v2833, 5
        %v2835 = vand.u32 %v2833, 31
        %v2836 = vsub.s32 32, %v2835
        %v2837 = vshrl.u32 683565275, %v2836
        %v2838 = vshll.u32 683565275, %v2835
        %v2839 = vshrl.u32 2475754826, %v2836
        %v2840 = vor.u32 %v2838, %v2839
        %v2841 = vshll.u32 2475754826, %v2835
        %v2842 = vshrl.u32 2131351028, %v2836
        %v2843 = vor.u32 %v2841, %v2842
        %v2844 = vshll.u32 2131351028, %v2835
        %v2845 = vshrl.u32 2102212464, %v2836
        %v2846 = vor.u32 %v2844, %v2845
        %v2847 = vshll.u32 2102212464, %v2835
        %v2848 = vshrl.u32 920167782, %v2836
        %v2849 = vor.u32 %v2847, %v2848
        %v2850 = vshll.u32 920167782, %v2835
        %v2851 = vshrl.u32 1326507024, %v2836
        %v2852 = vor.u32 %v2850, %v2851
        %vm2853 = vcmp.lt.s32.totalorder %v2834, 1
        %vm2854 = vcmp.lt.s32.totalorder %v2834, 2
        %vm2855 = vcmp.lt.s32.totalorder %v2834, 3
        %vm2856 = vcmp.lt.s32.totalorder %v2834, 4
        %v2857 = vsel %vm2853, %v2837, %v2840
        %v2858 = vsel %vm2856, %v2846, 2102212464
        %v2859 = vsel %vm2855, %v2843, %v2858
        %v2860 = vsel %vm2854, %v2857, %v2859
        %v2861 = vsel %vm2853, %v2840, %v2843
        %v2862 = vsel %vm2856, %v2849, 920167782
        %v2863 = vsel %vm2855, %v2846, %v2862
        %v2864 = vsel %vm2854, %v2861, %v2863
        %v2865 = vsel %vm2853, %v2843, %v2846
        %v2866 = vsel %vm2856, %v2852, 1326507024
        %v2867 = vsel %vm2855, %v2849, %v2866
        %v2868 = vsel %vm2854, %v2865, %v2867
        %v2869 = vshll.u32 %v2829, 8
        %v2870 = vmul.u32.u64.compose %v2869, %v2868
        %v2871 = vextract.low.u32 %v2870
        %v2872 = vextract.high.u32 %v2870
        %v2873 = vmul.u32.u64.compose %v2869, %v2864
        %v2874 = vextract.low.u32 %v2873
        %v2875 = vextract.high.u32 %v2873
        %v2876 = vmul.u32 %v2869, %v2860
        %v2877 = vadd.s32 %v2872, %v2874
        %vm2878 = vc.u32 %v2872, %v2874
        %v2879 = vadd.s32 %v2875, 1
        %v2880 = vsel %vm2878, %v2879, %v2875
        %v2881 = vadd.s32 %v2876, %v2880
        %v2882 = vadd.s32 %v2881, 536870912
        %v2883 = vshrl.u32 %v2882, 30
        %v2884 = vshll.u32 %v2883, 30
        %v2885 = vsub.s32 %v2881, %v2884
        %vm2886 = vcmp.lt.s32.totalorder %v2885, 0
        %v2887 = vsub.s32 0, %v2885
        %v2888 = vsel %vm2886, %v2887, %v2885
        %v2889 = vclz %v2888
        %v2890 = vsub.s32 %v2889, 2
        %vm2891 = vcmp.gt.s32.totalorder 0, %v2890
        %v2892 = vsel %vm2891, 0, %v2890
        %v2893 = vsub.s32 32, %v2892
        %v2894 = vshll.u32 %v2885, %v2892
        %v2895 = vshrl.u32 %v2877, %v2893
        %v2896 = vor.u32 %v2894, %v2895
        %v2897 = vsub.s32 4294967266, %v2892
        %v2898 = vadd.s32 %v2897, 127
        %v2899 = vshll.u32 %v2898, 23
        %v2900 = vor.u32 4788187, %v2899
        %v2901 = vand.u32 2147483647, %v2900
        %v2903 = vcvt.s32.f32 %v2896
        %v2904 = vmul.f32 %v2903, %v2901
        %v2905 = vxor.u32 %v2904, 2147483648
        %v2906 = vsel %vm2823, %v2905, %v2904
        %v2907 = vsub.s32 4, %v2883
        %v2908 = vsel %vm2823, %v2907, %v2883
        %v2909 = vsel %vm2822, %v2608, %v2906
        %v2910 = vsel %vm2822, 0, %v2908
        %v2911 = vcosq.f32.pop %v2909
        %v2912 = vsinq.f32.pop %v2909
        %vm2913 = vweird.f32 %v2608
        %v2914 = vadd.s32 %v2910, 3
        %v2915 = vand.u32 %v2914, 3
        %vm2916 = vcmp.lt.s32.totalorder %v2915, 2
        %vm2917 = vcmp.eq.s32.totalorder %v2915, 0
        %v2918 = vxor.u32 %v2912, 2147483648
        %v2919 = vsel %vm2917, %v2911, %v2918
        %vm2920 = vcmp.eq.s32.totalorder %v2915, 2
        %v2921 = vxor.u32 %v2911, 2147483648
        %v2922 = vsel %vm2920, %v2921, %v2912
        %v2923 = vsel %vm2916, %v2919, %v2922
        %v2924 = vsel %vm2913, nan, %v2923
        %v2925 = vand.u32 2147483647, %v2609
        %vm2926 = vcmp.le.f32.partialorder %v2925, 0.7853982
        %vm2927 = vcmp.lt.s32.totalorder %v2609, 0
        %v2928 = vand.u32 %v2609, 2139095040
        %v2929 = vshrl.u32 %v2928, 23
        %v2930 = vsub.s32 %v2929, 127
        %v2931 = vand.u32 2147483647, %v2609
        %v2932 = vand.u32 %v2931, 8388607
        %v2933 = vor.u32 %v2932, 8388608
        %v2934 = vsub.s32 0, %v2933
        %v2935 = vadd.s32 %v2930, 1
        %vm2936 = vcmp.gt.s32.totalorder %v2935, 0
        %v2937 = vsel %vm2936, %v2935, 0
        %v2938 = vshrl.u32 %v2937, 5
        %v2939 = vand.u32 %v2937, 31
        %v2940 = vsub.s32 32, %v2939
        %v2941 = vshrl.u32 683565275, %v2940
        %v2942 = vshll.u32 683565275, %v2939
        %v2943 = vshrl.u32 2475754826, %v2940
        %v2944 = vor.u32 %v2942, %v2943
        %v2945 = vshll.u32 2475754826, %v2939
        %v2946 = vshrl.u32 2131351028, %v2940
        %v2947 = vor.u32 %v2945, %v2946
        %v2948 = vshll.u32 2131351028, %v2939
        %v2949 = vshrl.u32 2102212464, %v2940
        %v2950 = vor.u32 %v2948, %v2949
        %v2951 = vshll.u32 2102212464, %v2939
        %v2952 = vshrl.u32 920167782, %v2940
        %v2953 = vor.u32 %v2951, %v2952
        %v2954 = vshll.u32 920167782, %v2939
        %v2955 = vshrl.u32 1326507024, %v2940
        %v2956 = vor.u32 %v2954, %v2955
        %vm2957 = vcmp.lt.s32.totalorder %v2938, 1
        %vm2958 = vcmp.lt.s32.totalorder %v2938, 2
        %vm2959 = vcmp.lt.s32.totalorder %v2938, 3
        %vm2960 = vcmp.lt.s32.totalorder %v2938, 4
        %v2961 = vsel %vm2957, %v2941, %v2944
        %v2962 = vsel %vm2960, %v2950, 2102212464
        %v2963 = vsel %vm2959, %v2947, %v2962
        %v2964 = vsel %vm2958, %v2961, %v2963
        %v2965 = vsel %vm2957, %v2944, %v2947
        %v2966 = vsel %vm2960, %v2953, 920167782
        %v2967 = vsel %vm2959, %v2950, %v2966
        %v2968 = vsel %vm2958, %v2965, %v2967
        %v2969 = vsel %vm2957, %v2947, %v2950
        %v2970 = vsel %vm2960, %v2956, 1326507024
        %v2971 = vsel %vm2959, %v2953, %v2970
        %v2972 = vsel %vm2958, %v2969, %v2971
        %v2973 = vshll.u32 %v2933, 8
        %v2974 = vmul.u32.u64.compose %v2973, %v2972
        %v2975 = vextract.low.u32 %v2974
        %v2976 = vextract.high.u32 %v2974
        %v2977 = vmul.u32.u64.compose %v2973, %v2968
        %v2978 = vextract.low.u32 %v2977
        %v2979 = vextract.high.u32 %v2977
        %v2980 = vmul.u32 %v2973, %v2964
        %v2981 = vadd.s32 %v2976, %v2978
        %vm2982 = vc.u32 %v2976, %v2978
        %v2983 = vadd.s32 %v2979, 1
        %v2984 = vsel %vm2982, %v2983, %v2979
        %v2985 = vadd.s32 %v2980, %v2984
        %v2986 = vadd.s32 %v2985, 536870912
        %v2987 = vshrl.u32 %v2986, 30
        %v2988 = vshll.u32 %v2987, 30
        %v2989 = vsub.s32 %v2985, %v2988
        %vm2990 = vcmp.lt.s32.totalorder %v2989, 0
        %v2991 = vsub.s32 0, %v2989
        %v2992 = vsel %vm2990, %v2991, %v2989
        %v2993 = vclz %v2992
        %v2994 = vsub.s32 %v2993, 2
        %vm2995 = vcmp.gt.s32.totalorder 0, %v2994
        %v2996 = vsel %vm2995, 0, %v2994
        %v2997 = vsub.s32 32, %v2996
        %v2998 = vshll.u32 %v2989, %v2996
        %v2999 = vshrl.u32 %v2981, %v2997
        %v3000 = vor.u32 %v2998, %v2999
        %v3001 = vsub.s32 4294967266, %v2996
        %v3002 = vadd.s32 %v3001, 127
        %v3003 = vshll.u32 %v3002, 23
        %v3004 = vor.u32 4788187, %v3003
        %v3005 = vand.u32 2147483647, %v3004
        %v3007 = vcvt.s32.f32 %v3000
        %v3008 = vmul.f32 %v3007, %v3005
        %v3009 = vxor.u32 %v3008, 2147483648
        %v3010 = vsel %vm2927, %v3009, %v3008
        %v3011 = vsub.s32 4, %v2987
        %v3012 = vsel %vm2927, %v3011, %v2987
        %v3013 = vsel %vm2926, %v2609, %v3010
        %v3014 = vsel %vm2926, 0, %v3012
        %v3015 = vcosq.f32.pop %v3013
        %v3016 = vsinq.f32.pop %v3013
        %vm3017 = vweird.f32 %v2609
        %v3018 = vadd.s32 %v3014, 3
        %v3019 = vand.u32 %v3018, 3
        %vm3020 = vcmp.lt.s32.totalorder %v3019, 2
        %vm3021 = vcmp.eq.s32.totalorder %v3019, 0
        %v3022 = vxor.u32 %v3016, 2147483648
        %v3023 = vsel %vm3021, %v3015, %v3022
        %vm3024 = vcmp.eq.s32.totalorder %v3019, 2
        %v3025 = vxor.u32 %v3015, 2147483648
        %v3026 = vsel %vm3024, %v3025, %v3016
        %v3027 = vsel %vm3020, %v3023, %v3026
        %v3028 = vsel %vm3017, nan, %v3027
        %v3029 = vand.u32 2147483647, %v2610
        %vm3030 = vcmp.le.f32.partialorder %v3029, 0.7853982
        %vm3031 = vcmp.lt.s32.totalorder %v2610, 0
        %v3032 = vand.u32 %v2610, 2139095040
        %v3033 = vshrl.u32 %v3032, 23
        %v3034 = vsub.s32 %v3033, 127
        %v3035 = vand.u32 2147483647, %v2610
        %v3036 = vand.u32 %v3035, 8388607
        %v3037 = vor.u32 %v3036, 8388608
        %v3038 = vsub.s32 0, %v3037
        %v3039 = vadd.s32 %v3034, 1
        %vm3040 = vcmp.gt.s32.totalorder %v3039, 0
        %v3041 = vsel %vm3040, %v3039, 0
        %v3042 = vshrl.u32 %v3041, 5
        %v3043 = vand.u32 %v3041, 31
        %v3044 = vsub.s32 32, %v3043
        %v3045 = vshrl.u32 683565275, %v3044
        %v3046 = vshll.u32 683565275, %v3043
        %v3047 = vshrl.u32 2475754826, %v3044
        %v3048 = vor.u32 %v3046, %v3047
        %v3049 = vshll.u32 2475754826, %v3043
        %v3050 = vshrl.u32 2131351028, %v3044
        %v3051 = vor.u32 %v3049, %v3050
        %v3052 = vshll.u32 2131351028, %v3043
        %v3053 = vshrl.u32 2102212464, %v3044
        %v3054 = vor.u32 %v3052, %v3053
        %v3055 = vshll.u32 2102212464, %v3043
        %v3056 = vshrl.u32 920167782, %v3044
        %v3057 = vor.u32 %v3055, %v3056
        %v3058 = vshll.u32 920167782, %v3043
        %v3059 = vshrl.u32 1326507024, %v3044
        %v3060 = vor.u32 %v3058, %v3059
        %vm3061 = vcmp.lt.s32.totalorder %v3042, 1
        %vm3062 = vcmp.lt.s32.totalorder %v3042, 2
        %vm3063 = vcmp.lt.s32.totalorder %v3042, 3
        %vm3064 = vcmp.lt.s32.totalorder %v3042, 4
        %v3065 = vsel %vm3061, %v3045, %v3048
        %v3066 = vsel %vm3064, %v3054, 2102212464
        %v3067 = vsel %vm3063, %v3051, %v3066
        %v3068 = vsel %vm3062, %v3065, %v3067
        %v3069 = vsel %vm3061, %v3048, %v3051
        %v3070 = vsel %vm3064, %v3057, 920167782
        %v3071 = vsel %vm3063, %v3054, %v3070
        %v3072 = vsel %vm3062, %v3069, %v3071
        %v3073 = vsel %vm3061, %v3051, %v3054
        %v3074 = vsel %vm3064, %v3060, 1326507024
        %v3075 = vsel %vm3063, %v3057, %v3074
        %v3076 = vsel %vm3062, %v3073, %v3075
        %v3077 = vshll.u32 %v3037, 8
        %v3078 = vmul.u32.u64.compose %v3077, %v3076
        %v3079 = vextract.low.u32 %v3078
        %v3080 = vextract.high.u32 %v3078
        %v3081 = vmul.u32.u64.compose %v3077, %v3072
        %v3082 = vextract.low.u32 %v3081
        %v3083 = vextract.high.u32 %v3081
        %v3084 = vmul.u32 %v3077, %v3068
        %v3085 = vadd.s32 %v3080, %v3082
        %vm3086 = vc.u32 %v3080, %v3082
        %v3087 = vadd.s32 %v3083, 1
        %v3088 = vsel %vm3086, %v3087, %v3083
        %v3089 = vadd.s32 %v3084, %v3088
        %v3090 = vadd.s32 %v3089, 536870912
        %v3091 = vshrl.u32 %v3090, 30
        %v3092 = vshll.u32 %v3091, 30
        %v3093 = vsub.s32 %v3089, %v3092
        %vm3094 = vcmp.lt.s32.totalorder %v3093, 0
        %v3095 = vsub.s32 0, %v3093
        %v3096 = vsel %vm3094, %v3095, %v3093
        %v3097 = vclz %v3096
        %v3098 = vsub.s32 %v3097, 2
        %vm3099 = vcmp.gt.s32.totalorder 0, %v3098
        %v3100 = vsel %vm3099, 0, %v3098
        %v3101 = vsub.s32 32, %v3100
        %v3102 = vshll.u32 %v3093, %v3100
        %v3103 = vshrl.u32 %v3085, %v3101
        %v3104 = vor.u32 %v3102, %v3103
        %v3105 = vsub.s32 4294967266, %v3100
        %v3106 = vadd.s32 %v3105, 127
        %v3107 = vshll.u32 %v3106, 23
        %v3108 = vor.u32 4788187, %v3107
        %v3109 = vand.u32 2147483647, %v3108
        %v3111 = vcvt.s32.f32 %v3104
        %v3112 = vmul.f32 %v3111, %v3109
        %v3113 = vxor.u32 %v3112, 2147483648
        %v3114 = vsel %vm3031, %v3113, %v3112
        %v3115 = vsub.s32 4, %v3091
        %v3116 = vsel %vm3031, %v3115, %v3091
        %v3117 = vsel %vm3030, %v2610, %v3114
        %v3118 = vsel %vm3030, 0, %v3116
        %v3119 = vcosq.f32.pop %v3117
        %v3120 = vsinq.f32.pop %v3117
        %vm3121 = vweird.f32 %v2610
        %v3122 = vadd.s32 %v3118, 3
        %v3123 = vand.u32 %v3122, 3
        %vm3124 = vcmp.lt.s32.totalorder %v3123, 2
        %vm3125 = vcmp.eq.s32.totalorder %v3123, 0
        %v3126 = vxor.u32 %v3120, 2147483648
        %v3127 = vsel %vm3125, %v3119, %v3126
        %vm3128 = vcmp.eq.s32.totalorder %v3123, 2
        %v3129 = vxor.u32 %v3119, 2147483648
        %v3130 = vsel %vm3128, %v3129, %v3120
        %v3131 = vsel %vm3124, %v3127, %v3130
        %v3132 = vsel %vm3121, nan, %v3131
        %v3133 = vand.u32 2147483647, %v2611
        %vm3134 = vcmp.le.f32.partialorder %v3133, 0.7853982
        %vm3135 = vcmp.lt.s32.totalorder %v2611, 0
        %v3136 = vand.u32 %v2611, 2139095040
        %v3137 = vshrl.u32 %v3136, 23
        %v3138 = vsub.s32 %v3137, 127
        %v3139 = vand.u32 2147483647, %v2611
        %v3140 = vand.u32 %v3139, 8388607
        %v3141 = vor.u32 %v3140, 8388608
        %v3142 = vsub.s32 0, %v3141
        %v3143 = vadd.s32 %v3138, 1
        %vm3144 = vcmp.gt.s32.totalorder %v3143, 0
        %v3145 = vsel %vm3144, %v3143, 0
        %v3146 = vshrl.u32 %v3145, 5
        %v3147 = vand.u32 %v3145, 31
        %v3148 = vsub.s32 32, %v3147
        %v3149 = vshrl.u32 683565275, %v3148
        %v3150 = vshll.u32 683565275, %v3147
        %v3151 = vshrl.u32 2475754826, %v3148
        %v3152 = vor.u32 %v3150, %v3151
        %v3153 = vshll.u32 2475754826, %v3147
        %v3154 = vshrl.u32 2131351028, %v3148
        %v3155 = vor.u32 %v3153, %v3154
        %v3156 = vshll.u32 2131351028, %v3147
        %v3157 = vshrl.u32 2102212464, %v3148
        %v3158 = vor.u32 %v3156, %v3157
        %v3159 = vshll.u32 2102212464, %v3147
        %v3160 = vshrl.u32 920167782, %v3148
        %v3161 = vor.u32 %v3159, %v3160
        %v3162 = vshll.u32 920167782, %v3147
        %v3163 = vshrl.u32 1326507024, %v3148
        %v3164 = vor.u32 %v3162, %v3163
        %vm3165 = vcmp.lt.s32.totalorder %v3146, 1
        %vm3166 = vcmp.lt.s32.totalorder %v3146, 2
        %vm3167 = vcmp.lt.s32.totalorder %v3146, 3
        %vm3168 = vcmp.lt.s32.totalorder %v3146, 4
        %v3169 = vsel %vm3165, %v3149, %v3152
        %v3170 = vsel %vm3168, %v3158, 2102212464
        %v3171 = vsel %vm3167, %v3155, %v3170
        %v3172 = vsel %vm3166, %v3169, %v3171
        %v3173 = vsel %vm3165, %v3152, %v3155
        %v3174 = vsel %vm3168, %v3161, 920167782
        %v3175 = vsel %vm3167, %v3158, %v3174
        %v3176 = vsel %vm3166, %v3173, %v3175
        %v3177 = vsel %vm3165, %v3155, %v3158
        %v3178 = vsel %vm3168, %v3164, 1326507024
        %v3179 = vsel %vm3167, %v3161, %v3178
        %v3180 = vsel %vm3166, %v3177, %v3179
        %v3181 = vshll.u32 %v3141, 8
        %v3182 = vmul.u32.u64.compose %v3181, %v3180
        %v3183 = vextract.low.u32 %v3182
        %v3184 = vextract.high.u32 %v3182
        %v3185 = vmul.u32.u64.compose %v3181, %v3176
        %v3186 = vextract.low.u32 %v3185
        %v3187 = vextract.high.u32 %v3185
        %v3188 = vmul.u32 %v3181, %v3172
        %v3189 = vadd.s32 %v3184, %v3186
        %vm3190 = vc.u32 %v3184, %v3186
        %v3191 = vadd.s32 %v3187, 1
        %v3192 = vsel %vm3190, %v3191, %v3187
        %v3193 = vadd.s32 %v3188, %v3192
        %v3194 = vadd.s32 %v3193, 536870912
        %v3195 = vshrl.u32 %v3194, 30
        %v3196 = vshll.u32 %v3195, 30
        %v3197 = vsub.s32 %v3193, %v3196
        %vm3198 = vcmp.lt.s32.totalorder %v3197, 0
        %v3199 = vsub.s32 0, %v3197
        %v3200 = vsel %vm3198, %v3199, %v3197
        %v3201 = vclz %v3200
        %v3202 = vsub.s32 %v3201, 2
        %vm3203 = vcmp.gt.s32.totalorder 0, %v3202
        %v3204 = vsel %vm3203, 0, %v3202
        %v3205 = vsub.s32 32, %v3204
        %v3206 = vshll.u32 %v3197, %v3204
        %v3207 = vshrl.u32 %v3189, %v3205
        %v3208 = vor.u32 %v3206, %v3207
        %v3209 = vsub.s32 4294967266, %v3204
        %v3210 = vadd.s32 %v3209, 127
        %v3211 = vshll.u32 %v3210, 23
        %v3212 = vor.u32 4788187, %v3211
        %v3213 = vand.u32 2147483647, %v3212
        %v3215 = vcvt.s32.f32 %v3208
        %v3216 = vmul.f32 %v3215, %v3213
        %v3217 = vxor.u32 %v3216, 2147483648
        %v3218 = vsel %vm3135, %v3217, %v3216
        %v3219 = vsub.s32 4, %v3195
        %v3220 = vsel %vm3135, %v3219, %v3195
        %v3221 = vsel %vm3134, %v2611, %v3218
        %v3222 = vsel %vm3134, 0, %v3220
        %v3223 = vcosq.f32.pop %v3221
        %v3224 = vsinq.f32.pop %v3221
        %vm3225 = vweird.f32 %v2611
        %v3226 = vadd.s32 %v3222, 3
        %v3227 = vand.u32 %v3226, 3
        %vm3228 = vcmp.lt.s32.totalorder %v3227, 2
        %vm3229 = vcmp.eq.s32.totalorder %v3227, 0
        %v3230 = vxor.u32 %v3224, 2147483648
        %v3231 = vsel %vm3229, %v3223, %v3230
        %vm3232 = vcmp.eq.s32.totalorder %v3227, 2
        %v3233 = vxor.u32 %v3223, 2147483648
        %v3234 = vsel %vm3232, %v3233, %v3224
        %v3235 = vsel %vm3228, %v3231, %v3234
        %v3236 = vsel %vm3225, nan, %v3235
        %v3237 = vand.u32 2147483647, %v2612
        %vm3238 = vcmp.le.f32.partialorder %v3237, 0.7853982
        %vm3239 = vcmp.lt.s32.totalorder %v2612, 0
        %v3240 = vand.u32 %v2612, 2139095040
        %v3241 = vshrl.u32 %v3240, 23
        %v3242 = vsub.s32 %v3241, 127
        %v3243 = vand.u32 2147483647, %v2612
        %v3244 = vand.u32 %v3243, 8388607
        %v3245 = vor.u32 %v3244, 8388608
        %v3246 = vsub.s32 0, %v3245
        %v3247 = vadd.s32 %v3242, 1
        %vm3248 = vcmp.gt.s32.totalorder %v3247, 0
        %v3249 = vsel %vm3248, %v3247, 0
        %v3250 = vshrl.u32 %v3249, 5
        %v3251 = vand.u32 %v3249, 31
        %v3252 = vsub.s32 32, %v3251
        %v3253 = vshrl.u32 683565275, %v3252
        %v3254 = vshll.u32 683565275, %v3251
        %v3255 = vshrl.u32 2475754826, %v3252
        %v3256 = vor.u32 %v3254, %v3255
        %v3257 = vshll.u32 2475754826, %v3251
        %v3258 = vshrl.u32 2131351028, %v3252
        %v3259 = vor.u32 %v3257, %v3258
        %v3260 = vshll.u32 2131351028, %v3251
        %v3261 = vshrl.u32 2102212464, %v3252
        %v3262 = vor.u32 %v3260, %v3261
        %v3263 = vshll.u32 2102212464, %v3251
        %v3264 = vshrl.u32 920167782, %v3252
        %v3265 = vor.u32 %v3263, %v3264
        %v3266 = vshll.u32 920167782, %v3251
        %v3267 = vshrl.u32 1326507024, %v3252
        %v3268 = vor.u32 %v3266, %v3267
        %vm3269 = vcmp.lt.s32.totalorder %v3250, 1
        %vm3270 = vcmp.lt.s32.totalorder %v3250, 2
        %vm3271 = vcmp.lt.s32.totalorder %v3250, 3
        %vm3272 = vcmp.lt.s32.totalorder %v3250, 4
        %v3273 = vsel %vm3269, %v3253, %v3256
        %v3274 = vsel %vm3272, %v3262, 2102212464
        %v3275 = vsel %vm3271, %v3259, %v3274
        %v3276 = vsel %vm3270, %v3273, %v3275
        %v3277 = vsel %vm3269, %v3256, %v3259
        %v3278 = vsel %vm3272, %v3265, 920167782
        %v3279 = vsel %vm3271, %v3262, %v3278
        %v3280 = vsel %vm3270, %v3277, %v3279
        %v3281 = vsel %vm3269, %v3259, %v3262
        %v3282 = vsel %vm3272, %v3268, 1326507024
        %v3283 = vsel %vm3271, %v3265, %v3282
        %v3284 = vsel %vm3270, %v3281, %v3283
        %v3285 = vshll.u32 %v3245, 8
        %v3286 = vmul.u32.u64.compose %v3285, %v3284
        %v3287 = vextract.low.u32 %v3286
        %v3288 = vextract.high.u32 %v3286
        %v3289 = vmul.u32.u64.compose %v3285, %v3280
        %v3290 = vextract.low.u32 %v3289
        %v3291 = vextract.high.u32 %v3289
        %v3292 = vmul.u32 %v3285, %v3276
        %v3293 = vadd.s32 %v3288, %v3290
        %vm3294 = vc.u32 %v3288, %v3290
        %v3295 = vadd.s32 %v3291, 1
        %v3296 = vsel %vm3294, %v3295, %v3291
        %v3297 = vadd.s32 %v3292, %v3296
        %v3298 = vadd.s32 %v3297, 536870912
        %v3299 = vshrl.u32 %v3298, 30
        %v3300 = vshll.u32 %v3299, 30
        %v3301 = vsub.s32 %v3297, %v3300
        %vm3302 = vcmp.lt.s32.totalorder %v3301, 0
        %v3303 = vsub.s32 0, %v3301
        %v3304 = vsel %vm3302, %v3303, %v3301
        %v3305 = vclz %v3304
        %v3306 = vsub.s32 %v3305, 2
        %vm3307 = vcmp.gt.s32.totalorder 0, %v3306
        %v3308 = vsel %vm3307, 0, %v3306
        %v3309 = vsub.s32 32, %v3308
        %v3310 = vshll.u32 %v3301, %v3308
        %v3311 = vshrl.u32 %v3293, %v3309
        %v3312 = vor.u32 %v3310, %v3311
        %v3313 = vsub.s32 4294967266, %v3308
        %v3314 = vadd.s32 %v3313, 127
        %v3315 = vshll.u32 %v3314, 23
        %v3316 = vor.u32 4788187, %v3315
        %v3317 = vand.u32 2147483647, %v3316
        %v3319 = vcvt.s32.f32 %v3312
        %v3320 = vmul.f32 %v3319, %v3317
        %v3321 = vxor.u32 %v3320, 2147483648
        %v3322 = vsel %vm3239, %v3321, %v3320
        %v3323 = vsub.s32 4, %v3299
        %v3324 = vsel %vm3239, %v3323, %v3299
        %v3325 = vsel %vm3238, %v2612, %v3322
        %v3326 = vsel %vm3238, 0, %v3324
        %v3327 = vcosq.f32.pop %v3325
        %v3328 = vsinq.f32.pop %v3325
        %vm3329 = vweird.f32 %v2612
        %v3330 = vadd.s32 %v3326, 3
        %v3331 = vand.u32 %v3330, 3
        %vm3332 = vcmp.lt.s32.totalorder %v3331, 2
        %vm3333 = vcmp.eq.s32.totalorder %v3331, 0
        %v3334 = vxor.u32 %v3328, 2147483648
        %v3335 = vsel %vm3333, %v3327, %v3334
        %vm3336 = vcmp.eq.s32.totalorder %v3331, 2
        %v3337 = vxor.u32 %v3327, 2147483648
        %v3338 = vsel %vm3336, %v3337, %v3328
        %v3339 = vsel %vm3332, %v3335, %v3338
        %v3340 = vsel %vm3329, nan, %v3339
        %v3341 = vmul.f32 %v2716, %v2716
        %v3342 = vmul.f32 %v2820, %v2820
        %v3343 = vmul.f32 %v2924, %v2924
        %v3344 = vmul.f32 %v3028, %v3028
        %v3345 = vmul.f32 %v3132, %v3132
        %v3346 = vmul.f32 %v3236, %v3236
        %v3347 = vmul.f32 %v3340, %v3340
        %v3349 = vlaneseq
        %v3350 = vshrl.u32 %v3349, 7
        %v3351 = vsub.s32 0, %v3350
        %v3352 = vrot.slane %v2599, %v3351
        %v3354 = vmul.f32 %v3352, %v3341
        %v3355 = vmul.f32 %v3352, %v3342
        %v3356 = vmul.f32 %v3352, %v3343
        %v3357 = vmul.f32 %v3352, %v3344
        %v3358 = vmul.f32 %v3352, %v3345
        %v3359 = vmul.f32 %v3352, %v3346
        %v3360 = vmul.f32 %v3352, %v3347
        %v3361 = vadd.f32 %v2589, %v3354
        %v3362 = vadd.f32 %v2590, %v3355
        %v3363 = vadd.f32 %v2591, %v3356
        %v3364 = vadd.f32 %v2592, %v3357
        %v3365 = vadd.f32 %v2593, %v3358
        %v3366 = vadd.f32 %v2594, %v3359
        %v3367 = vadd.f32 %v2595, %v3360
        %s3368 = scalar_lea.vmem [#allocation7], 1
        %v3369 = vld [vmem:[%s3368] sm:$0x1]
        %vm3377 = vcmask 1044480
        %v3378 = vrot.slane %v3361, 3
        %v3379 = vrot.slane %v3362, 3
        %v3380 = vsel %vm3377, %v3378, %v3379
        %v3381 = vrot.slane %v3363, 3
        %v3382 = vsel %vm3377, %v3379, %v3381
        %v3383 = vrot.slane %v3364, 3
        %v3384 = vsel %vm3377, %v3381, %v3383
        %v3385 = vrot.slane %v3365, 3
        %v3386 = vsel %vm3377, %v3383, %v3385
        %v3387 = vrot.slane %v3366, 3
        %v3388 = vsel %vm3377, %v3385, %v3387
        %v3389 = vrot.slane %v3367, 3
        %v3390 = vsel %vm3377, %v3387, %v3389
        %3391 = vrot.lane.b32.xlu0 %v3380, 64
        %v3392 = vpop.permute.xlu0 %3391
        %3393 = vrot.lane.b32.xlu0 %v3382, 64
        %v3394 = vpop.permute.xlu0 %3393
        %3395 = vrot.lane.b32.xlu0 %v3384, 64
        %v3396 = vpop.permute.xlu0 %3395
        %3397 = vrot.lane.b32.xlu0 %v3386, 64
        %v3398 = vpop.permute.xlu0 %3397
        %3399 = vrot.lane.b32.xlu0 %v3388, 64
        %v3400 = vpop.permute.xlu0 %3399
        %3401 = vrot.lane.b32.xlu0 %v3390, 64
        %v3402 = vpop.permute.xlu0 %3401
        %vm3409 = vcmask 1041408
        %v3410 = vrot.slane %v3361, 6
        %v3411 = vrot.slane %v3362, 6
        %v3412 = vsel %vm3409, %v3410, %v3411
        %v3413 = vrot.slane %v3363, 6
        %v3414 = vsel %vm3409, %v3411, %v3413
        %v3415 = vrot.slane %v3364, 6
        %v3416 = vsel %vm3409, %v3413, %v3415
        %v3417 = vrot.slane %v3365, 6
        %v3418 = vsel %vm3409, %v3415, %v3417
        %v3419 = vrot.slane %v3366, 6
        %v3420 = vsel %vm3409, %v3417, %v3419
        %v3421 = vrot.slane %v3367, 6
        %v3422 = vsel %vm3409, %v3419, %v3421
        %v3423 = vsel %vm1373, %v3361, %v3392
        %v3424 = vsel %vm1373, %v3362, %v3394
        %v3425 = vsel %vm1373, %v3363, %v3396
        %v3426 = vsel %vm1373, %v3364, %v3398
        %v3427 = vsel %vm1373, %v3365, %v3400
        %v3428 = vsel %vm1373, %v3366, %v3402
        %s3429 = scalar_lea.vmem [#allocation5], 192
        %v3430 = vld [vmem:[%s3429] sm:$0xff]
        %v3431 = vld [vmem:[%s3429 + $0x8] sm:$0xff]
        %v3432 = vld [vmem:[%s3429 + $0x10] sm:$0xff]
        %v3433 = vld [vmem:[%s3429 + $0x18] sm:$0xff]
        %v3434 = vld [vmem:[%s3429 + $0x20] sm:$0xff]
        %v3435 = vld [vmem:[%s3429 + $0x28] sm:$0xff]
        %v3436 = vld [vmem:[%s3429 + $0x30] sm:$0xff]
        %v3437 = vld [vmem:[%s3429 + $0x38] sm:$0xff]
        %v3438 = vld [vmem:[%s3429 + $0x40] sm:$0xff]
        %v3439 = vld [vmem:[%s3429 + $0x48] sm:$0xff]
        %v3440 = vld [vmem:[%s3429 + $0x50] sm:$0xff]
        %v3441 = vld [vmem:[%s3429 + $0x58] sm:$0xff]
        %v3442 = vld [vmem:[%s3429 + $0x60] sm:$0xff]
        %v3443 = vld [vmem:[%s3429 + $0x68] sm:$0xff]
        %v3444 = vld [vmem:[%s3429 + $0x70] sm:$0xff]
        %v3445 = vld [vmem:[%s3429 + $0x78] sm:$0xff]
        %v3446 = vld [vmem:[%s3429 + $0x80] sm:$0xff]
        %v3447 = vld [vmem:[%s3429 + $0x88] sm:$0xff]
        %v3448 = vld [vmem:[%s3429 + $0x90] sm:$0xff]
        %v3449 = vld [vmem:[%s3429 + $0x98] sm:$0xff]
        %v3450 = vld [vmem:[%s3429 + $0xa0] sm:$0xff]
        %v3451 = vld [vmem:[%s3429 + $0xa8] sm:$0xff]
        %v3452 = vld [vmem:[%s3429 + $0xb0] sm:$0xff]
        %v3453 = vld [vmem:[%s3429 + $0xb8] sm:$0xff]
        %v3455 = vlaneseq
        %v3456 = vshrl.u32 %v3455, 7
        %v3457 = vsub.s32 0, %v3456
        %v3458 = vrot.slane %v3369, %v3457
        %v3460 = vsel %vm1373, %v3412, 0
        %v3462 = vsel %vm1373, %v3414, 0
        %v3464 = vsel %vm1373, %v3416, 0
        %v3466 = vsel %vm1373, %v3418, 0
        %v3468 = vsel %vm1373, %v3420, 0
        %v3470 = vsel %vm1373, %v3422, 0
        %3472 = vmatprep.subr.mxu0 0.0
        %3473 = vmatpush1.msra.mxu0 %v3430
        %3474 = vmatprep.subr.mxu0 0.0
        %3475 = vmatpush1.msra.mxu0 %v3431
        %3476 = vmatprep.subr.mxu0 0.0
        %3477 = vmatpush1.msra.mxu0 %v3432
        %3478 = vmatprep.subr.mxu0 0.0
        %3479 = vmatpush1.msra.mxu0 %v3433
        %3480 = vmatprep.subr.mxu0 0.0
        %3481 = vmatpush1.msra.mxu0 %v3434
        %3482 = vmatprep.subr.mxu0 0.0
        %3483 = vmatpush1.msra.mxu0 %v3435
        %3484 = vmatprep.subr.mxu0 0.0
        %3485 = vmatpush1.msra.mxu0 %v3436
        %3486 = vmatprep.subr.mxu0 0.0
        %3487 = vmatpush1.msra.mxu0 %v3437
        %3488 = vmatprep.subr.mxu0 0.0
        %3489 = vmatpush1.msra.mxu0 %v3438
        %3490 = vmatprep.subr.mxu0 0.0
        %3491 = vmatpush1.msra.mxu0 %v3439
        %3492 = vmatprep.subr.mxu0 0.0
        %3493 = vmatpush1.msra.mxu0 %v3440
        %3494 = vmatprep.subr.mxu0 0.0
        %3495 = vmatpush1.msra.mxu0 %v3441
        %3496 = vmatprep.subr.mxu0 0.0
        %3497 = vmatpush1.msra.mxu0 %v3442
        %3498 = vmatprep.subr.mxu0 0.0
        %3499 = vmatpush1.msra.mxu0 %v3443
        %3500 = vmatprep.subr.mxu0 0.0
        %3501 = vmatpush1.msra.mxu0 %v3444
        %3502 = vmatprep.subr.mxu0 0.0
        %3503 = vmatpush1.msra.mxu0 %v3445
        %3504 = vmatprep.subr.mxu0 0.0
        %3505 = vmatpush1.msra.mxu0 %v3446
        %3506 = vmatprep.subr.mxu0 0.0
        %3507 = vmatpush1.msra.mxu0 %v3447
        %3508 = vmatprep.subr.mxu0 0.0
        %3509 = vmatpush1.msra.mxu0 %v3448
        %3510 = vmatprep.subr.mxu0 0.0
        %3511 = vmatpush1.msra.mxu0 %v3449
        %3512 = vmatprep.subr.mxu0 0.0
        %3513 = vmatpush1.msra.mxu0 %v3450
        %3514 = vmatprep.subr.mxu0 0.0
        %3515 = vmatpush1.msra.mxu0 %v3451
        %3516 = vmatprep.subr.mxu0 0.0
        %3517 = vmatpush1.msra.mxu0 %v3452
        %3518 = vmatprep.subr.mxu0 0.0
        %3519 = vmatpush1.msra.mxu0 %v3453
        %3520 = vmatprep.subr.mxu0 0.0
        %3521 = vmatpush1.msra.mxu0 0.0
        %3522 = vmatprep.subr.mxu0 0.0
        %3523 = vmatpush1.msra.mxu0 0.0
        %3524 = vmatprep.subr.mxu0 0.0
        %3525 = vmatpush1.msra.mxu0 0.0
        %3526 = vmatprep.subr.mxu0 0.0
        %3527 = vmatpush1.msra.mxu0 0.0
        %3528 = vmatprep.subr.mxu0 0.0
        %3529 = vmatpush1.msra.mxu0 0.0
        %3530 = vmatprep.subr.mxu0 0.0
        %3531 = vmatpush1.msra.mxu0 0.0
        %3532 = vmatprep.subr.mxu0 0.0
        %3533 = vmatpush1.msra.mxu0 0.0
        %3534 = vmatprep.subr.mxu0 0.0
        %3535 = vmatpush1.msra.mxu0 0.0
        %3536 = vmatprep.mubr.f32.mxu0 %v3460
        %3537 = vmatmul.mubr.f32.gmra.mrb[0].mxu0 %v3423
        %v3538 = vpop.f32.mrb[0].mxu0
        %v3539 = vadd.f32 %v3458, %v3538
        %v3540 = vpop.f32.mrb[0].mxu0
        %3541 = vmatprep.mubr.f32.mxu0 %v3462
        %3542 = vmatmul.mubr.f32.gmra.mrb[0].mxu0 %v3424
        %v3543 = vpop.f32.mrb[0].mxu0
        %v3544 = vadd.f32 %v3458, %v3543
        %v3545 = vpop.f32.mrb[0].mxu0
        %3546 = vmatprep.mubr.f32.mxu0 %v3464
        %3547 = vmatmul.mubr.f32.gmra.mrb[0].mxu0 %v3425
        %v3548 = vpop.f32.mrb[0].mxu0
        %v3549 = vadd.f32 %v3458, %v3548
        %v3550 = vpop.f32.mrb[0].mxu0
        %3551 = vmatprep.mubr.f32.mxu0 %v3466
        %3552 = vmatmul.mubr.f32.gmra.mrb[0].mxu0 %v3426
        %v3553 = vpop.f32.mrb[0].mxu0
        %v3554 = vadd.f32 %v3458, %v3553
        %v3555 = vpop.f32.mrb[0].mxu0
        %3556 = vmatprep.mubr.f32.mxu0 %v3468
        %3557 = vmatmul.mubr.f32.gmra.mrb[0].mxu0 %v3427
        %v3558 = vpop.f32.mrb[0].mxu0
        %v3559 = vadd.f32 %v3458, %v3558
        %v3560 = vpop.f32.mrb[0].mxu0
        %3561 = vmatprep.mubr.f32.mxu0 %v3470
        %3562 = vmatmul.mubr.f32.gmra.mrb[0].mxu0 %v3428
        %v3563 = vpop.f32.mrb[0].mxu0
        %v3564 = vadd.f32 %v3458, %v3563
        %v3565 = vpop.f32.mrb[0].mxu0
        %3566 = vdwg.mxu0
        %vm3567 = vcmask 1042432
        %v3568 = vrot.slane %v539, 5
        %v3569 = vrot.slane %v540, 5
        %v3570 = vsel %vm3567, %v3568, %v3569
        %v3571 = vrot.slane %v541, 5
        %v3572 = vsel %vm3567, %v3569, %v3571
        %v3573 = vrot.slane %v542, 5
        %v3574 = vsel %vm3567, %v3571, %v3573
        %v3575 = vrot.slane %v543, 5
        %v3576 = vsel %vm3567, %v3573, %v3575
        %v3577 = vrot.slane %v544, 5
        %v3578 = vsel %vm3567, %v3575, %v3577
        %v3579 = vrot.slane %v545, 5
        %v3580 = vsel %vm3567, %v3577, %v3579
        %v3587 = vmul.f32 %v3539, %v3570
        %v3588 = vmul.f32 %v3544, %v3572
        %v3589 = vmul.f32 %v3549, %v3574
        %v3590 = vmul.f32 %v3554, %v3576
        %v3591 = vmul.f32 %v3559, %v3578
        %v3592 = vmul.f32 %v3564, %v3580
        %s3593 = scalar_lea.vmem [#allocation14], 1
        %v3594 = vld [vmem:[%s3593] sm:$0x1]
        %s3595 = scalar_lea.vmem [#allocation16], 1
        %v3596 = vld [vmem:[%s3595] sm:$0x1]
        %v3598 = vlaneseq
        %v3599 = vshrl.u32 %v3598, 7
        %v3600 = vsub.s32 0, %v3599
        %v3601 = vrot.slane %v3594, %v3600
        %v3603 = vmul.f32 %v3587, %v3601
        %v3604 = vmul.f32 %v3588, %v3601
        %v3605 = vmul.f32 %v3589, %v3601
        %v3606 = vmul.f32 %v3590, %v3601
        %v3607 = vmul.f32 %v3591, %v3601
        %v3608 = vmul.f32 %v3592, %v3601
        %v3609 = vand.u32 2147483647, %v3603
        %vm3610 = vcmp.le.f32.partialorder %v3609, 0.7853982
        %vm3611 = vcmp.lt.s32.totalorder %v3603, 0
        %v3612 = vand.u32 %v3603, 2139095040
        %v3613 = vshrl.u32 %v3612, 23
        %v3614 = vsub.s32 %v3613, 127
        %v3615 = vand.u32 2147483647, %v3603
        %v3616 = vand.u32 %v3615, 8388607
        %v3617 = vor.u32 %v3616, 8388608
        %v3618 = vsub.s32 0, %v3617
        %v3619 = vadd.s32 %v3614, 1
        %vm3620 = vcmp.gt.s32.totalorder %v3619, 0
        %v3621 = vsel %vm3620, %v3619, 0
        %v3622 = vshrl.u32 %v3621, 5
        %v3623 = vand.u32 %v3621, 31
        %v3624 = vsub.s32 32, %v3623
        %v3625 = vshrl.u32 683565275, %v3624
        %v3626 = vshll.u32 683565275, %v3623
        %v3627 = vshrl.u32 2475754826, %v3624
        %v3628 = vor.u32 %v3626, %v3627
        %v3629 = vshll.u32 2475754826, %v3623
        %v3630 = vshrl.u32 2131351028, %v3624
        %v3631 = vor.u32 %v3629, %v3630
        %v3632 = vshll.u32 2131351028, %v3623
        %v3633 = vshrl.u32 2102212464, %v3624
        %v3634 = vor.u32 %v3632, %v3633
        %v3635 = vshll.u32 2102212464, %v3623
        %v3636 = vshrl.u32 920167782, %v3624
        %v3637 = vor.u32 %v3635, %v3636
        %v3638 = vshll.u32 920167782, %v3623
        %v3639 = vshrl.u32 1326507024, %v3624
        %v3640 = vor.u32 %v3638, %v3639
        %vm3641 = vcmp.lt.s32.totalorder %v3622, 1
        %vm3642 = vcmp.lt.s32.totalorder %v3622, 2
        %vm3643 = vcmp.lt.s32.totalorder %v3622, 3
        %vm3644 = vcmp.lt.s32.totalorder %v3622, 4
        %v3645 = vsel %vm3641, %v3625, %v3628
        %v3646 = vsel %vm3644, %v3634, 2102212464
        %v3647 = vsel %vm3643, %v3631, %v3646
        %v3648 = vsel %vm3642, %v3645, %v3647
        %v3649 = vsel %vm3641, %v3628, %v3631
        %v3650 = vsel %vm3644, %v3637, 920167782
        %v3651 = vsel %vm3643, %v3634, %v3650
        %v3652 = vsel %vm3642, %v3649, %v3651
        %v3653 = vsel %vm3641, %v3631, %v3634
        %v3654 = vsel %vm3644, %v3640, 1326507024
        %v3655 = vsel %vm3643, %v3637, %v3654
        %v3656 = vsel %vm3642, %v3653, %v3655
        %v3657 = vshll.u32 %v3617, 8
        %v3658 = vmul.u32.u64.compose %v3657, %v3656
        %v3659 = vextract.low.u32 %v3658
        %v3660 = vextract.high.u32 %v3658
        %v3661 = vmul.u32.u64.compose %v3657, %v3652
        %v3662 = vextract.low.u32 %v3661
        %v3663 = vextract.high.u32 %v3661
        %v3664 = vmul.u32 %v3657, %v3648
        %v3665 = vadd.s32 %v3660, %v3662
        %vm3666 = vc.u32 %v3660, %v3662
        %v3667 = vadd.s32 %v3663, 1
        %v3668 = vsel %vm3666, %v3667, %v3663
        %v3669 = vadd.s32 %v3664, %v3668
        %v3670 = vadd.s32 %v3669, 536870912
        %v3671 = vshrl.u32 %v3670, 30
        %v3672 = vshll.u32 %v3671, 30
        %v3673 = vsub.s32 %v3669, %v3672
        %vm3674 = vcmp.lt.s32.totalorder %v3673, 0
        %v3675 = vsub.s32 0, %v3673
        %v3676 = vsel %vm3674, %v3675, %v3673
        %v3677 = vclz %v3676
        %v3678 = vsub.s32 %v3677, 2
        %vm3679 = vcmp.gt.s32.totalorder 0, %v3678
        %v3680 = vsel %vm3679, 0, %v3678
        %v3681 = vsub.s32 32, %v3680
        %v3682 = vshll.u32 %v3673, %v3680
        %v3683 = vshrl.u32 %v3665, %v3681
        %v3684 = vor.u32 %v3682, %v3683
        %v3685 = vsub.s32 4294967266, %v3680
        %v3686 = vadd.s32 %v3685, 127
        %v3687 = vshll.u32 %v3686, 23
        %v3688 = vor.u32 4788187, %v3687
        %v3689 = vand.u32 2147483647, %v3688
        %v3691 = vcvt.s32.f32 %v3684
        %v3692 = vmul.f32 %v3691, %v3689
        %v3693 = vxor.u32 %v3692, 2147483648
        %v3694 = vsel %vm3611, %v3693, %v3692
        %v3695 = vsub.s32 4, %v3671
        %v3696 = vsel %vm3611, %v3695, %v3671
        %v3697 = vsel %vm3610, %v3603, %v3694
        %v3698 = vsel %vm3610, 0, %v3696
        %v3699 = vcosq.f32.pop %v3697
        %v3700 = vsinq.f32.pop %v3697
        %vm3701 = vweird.f32 %v3603
        %v3702 = vadd.s32 %v3698, 3
        %v3703 = vand.u32 %v3702, 3
        %vm3704 = vcmp.lt.s32.totalorder %v3703, 2
        %vm3705 = vcmp.eq.s32.totalorder %v3703, 0
        %v3706 = vxor.u32 %v3700, 2147483648
        %v3707 = vsel %vm3705, %v3699, %v3706
        %vm3708 = vcmp.eq.s32.totalorder %v3703, 2
        %v3709 = vxor.u32 %v3699, 2147483648
        %v3710 = vsel %vm3708, %v3709, %v3700
        %v3711 = vsel %vm3704, %v3707, %v3710
        %v3712 = vsel %vm3701, nan, %v3711
        %v3713 = vand.u32 2147483647, %v3604
        %vm3714 = vcmp.le.f32.partialorder %v3713, 0.7853982
        %vm3715 = vcmp.lt.s32.totalorder %v3604, 0
        %v3716 = vand.u32 %v3604, 2139095040
        %v3717 = vshrl.u32 %v3716, 23
        %v3718 = vsub.s32 %v3717, 127
        %v3719 = vand.u32 2147483647, %v3604
        %v3720 = vand.u32 %v3719, 8388607
        %v3721 = vor.u32 %v3720, 8388608
        %v3722 = vsub.s32 0, %v3721
        %v3723 = vadd.s32 %v3718, 1
        %vm3724 = vcmp.gt.s32.totalorder %v3723, 0
        %v3725 = vsel %vm3724, %v3723, 0
        %v3726 = vshrl.u32 %v3725, 5
        %v3727 = vand.u32 %v3725, 31
        %v3728 = vsub.s32 32, %v3727
        %v3729 = vshrl.u32 683565275, %v3728
        %v3730 = vshll.u32 683565275, %v3727
        %v3731 = vshrl.u32 2475754826, %v3728
        %v3732 = vor.u32 %v3730, %v3731
        %v3733 = vshll.u32 2475754826, %v3727
        %v3734 = vshrl.u32 2131351028, %v3728
        %v3735 = vor.u32 %v3733, %v3734
        %v3736 = vshll.u32 2131351028, %v3727
        %v3737 = vshrl.u32 2102212464, %v3728
        %v3738 = vor.u32 %v3736, %v3737
        %v3739 = vshll.u32 2102212464, %v3727
        %v3740 = vshrl.u32 920167782, %v3728
        %v3741 = vor.u32 %v3739, %v3740
        %v3742 = vshll.u32 920167782, %v3727
        %v3743 = vshrl.u32 1326507024, %v3728
        %v3744 = vor.u32 %v3742, %v3743
        %vm3745 = vcmp.lt.s32.totalorder %v3726, 1
        %vm3746 = vcmp.lt.s32.totalorder %v3726, 2
        %vm3747 = vcmp.lt.s32.totalorder %v3726, 3
        %vm3748 = vcmp.lt.s32.totalorder %v3726, 4
        %v3749 = vsel %vm3745, %v3729, %v3732
        %v3750 = vsel %vm3748, %v3738, 2102212464
        %v3751 = vsel %vm3747, %v3735, %v3750
        %v3752 = vsel %vm3746, %v3749, %v3751
        %v3753 = vsel %vm3745, %v3732, %v3735
        %v3754 = vsel %vm3748, %v3741, 920167782
        %v3755 = vsel %vm3747, %v3738, %v3754
        %v3756 = vsel %vm3746, %v3753, %v3755
        %v3757 = vsel %vm3745, %v3735, %v3738
        %v3758 = vsel %vm3748, %v3744, 1326507024
        %v3759 = vsel %vm3747, %v3741, %v3758
        %v3760 = vsel %vm3746, %v3757, %v3759
        %v3761 = vshll.u32 %v3721, 8
        %v3762 = vmul.u32.u64.compose %v3761, %v3760
        %v3763 = vextract.low.u32 %v3762
        %v3764 = vextract.high.u32 %v3762
        %v3765 = vmul.u32.u64.compose %v3761, %v3756
        %v3766 = vextract.low.u32 %v3765
        %v3767 = vextract.high.u32 %v3765
        %v3768 = vmul.u32 %v3761, %v3752
        %v3769 = vadd.s32 %v3764, %v3766
        %vm3770 = vc.u32 %v3764, %v3766
        %v3771 = vadd.s32 %v3767, 1
        %v3772 = vsel %vm3770, %v3771, %v3767
        %v3773 = vadd.s32 %v3768, %v3772
        %v3774 = vadd.s32 %v3773, 536870912
        %v3775 = vshrl.u32 %v3774, 30
        %v3776 = vshll.u32 %v3775, 30
        %v3777 = vsub.s32 %v3773, %v3776
        %vm3778 = vcmp.lt.s32.totalorder %v3777, 0
        %v3779 = vsub.s32 0, %v3777
        %v3780 = vsel %vm3778, %v3779, %v3777
        %v3781 = vclz %v3780
        %v3782 = vsub.s32 %v3781, 2
        %vm3783 = vcmp.gt.s32.totalorder 0, %v3782
        %v3784 = vsel %vm3783, 0, %v3782
        %v3785 = vsub.s32 32, %v3784
        %v3786 = vshll.u32 %v3777, %v3784
        %v3787 = vshrl.u32 %v3769, %v3785
        %v3788 = vor.u32 %v3786, %v3787
        %v3789 = vsub.s32 4294967266, %v3784
        %v3790 = vadd.s32 %v3789, 127
        %v3791 = vshll.u32 %v3790, 23
        %v3792 = vor.u32 4788187, %v3791
        %v3793 = vand.u32 2147483647, %v3792
        %v3795 = vcvt.s32.f32 %v3788
        %v3796 = vmul.f32 %v3795, %v3793
        %v3797 = vxor.u32 %v3796, 2147483648
        %v3798 = vsel %vm3715, %v3797, %v3796
        %v3799 = vsub.s32 4, %v3775
        %v3800 = vsel %vm3715, %v3799, %v3775
        %v3801 = vsel %vm3714, %v3604, %v3798
        %v3802 = vsel %vm3714, 0, %v3800
        %v3803 = vcosq.f32.pop %v3801
        %v3804 = vsinq.f32.pop %v3801
        %vm3805 = vweird.f32 %v3604
        %v3806 = vadd.s32 %v3802, 3
        %v3807 = vand.u32 %v3806, 3
        %vm3808 = vcmp.lt.s32.totalorder %v3807, 2
        %vm3809 = vcmp.eq.s32.totalorder %v3807, 0
        %v3810 = vxor.u32 %v3804, 2147483648
        %v3811 = vsel %vm3809, %v3803, %v3810
        %vm3812 = vcmp.eq.s32.totalorder %v3807, 2
        %v3813 = vxor.u32 %v3803, 2147483648
        %v3814 = vsel %vm3812, %v3813, %v3804
        %v3815 = vsel %vm3808, %v3811, %v3814
        %v3816 = vsel %vm3805, nan, %v3815
        %v3817 = vand.u32 2147483647, %v3605
        %vm3818 = vcmp.le.f32.partialorder %v3817, 0.7853982
        %vm3819 = vcmp.lt.s32.totalorder %v3605, 0
        %v3820 = vand.u32 %v3605, 2139095040
        %v3821 = vshrl.u32 %v3820, 23
        %v3822 = vsub.s32 %v3821, 127
        %v3823 = vand.u32 2147483647, %v3605
        %v3824 = vand.u32 %v3823, 8388607
        %v3825 = vor.u32 %v3824, 8388608
        %v3826 = vsub.s32 0, %v3825
        %v3827 = vadd.s32 %v3822, 1
        %vm3828 = vcmp.gt.s32.totalorder %v3827, 0
        %v3829 = vsel %vm3828, %v3827, 0
        %v3830 = vshrl.u32 %v3829, 5
        %v3831 = vand.u32 %v3829, 31
        %v3832 = vsub.s32 32, %v3831
        %v3833 = vshrl.u32 683565275, %v3832
        %v3834 = vshll.u32 683565275, %v3831
        %v3835 = vshrl.u32 2475754826, %v3832
        %v3836 = vor.u32 %v3834, %v3835
        %v3837 = vshll.u32 2475754826, %v3831
        %v3838 = vshrl.u32 2131351028, %v3832
        %v3839 = vor.u32 %v3837, %v3838
        %v3840 = vshll.u32 2131351028, %v3831
        %v3841 = vshrl.u32 2102212464, %v3832
        %v3842 = vor.u32 %v3840, %v3841
        %v3843 = vshll.u32 2102212464, %v3831
        %v3844 = vshrl.u32 920167782, %v3832
        %v3845 = vor.u32 %v3843, %v3844
        %v3846 = vshll.u32 920167782, %v3831
        %v3847 = vshrl.u32 1326507024, %v3832
        %v3848 = vor.u32 %v3846, %v3847
        %vm3849 = vcmp.lt.s32.totalorder %v3830, 1
        %vm3850 = vcmp.lt.s32.totalorder %v3830, 2
        %vm3851 = vcmp.lt.s32.totalorder %v3830, 3
        %vm3852 = vcmp.lt.s32.totalorder %v3830, 4
        %v3853 = vsel %vm3849, %v3833, %v3836
        %v3854 = vsel %vm3852, %v3842, 2102212464
        %v3855 = vsel %vm3851, %v3839, %v3854
        %v3856 = vsel %vm3850, %v3853, %v3855
        %v3857 = vsel %vm3849, %v3836, %v3839
        %v3858 = vsel %vm3852, %v3845, 920167782
        %v3859 = vsel %vm3851, %v3842, %v3858
        %v3860 = vsel %vm3850, %v3857, %v3859
        %v3861 = vsel %vm3849, %v3839, %v3842
        %v3862 = vsel %vm3852, %v3848, 1326507024
        %v3863 = vsel %vm3851, %v3845, %v3862
        %v3864 = vsel %vm3850, %v3861, %v3863
        %v3865 = vshll.u32 %v3825, 8
        %v3866 = vmul.u32.u64.compose %v3865, %v3864
        %v3867 = vextract.low.u32 %v3866
        %v3868 = vextract.high.u32 %v3866
        %v3869 = vmul.u32.u64.compose %v3865, %v3860
        %v3870 = vextract.low.u32 %v3869
        %v3871 = vextract.high.u32 %v3869
        %v3872 = vmul.u32 %v3865, %v3856
        %v3873 = vadd.s32 %v3868, %v3870
        %vm3874 = vc.u32 %v3868, %v3870
        %v3875 = vadd.s32 %v3871, 1
        %v3876 = vsel %vm3874, %v3875, %v3871
        %v3877 = vadd.s32 %v3872, %v3876
        %v3878 = vadd.s32 %v3877, 536870912
        %v3879 = vshrl.u32 %v3878, 30
        %v3880 = vshll.u32 %v3879, 30
        %v3881 = vsub.s32 %v3877, %v3880
        %vm3882 = vcmp.lt.s32.totalorder %v3881, 0
        %v3883 = vsub.s32 0, %v3881
        %v3884 = vsel %vm3882, %v3883, %v3881
        %v3885 = vclz %v3884
        %v3886 = vsub.s32 %v3885, 2
        %vm3887 = vcmp.gt.s32.totalorder 0, %v3886
        %v3888 = vsel %vm3887, 0, %v3886
        %v3889 = vsub.s32 32, %v3888
        %v3890 = vshll.u32 %v3881, %v3888
        %v3891 = vshrl.u32 %v3873, %v3889
        %v3892 = vor.u32 %v3890, %v3891
        %v3893 = vsub.s32 4294967266, %v3888
        %v3894 = vadd.s32 %v3893, 127
        %v3895 = vshll.u32 %v3894, 23
        %v3896 = vor.u32 4788187, %v3895
        %v3897 = vand.u32 2147483647, %v3896
        %v3899 = vcvt.s32.f32 %v3892
        %v3900 = vmul.f32 %v3899, %v3897
        %v3901 = vxor.u32 %v3900, 2147483648
        %v3902 = vsel %vm3819, %v3901, %v3900
        %v3903 = vsub.s32 4, %v3879
        %v3904 = vsel %vm3819, %v3903, %v3879
        %v3905 = vsel %vm3818, %v3605, %v3902
        %v3906 = vsel %vm3818, 0, %v3904
        %v3907 = vcosq.f32.pop %v3905
        %v3908 = vsinq.f32.pop %v3905
        %vm3909 = vweird.f32 %v3605
        %v3910 = vadd.s32 %v3906, 3
        %v3911 = vand.u32 %v3910, 3
        %vm3912 = vcmp.lt.s32.totalorder %v3911, 2
        %vm3913 = vcmp.eq.s32.totalorder %v3911, 0
        %v3914 = vxor.u32 %v3908, 2147483648
        %v3915 = vsel %vm3913, %v3907, %v3914
        %vm3916 = vcmp.eq.s32.totalorder %v3911, 2
        %v3917 = vxor.u32 %v3907, 2147483648
        %v3918 = vsel %vm3916, %v3917, %v3908
        %v3919 = vsel %vm3912, %v3915, %v3918
        %v3920 = vsel %vm3909, nan, %v3919
        %v3921 = vand.u32 2147483647, %v3606
        %vm3922 = vcmp.le.f32.partialorder %v3921, 0.7853982
        %vm3923 = vcmp.lt.s32.totalorder %v3606, 0
        %v3924 = vand.u32 %v3606, 2139095040
        %v3925 = vshrl.u32 %v3924, 23
        %v3926 = vsub.s32 %v3925, 127
        %v3927 = vand.u32 2147483647, %v3606
        %v3928 = vand.u32 %v3927, 8388607
        %v3929 = vor.u32 %v3928, 8388608
        %v3930 = vsub.s32 0, %v3929
        %v3931 = vadd.s32 %v3926, 1
        %vm3932 = vcmp.gt.s32.totalorder %v3931, 0
        %v3933 = vsel %vm3932, %v3931, 0
        %v3934 = vshrl.u32 %v3933, 5
        %v3935 = vand.u32 %v3933, 31
        %v3936 = vsub.s32 32, %v3935
        %v3937 = vshrl.u32 683565275, %v3936
        %v3938 = vshll.u32 683565275, %v3935
        %v3939 = vshrl.u32 2475754826, %v3936
        %v3940 = vor.u32 %v3938, %v3939
        %v3941 = vshll.u32 2475754826, %v3935
        %v3942 = vshrl.u32 2131351028, %v3936
        %v3943 = vor.u32 %v3941, %v3942
        %v3944 = vshll.u32 2131351028, %v3935
        %v3945 = vshrl.u32 2102212464, %v3936
        %v3946 = vor.u32 %v3944, %v3945
        %v3947 = vshll.u32 2102212464, %v3935
        %v3948 = vshrl.u32 920167782, %v3936
        %v3949 = vor.u32 %v3947, %v3948
        %v3950 = vshll.u32 920167782, %v3935
        %v3951 = vshrl.u32 1326507024, %v3936
        %v3952 = vor.u32 %v3950, %v3951
        %vm3953 = vcmp.lt.s32.totalorder %v3934, 1
        %vm3954 = vcmp.lt.s32.totalorder %v3934, 2
        %vm3955 = vcmp.lt.s32.totalorder %v3934, 3
        %vm3956 = vcmp.lt.s32.totalorder %v3934, 4
        %v3957 = vsel %vm3953, %v3937, %v3940
        %v3958 = vsel %vm3956, %v3946, 2102212464
        %v3959 = vsel %vm3955, %v3943, %v3958
        %v3960 = vsel %vm3954, %v3957, %v3959
        %v3961 = vsel %vm3953, %v3940, %v3943
        %v3962 = vsel %vm3956, %v3949, 920167782
        %v3963 = vsel %vm3955, %v3946, %v3962
        %v3964 = vsel %vm3954, %v3961, %v3963
        %v3965 = vsel %vm3953, %v3943, %v3946
        %v3966 = vsel %vm3956, %v3952, 1326507024
        %v3967 = vsel %vm3955, %v3949, %v3966
        %v3968 = vsel %vm3954, %v3965, %v3967
        %v3969 = vshll.u32 %v3929, 8
        %v3970 = vmul.u32.u64.compose %v3969, %v3968
        %v3971 = vextract.low.u32 %v3970
        %v3972 = vextract.high.u32 %v3970
        %v3973 = vmul.u32.u64.compose %v3969, %v3964
        %v3974 = vextract.low.u32 %v3973
        %v3975 = vextract.high.u32 %v3973
        %v3976 = vmul.u32 %v3969, %v3960
        %v3977 = vadd.s32 %v3972, %v3974
        %vm3978 = vc.u32 %v3972, %v3974
        %v3979 = vadd.s32 %v3975, 1
        %v3980 = vsel %vm3978, %v3979, %v3975
        %v3981 = vadd.s32 %v3976, %v3980
        %v3982 = vadd.s32 %v3981, 536870912
        %v3983 = vshrl.u32 %v3982, 30
        %v3984 = vshll.u32 %v3983, 30
        %v3985 = vsub.s32 %v3981, %v3984
        %vm3986 = vcmp.lt.s32.totalorder %v3985, 0
        %v3987 = vsub.s32 0, %v3985
        %v3988 = vsel %vm3986, %v3987, %v3985
        %v3989 = vclz %v3988
        %v3990 = vsub.s32 %v3989, 2
        %vm3991 = vcmp.gt.s32.totalorder 0, %v3990
        %v3992 = vsel %vm3991, 0, %v3990
        %v3993 = vsub.s32 32, %v3992
        %v3994 = vshll.u32 %v3985, %v3992
        %v3995 = vshrl.u32 %v3977, %v3993
        %v3996 = vor.u32 %v3994, %v3995
        %v3997 = vsub.s32 4294967266, %v3992
        %v3998 = vadd.s32 %v3997, 127
        %v3999 = vshll.u32 %v3998, 23
        %v4000 = vor.u32 4788187, %v3999
        %v4001 = vand.u32 2147483647, %v4000
        %v4003 = vcvt.s32.f32 %v3996
        %v4004 = vmul.f32 %v4003, %v4001
        %v4005 = vxor.u32 %v4004, 2147483648
        %v4006 = vsel %vm3923, %v4005, %v4004
        %v4007 = vsub.s32 4, %v3983
        %v4008 = vsel %vm3923, %v4007, %v3983
        %v4009 = vsel %vm3922, %v3606, %v4006
        %v4010 = vsel %vm3922, 0, %v4008
        %v4011 = vcosq.f32.pop %v4009
        %v4012 = vsinq.f32.pop %v4009
        %vm4013 = vweird.f32 %v3606
        %v4014 = vadd.s32 %v4010, 3
        %v4015 = vand.u32 %v4014, 3
        %vm4016 = vcmp.lt.s32.totalorder %v4015, 2
        %vm4017 = vcmp.eq.s32.totalorder %v4015, 0
        %v4018 = vxor.u32 %v4012, 2147483648
        %v4019 = vsel %vm4017, %v4011, %v4018
        %vm4020 = vcmp.eq.s32.totalorder %v4015, 2
        %v4021 = vxor.u32 %v4011, 2147483648
        %v4022 = vsel %vm4020, %v4021, %v4012
        %v4023 = vsel %vm4016, %v4019, %v4022
        %v4024 = vsel %vm4013, nan, %v4023
        %v4025 = vand.u32 2147483647, %v3607
        %vm4026 = vcmp.le.f32.partialorder %v4025, 0.7853982
        %vm4027 = vcmp.lt.s32.totalorder %v3607, 0
        %v4028 = vand.u32 %v3607, 2139095040
        %v4029 = vshrl.u32 %v4028, 23
        %v4030 = vsub.s32 %v4029, 127
        %v4031 = vand.u32 2147483647, %v3607
        %v4032 = vand.u32 %v4031, 8388607
        %v4033 = vor.u32 %v4032, 8388608
        %v4034 = vsub.s32 0, %v4033
        %v4035 = vadd.s32 %v4030, 1
        %vm4036 = vcmp.gt.s32.totalorder %v4035, 0
        %v4037 = vsel %vm4036, %v4035, 0
        %v4038 = vshrl.u32 %v4037, 5
        %v4039 = vand.u32 %v4037, 31
        %v4040 = vsub.s32 32, %v4039
        %v4041 = vshrl.u32 683565275, %v4040
        %v4042 = vshll.u32 683565275, %v4039
        %v4043 = vshrl.u32 2475754826, %v4040
        %v4044 = vor.u32 %v4042, %v4043
        %v4045 = vshll.u32 2475754826, %v4039
        %v4046 = vshrl.u32 2131351028, %v4040
        %v4047 = vor.u32 %v4045, %v4046
        %v4048 = vshll.u32 2131351028, %v4039
        %v4049 = vshrl.u32 2102212464, %v4040
        %v4050 = vor.u32 %v4048, %v4049
        %v4051 = vshll.u32 2102212464, %v4039
        %v4052 = vshrl.u32 920167782, %v4040
        %v4053 = vor.u32 %v4051, %v4052
        %v4054 = vshll.u32 920167782, %v4039
        %v4055 = vshrl.u32 1326507024, %v4040
        %v4056 = vor.u32 %v4054, %v4055
        %vm4057 = vcmp.lt.s32.totalorder %v4038, 1
        %vm4058 = vcmp.lt.s32.totalorder %v4038, 2
        %vm4059 = vcmp.lt.s32.totalorder %v4038, 3
        %vm4060 = vcmp.lt.s32.totalorder %v4038, 4
        %v4061 = vsel %vm4057, %v4041, %v4044
        %v4062 = vsel %vm4060, %v4050, 2102212464
        %v4063 = vsel %vm4059, %v4047, %v4062
        %v4064 = vsel %vm4058, %v4061, %v4063
        %v4065 = vsel %vm4057, %v4044, %v4047
        %v4066 = vsel %vm4060, %v4053, 920167782
        %v4067 = vsel %vm4059, %v4050, %v4066
        %v4068 = vsel %vm4058, %v4065, %v4067
        %v4069 = vsel %vm4057, %v4047, %v4050
        %v4070 = vsel %vm4060, %v4056, 1326507024
        %v4071 = vsel %vm4059, %v4053, %v4070
        %v4072 = vsel %vm4058, %v4069, %v4071
        %v4073 = vshll.u32 %v4033, 8
        %v4074 = vmul.u32.u64.compose %v4073, %v4072
        %v4075 = vextract.low.u32 %v4074
        %v4076 = vextract.high.u32 %v4074
        %v4077 = vmul.u32.u64.compose %v4073, %v4068
        %v4078 = vextract.low.u32 %v4077
        %v4079 = vextract.high.u32 %v4077
        %v4080 = vmul.u32 %v4073, %v4064
        %v4081 = vadd.s32 %v4076, %v4078
        %vm4082 = vc.u32 %v4076, %v4078
        %v4083 = vadd.s32 %v4079, 1
        %v4084 = vsel %vm4082, %v4083, %v4079
        %v4085 = vadd.s32 %v4080, %v4084
        %v4086 = vadd.s32 %v4085, 536870912
        %v4087 = vshrl.u32 %v4086, 30
        %v4088 = vshll.u32 %v4087, 30
        %v4089 = vsub.s32 %v4085, %v4088
        %vm4090 = vcmp.lt.s32.totalorder %v4089, 0
        %v4091 = vsub.s32 0, %v4089
        %v4092 = vsel %vm4090, %v4091, %v4089
        %v4093 = vclz %v4092
        %v4094 = vsub.s32 %v4093, 2
        %vm4095 = vcmp.gt.s32.totalorder 0, %v4094
        %v4096 = vsel %vm4095, 0, %v4094
        %v4097 = vsub.s32 32, %v4096
        %v4098 = vshll.u32 %v4089, %v4096
        %v4099 = vshrl.u32 %v4081, %v4097
        %v4100 = vor.u32 %v4098, %v4099
        %v4101 = vsub.s32 4294967266, %v4096
        %v4102 = vadd.s32 %v4101, 127
        %v4103 = vshll.u32 %v4102, 23
        %v4104 = vor.u32 4788187, %v4103
        %v4105 = vand.u32 2147483647, %v4104
        %v4107 = vcvt.s32.f32 %v4100
        %v4108 = vmul.f32 %v4107, %v4105
        %v4109 = vxor.u32 %v4108, 2147483648
        %v4110 = vsel %vm4027, %v4109, %v4108
        %v4111 = vsub.s32 4, %v4087
        %v4112 = vsel %vm4027, %v4111, %v4087
        %v4113 = vsel %vm4026, %v3607, %v4110
        %v4114 = vsel %vm4026, 0, %v4112
        %v4115 = vcosq.f32.pop %v4113
        %v4116 = vsinq.f32.pop %v4113
        %vm4117 = vweird.f32 %v3607
        %v4118 = vadd.s32 %v4114, 3
        %v4119 = vand.u32 %v4118, 3
        %vm4120 = vcmp.lt.s32.totalorder %v4119, 2
        %vm4121 = vcmp.eq.s32.totalorder %v4119, 0
        %v4122 = vxor.u32 %v4116, 2147483648
        %v4123 = vsel %vm4121, %v4115, %v4122
        %vm4124 = vcmp.eq.s32.totalorder %v4119, 2
        %v4125 = vxor.u32 %v4115, 2147483648
        %v4126 = vsel %vm4124, %v4125, %v4116
        %v4127 = vsel %vm4120, %v4123, %v4126
        %v4128 = vsel %vm4117, nan, %v4127
        %v4129 = vand.u32 2147483647, %v3608
        %vm4130 = vcmp.le.f32.partialorder %v4129, 0.7853982
        %vm4131 = vcmp.lt.s32.totalorder %v3608, 0
        %v4132 = vand.u32 %v3608, 2139095040
        %v4133 = vshrl.u32 %v4132, 23
        %v4134 = vsub.s32 %v4133, 127
        %v4135 = vand.u32 2147483647, %v3608
        %v4136 = vand.u32 %v4135, 8388607
        %v4137 = vor.u32 %v4136, 8388608
        %v4138 = vsub.s32 0, %v4137
        %v4139 = vadd.s32 %v4134, 1
        %vm4140 = vcmp.gt.s32.totalorder %v4139, 0
        %v4141 = vsel %vm4140, %v4139, 0
        %v4142 = vshrl.u32 %v4141, 5
        %v4143 = vand.u32 %v4141, 31
        %v4144 = vsub.s32 32, %v4143
        %v4145 = vshrl.u32 683565275, %v4144
        %v4146 = vshll.u32 683565275, %v4143
        %v4147 = vshrl.u32 2475754826, %v4144
        %v4148 = vor.u32 %v4146, %v4147
        %v4149 = vshll.u32 2475754826, %v4143
        %v4150 = vshrl.u32 2131351028, %v4144
        %v4151 = vor.u32 %v4149, %v4150
        %v4152 = vshll.u32 2131351028, %v4143
        %v4153 = vshrl.u32 2102212464, %v4144
        %v4154 = vor.u32 %v4152, %v4153
        %v4155 = vshll.u32 2102212464, %v4143
        %v4156 = vshrl.u32 920167782, %v4144
        %v4157 = vor.u32 %v4155, %v4156
        %v4158 = vshll.u32 920167782, %v4143
        %v4159 = vshrl.u32 1326507024, %v4144
        %v4160 = vor.u32 %v4158, %v4159
        %vm4161 = vcmp.lt.s32.totalorder %v4142, 1
        %vm4162 = vcmp.lt.s32.totalorder %v4142, 2
        %vm4163 = vcmp.lt.s32.totalorder %v4142, 3
        %vm4164 = vcmp.lt.s32.totalorder %v4142, 4
        %v4165 = vsel %vm4161, %v4145, %v4148
        %v4166 = vsel %vm4164, %v4154, 2102212464
        %v4167 = vsel %vm4163, %v4151, %v4166
        %v4168 = vsel %vm4162, %v4165, %v4167
        %v4169 = vsel %vm4161, %v4148, %v4151
        %v4170 = vsel %vm4164, %v4157, 920167782
        %v4171 = vsel %vm4163, %v4154, %v4170
        %v4172 = vsel %vm4162, %v4169, %v4171
        %v4173 = vsel %vm4161, %v4151, %v4154
        %v4174 = vsel %vm4164, %v4160, 1326507024
        %v4175 = vsel %vm4163, %v4157, %v4174
        %v4176 = vsel %vm4162, %v4173, %v4175
        %v4177 = vshll.u32 %v4137, 8
        %v4178 = vmul.u32.u64.compose %v4177, %v4176
        %v4179 = vextract.low.u32 %v4178
        %v4180 = vextract.high.u32 %v4178
        %v4181 = vmul.u32.u64.compose %v4177, %v4172
        %v4182 = vextract.low.u32 %v4181
        %v4183 = vextract.high.u32 %v4181
        %v4184 = vmul.u32 %v4177, %v4168
        %v4185 = vadd.s32 %v4180, %v4182
        %vm4186 = vc.u32 %v4180, %v4182
        %v4187 = vadd.s32 %v4183, 1
        %v4188 = vsel %vm4186, %v4187, %v4183
        %v4189 = vadd.s32 %v4184, %v4188
        %v4190 = vadd.s32 %v4189, 536870912
        %v4191 = vshrl.u32 %v4190, 30
        %v4192 = vshll.u32 %v4191, 30
        %v4193 = vsub.s32 %v4189, %v4192
        %vm4194 = vcmp.lt.s32.totalorder %v4193, 0
        %v4195 = vsub.s32 0, %v4193
        %v4196 = vsel %vm4194, %v4195, %v4193
        %v4197 = vclz %v4196
        %v4198 = vsub.s32 %v4197, 2
        %vm4199 = vcmp.gt.s32.totalorder 0, %v4198
        %v4200 = vsel %vm4199, 0, %v4198
        %v4201 = vsub.s32 32, %v4200
        %v4202 = vshll.u32 %v4193, %v4200
        %v4203 = vshrl.u32 %v4185, %v4201
        %v4204 = vor.u32 %v4202, %v4203
        %v4205 = vsub.s32 4294967266, %v4200
        %v4206 = vadd.s32 %v4205, 127
        %v4207 = vshll.u32 %v4206, 23
        %v4208 = vor.u32 4788187, %v4207
        %v4209 = vand.u32 2147483647, %v4208
        %v4211 = vcvt.s32.f32 %v4204
        %v4212 = vmul.f32 %v4211, %v4209
        %v4213 = vxor.u32 %v4212, 2147483648
        %v4214 = vsel %vm4131, %v4213, %v4212
        %v4215 = vsub.s32 4, %v4191
        %v4216 = vsel %vm4131, %v4215, %v4191
        %v4217 = vsel %vm4130, %v3608, %v4214
        %v4218 = vsel %vm4130, 0, %v4216
        %v4219 = vcosq.f32.pop %v4217
        %v4220 = vsinq.f32.pop %v4217
        %vm4221 = vweird.f32 %v3608
        %v4222 = vadd.s32 %v4218, 3
        %v4223 = vand.u32 %v4222, 3
        %vm4224 = vcmp.lt.s32.totalorder %v4223, 2
        %vm4225 = vcmp.eq.s32.totalorder %v4223, 0
        %v4226 = vxor.u32 %v4220, 2147483648
        %v4227 = vsel %vm4225, %v4219, %v4226
        %vm4228 = vcmp.eq.s32.totalorder %v4223, 2
        %v4229 = vxor.u32 %v4219, 2147483648
        %v4230 = vsel %vm4228, %v4229, %v4220
        %v4231 = vsel %vm4224, %v4227, %v4230
        %v4232 = vsel %vm4221, nan, %v4231
        %v4233 = vmul.f32 %v3712, %v3712
        %v4234 = vmul.f32 %v3816, %v3816
        %v4235 = vmul.f32 %v3920, %v3920
        %v4236 = vmul.f32 %v4024, %v4024
        %v4237 = vmul.f32 %v4128, %v4128
        %v4238 = vmul.f32 %v4232, %v4232
        %v4240 = vlaneseq
        %v4241 = vshrl.u32 %v4240, 7
        %v4242 = vsub.s32 0, %v4241
        %v4243 = vrot.slane %v3596, %v4242
        %v4245 = vmul.f32 %v4243, %v4233
        %v4246 = vmul.f32 %v4243, %v4234
        %v4247 = vmul.f32 %v4243, %v4235
        %v4248 = vmul.f32 %v4243, %v4236
        %v4249 = vmul.f32 %v4243, %v4237
        %v4250 = vmul.f32 %v4243, %v4238
        %v4251 = vadd.f32 %v3587, %v4245
        %v4252 = vadd.f32 %v3588, %v4246
        %v4253 = vadd.f32 %v3589, %v4247
        %v4254 = vadd.f32 %v3590, %v4248
        %v4255 = vadd.f32 %v3591, %v4249
        %v4256 = vadd.f32 %v3592, %v4250
        %s4257 = scalar_lea.vmem [#allocation13], 1
        %v4258 = vld [vmem:[%s4257] sm:$0x1]
        %v4265 = vrot.slane %v4251, 1
        %v4266 = vrot.slane %v4252, 1
        %v4267 = vsel %vm1324, %v4265, %v4266
        %v4268 = vrot.slane %v4253, 1
        %v4269 = vsel %vm1324, %v4266, %v4268
        %v4270 = vrot.slane %v4254, 1
        %v4271 = vsel %vm1324, %v4268, %v4270
        %v4272 = vrot.slane %v4255, 1
        %v4273 = vsel %vm1324, %v4270, %v4272
        %v4274 = vrot.slane %v4256, 1
        %v4275 = vsel %vm1324, %v4272, %v4274
        %4276 = vrot.lane.b32.xlu0 %v4267, 64
        %v4277 = vpop.permute.xlu0 %4276
        %4278 = vrot.lane.b32.xlu0 %v4269, 64
        %v4279 = vpop.permute.xlu0 %4278
        %4280 = vrot.lane.b32.xlu0 %v4271, 64
        %v4281 = vpop.permute.xlu0 %4280
        %4282 = vrot.lane.b32.xlu0 %v4273, 64
        %v4283 = vpop.permute.xlu0 %4282
        %4284 = vrot.lane.b32.xlu0 %v4275, 64
        %v4285 = vpop.permute.xlu0 %4284
        %4286 = vrot.lane.b32.xlu0 %v4274, 64
        %v4287 = vpop.permute.xlu0 %4286
        %v4294 = vrot.slane %v4251, 2
        %v4295 = vrot.slane %v4252, 2
        %v4296 = vsel %vm1359, %v4294, %v4295
        %v4297 = vrot.slane %v4253, 2
        %v4298 = vsel %vm1359, %v4295, %v4297
        %v4299 = vrot.slane %v4254, 2
        %v4300 = vsel %vm1359, %v4297, %v4299
        %v4301 = vrot.slane %v4255, 2
        %v4302 = vsel %vm1359, %v4299, %v4301
        %v4303 = vrot.slane %v4256, 2
        %v4304 = vsel %vm1359, %v4301, %v4303
        %v4305 = vsel %vm1373, %v4251, %v4277
        %v4306 = vsel %vm1373, %v4252, %v4279
        %v4307 = vsel %vm1373, %v4253, %v4281
        %v4308 = vsel %vm1373, %v4254, %v4283
        %v4309 = vsel %vm1373, %v4255, %v4285
        %v4310 = vsel %vm1373, %v4256, %v4287
        %s4311 = scalar_lea.vmem [#allocation11], 192
        %v4312 = vld [vmem:[%s4311] sm:$0xff]
        %v4313 = vld [vmem:[%s4311 + $0x8] sm:$0xff]
        %v4314 = vld [vmem:[%s4311 + $0x10] sm:$0xff]
        %v4315 = vld [vmem:[%s4311 + $0x18] sm:$0xff]
        %v4316 = vld [vmem:[%s4311 + $0x20] sm:$0xff]
        %v4317 = vld [vmem:[%s4311 + $0x28] sm:$0xff]
        %v4318 = vld [vmem:[%s4311 + $0x30] sm:$0xff]
        %v4319 = vld [vmem:[%s4311 + $0x38] sm:$0xff]
        %v4320 = vld [vmem:[%s4311 + $0x40] sm:$0xff]
        %v4321 = vld [vmem:[%s4311 + $0x48] sm:$0xff]
        %v4322 = vld [vmem:[%s4311 + $0x50] sm:$0xff]
        %v4323 = vld [vmem:[%s4311 + $0x58] sm:$0xff]
        %v4324 = vld [vmem:[%s4311 + $0x60] sm:$0xff]
        %v4325 = vld [vmem:[%s4311 + $0x68] sm:$0xff]
        %v4326 = vld [vmem:[%s4311 + $0x70] sm:$0xff]
        %v4327 = vld [vmem:[%s4311 + $0x78] sm:$0xff]
        %v4328 = vld [vmem:[%s4311 + $0x80] sm:$0xff]
        %v4329 = vld [vmem:[%s4311 + $0x88] sm:$0xff]
        %v4330 = vld [vmem:[%s4311 + $0x90] sm:$0xff]
        %v4331 = vld [vmem:[%s4311 + $0x98] sm:$0xff]
        %v4332 = vld [vmem:[%s4311 + $0xa0] sm:$0xff]
        %v4333 = vld [vmem:[%s4311 + $0xa8] sm:$0xff]
        %v4334 = vld [vmem:[%s4311 + $0xb0] sm:$0xff]
        %v4335 = vld [vmem:[%s4311 + $0xb8] sm:$0xff]
        %v4337 = vlaneseq
        %v4338 = vshrl.u32 %v4337, 7
        %v4339 = vsub.s32 0, %v4338
        %v4340 = vrot.slane %v4258, %v4339
        %v4342 = vsel %vm1373, %v4296, 0
        %v4344 = vsel %vm1373, %v4298, 0
        %v4346 = vsel %vm1373, %v4300, 0
        %v4348 = vsel %vm1373, %v4302, 0
        %v4350 = vsel %vm1373, %v4304, 0
        %v4352 = vsel %vm1373, %v4303, 0
        %4354 = vmatprep.subr.mxu0 0.0
        %4355 = vmatpush1.msra.mxu0 %v4312
        %4356 = vmatprep.subr.mxu0 0.0
        %4357 = vmatpush1.msra.mxu0 %v4313
        %4358 = vmatprep.subr.mxu0 0.0
        %4359 = vmatpush1.msra.mxu0 %v4314
        %4360 = vmatprep.subr.mxu0 0.0
        %4361 = vmatpush1.msra.mxu0 %v4315
        %4362 = vmatprep.subr.mxu0 0.0
        %4363 = vmatpush1.msra.mxu0 %v4316
        %4364 = vmatprep.subr.mxu0 0.0
        %4365 = vmatpush1.msra.mxu0 %v4317
        %4366 = vmatprep.subr.mxu0 0.0
        %4367 = vmatpush1.msra.mxu0 %v4318
        %4368 = vmatprep.subr.mxu0 0.0
        %4369 = vmatpush1.msra.mxu0 %v4319
        %4370 = vmatprep.subr.mxu0 0.0
        %4371 = vmatpush1.msra.mxu0 %v4320
        %4372 = vmatprep.subr.mxu0 0.0
        %4373 = vmatpush1.msra.mxu0 %v4321
        %4374 = vmatprep.subr.mxu0 0.0
        %4375 = vmatpush1.msra.mxu0 %v4322
        %4376 = vmatprep.subr.mxu0 0.0
        %4377 = vmatpush1.msra.mxu0 %v4323
        %4378 = vmatprep.subr.mxu0 0.0
        %4379 = vmatpush1.msra.mxu0 %v4324
        %4380 = vmatprep.subr.mxu0 0.0
        %4381 = vmatpush1.msra.mxu0 %v4325
        %4382 = vmatprep.subr.mxu0 0.0
        %4383 = vmatpush1.msra.mxu0 %v4326
        %4384 = vmatprep.subr.mxu0 0.0
        %4385 = vmatpush1.msra.mxu0 %v4327
        %4386 = vmatprep.subr.mxu0 0.0
        %4387 = vmatpush1.msra.mxu0 %v4328
        %4388 = vmatprep.subr.mxu0 0.0
        %4389 = vmatpush1.msra.mxu0 %v4329
        %4390 = vmatprep.subr.mxu0 0.0
        %4391 = vmatpush1.msra.mxu0 %v4330
        %4392 = vmatprep.subr.mxu0 0.0
        %4393 = vmatpush1.msra.mxu0 %v4331
        %4394 = vmatprep.subr.mxu0 0.0
        %4395 = vmatpush1.msra.mxu0 %v4332
        %4396 = vmatprep.subr.mxu0 0.0
        %4397 = vmatpush1.msra.mxu0 %v4333
        %4398 = vmatprep.subr.mxu0 0.0
        %4399 = vmatpush1.msra.mxu0 %v4334
        %4400 = vmatprep.subr.mxu0 0.0
        %4401 = vmatpush1.msra.mxu0 %v4335
        %4402 = vmatprep.subr.mxu0 0.0
        %4403 = vmatpush1.msra.mxu0 0.0
        %4404 = vmatprep.subr.mxu0 0.0
        %4405 = vmatpush1.msra.mxu0 0.0
        %4406 = vmatprep.subr.mxu0 0.0
        %4407 = vmatpush1.msra.mxu0 0.0
        %4408 = vmatprep.subr.mxu0 0.0
        %4409 = vmatpush1.msra.mxu0 0.0
        %4410 = vmatprep.subr.mxu0 0.0
        %4411 = vmatpush1.msra.mxu0 0.0
        %4412 = vmatprep.subr.mxu0 0.0
        %4413 = vmatpush1.msra.mxu0 0.0
        %4414 = vmatprep.subr.mxu0 0.0
        %4415 = vmatpush1.msra.mxu0 0.0
        %4416 = vmatprep.subr.mxu0 0.0
        %4417 = vmatpush1.msra.mxu0 0.0
        %4418 = vmatprep.mubr.f32.mxu0 %v4342
        %4419 = vmatmul.mubr.f32.gmra.mrb[0].mxu0 %v4305
        %v4420 = vpop.f32.mrb[0].mxu0
        %v4421 = vadd.f32 %v4340, %v4420
        %v4422 = vpop.f32.mrb[0].mxu0
        %4423 = vmatprep.mubr.f32.mxu0 %v4344
        %4424 = vmatmul.mubr.f32.gmra.mrb[0].mxu0 %v4306
        %v4425 = vpop.f32.mrb[0].mxu0
        %v4426 = vadd.f32 %v4340, %v4425
        %v4427 = vpop.f32.mrb[0].mxu0
        %4428 = vmatprep.mubr.f32.mxu0 %v4346
        %4429 = vmatmul.mubr.f32.gmra.mrb[0].mxu0 %v4307
        %v4430 = vpop.f32.mrb[0].mxu0
        %v4431 = vadd.f32 %v4340, %v4430
        %v4432 = vpop.f32.mrb[0].mxu0
        %4433 = vmatprep.mubr.f32.mxu0 %v4348
        %4434 = vmatmul.mubr.f32.gmra.mrb[0].mxu0 %v4308
        %v4435 = vpop.f32.mrb[0].mxu0
        %v4436 = vadd.f32 %v4340, %v4435
        %v4437 = vpop.f32.mrb[0].mxu0
        %4438 = vmatprep.mubr.f32.mxu0 %v4350
        %4439 = vmatmul.mubr.f32.gmra.mrb[0].mxu0 %v4309
        %v4440 = vpop.f32.mrb[0].mxu0
        %v4441 = vadd.f32 %v4340, %v4440
        %v4442 = vpop.f32.mrb[0].mxu0
        %4443 = vmatprep.mubr.f32.mxu0 %v4352
        %4444 = vmatmul.mubr.f32.gmra.mrb[0].mxu0 %v4310
        %v4445 = vpop.f32.mrb[0].mxu0
        %v4446 = vadd.f32 %v4340, %v4445
        %v4447 = vpop.f32.mrb[0].mxu0
        %4448 = vdwg.mxu0
        %vm4455 = vcmask 1043456
        %v4456 = vrot.slane %v2589, 4
        %v4457 = vrot.slane %v2590, 4
        %v4458 = vsel %vm4455, %v4456, %v4457
        %v4459 = vrot.slane %v2591, 4
        %v4460 = vsel %vm4455, %v4457, %v4459
        %v4461 = vrot.slane %v2592, 4
        %v4462 = vsel %vm4455, %v4459, %v4461
        %v4463 = vrot.slane %v2593, 4
        %v4464 = vsel %vm4455, %v4461, %v4463
        %v4465 = vrot.slane %v2594, 4
        %v4466 = vsel %vm4455, %v4463, %v4465
        %v4473 = vadd.f32 %v4421, %v4458
        %v4474 = vadd.f32 %v4426, %v4460
        %v4475 = vadd.f32 %v4431, %v4462
        %v4476 = vadd.f32 %v4436, %v4464
        %v4477 = vadd.f32 %v4441, %v4466
        %v4478 = vadd.f32 %v4446, %v4465
        %v4479 = vrot.slane %v539, 6
        %v4480 = vrot.slane %v540, 6
        %v4481 = vsel %vm3409, %v4479, %v4480
        %v4482 = vrot.slane %v541, 6
        %v4483 = vsel %vm3409, %v4480, %v4482
        %v4484 = vrot.slane %v542, 6
        %v4485 = vsel %vm3409, %v4482, %v4484
        %v4486 = vrot.slane %v543, 6
        %v4487 = vsel %vm3409, %v4484, %v4486
        %v4488 = vrot.slane %v544, 6
        %v4489 = vsel %vm3409, %v4486, %v4488
        %v4490 = vrot.slane %v545, 6
        %v4491 = vsel %vm3409, %v4488, %v4490
        %v4498 = vmul.f32 %v4473, %v4481
        %v4499 = vmul.f32 %v4474, %v4483
        %v4500 = vmul.f32 %v4475, %v4485
        %v4501 = vmul.f32 %v4476, %v4487
        %v4502 = vmul.f32 %v4477, %v4489
        %v4503 = vmul.f32 %v4478, %v4491
        %s4504 = scalar_lea.vmem [#allocation8], 2
        %v4505 = vld [vmem:[%s4504] sm:$0x1]
        %s4506 = scalar_lea.vmem [#allocation10], 2
        %v4507 = vld [vmem:[%s4506] sm:$0x1]
        %v4509 = vlaneseq
        %v4510 = vshrl.u32 %v4509, 7
        %v4511 = vsub.s32 0, %v4510
        %v4512 = vrot.slane %v4505, %v4511
        %v4514 = vmul.f32 %v4498, %v4512
        %v4515 = vmul.f32 %v4499, %v4512
        %v4516 = vmul.f32 %v4500, %v4512
        %v4517 = vmul.f32 %v4501, %v4512
        %v4518 = vmul.f32 %v4502, %v4512
        %v4519 = vmul.f32 %v4503, %v4512
        %v4520 = vand.u32 2147483647, %v4514
        %vm4521 = vcmp.le.f32.partialorder %v4520, 0.7853982
        %vm4522 = vcmp.lt.s32.totalorder %v4514, 0
        %v4523 = vand.u32 %v4514, 2139095040
        %v4524 = vshrl.u32 %v4523, 23
        %v4525 = vsub.s32 %v4524, 127
        %v4526 = vand.u32 2147483647, %v4514
        %v4527 = vand.u32 %v4526, 8388607
        %v4528 = vor.u32 %v4527, 8388608
        %v4529 = vsub.s32 0, %v4528
        %v4530 = vadd.s32 %v4525, 1
        %vm4531 = vcmp.gt.s32.totalorder %v4530, 0
        %v4532 = vsel %vm4531, %v4530, 0
        %v4533 = vshrl.u32 %v4532, 5
        %v4534 = vand.u32 %v4532, 31
        %v4535 = vsub.s32 32, %v4534
        %v4536 = vshrl.u32 683565275, %v4535
        %v4537 = vshll.u32 683565275, %v4534
        %v4538 = vshrl.u32 2475754826, %v4535
        %v4539 = vor.u32 %v4537, %v4538
        %v4540 = vshll.u32 2475754826, %v4534
        %v4541 = vshrl.u32 2131351028, %v4535
        %v4542 = vor.u32 %v4540, %v4541
        %v4543 = vshll.u32 2131351028, %v4534
        %v4544 = vshrl.u32 2102212464, %v4535
        %v4545 = vor.u32 %v4543, %v4544
        %v4546 = vshll.u32 2102212464, %v4534
        %v4547 = vshrl.u32 920167782, %v4535
        %v4548 = vor.u32 %v4546, %v4547
        %v4549 = vshll.u32 920167782, %v4534
        %v4550 = vshrl.u32 1326507024, %v4535
        %v4551 = vor.u32 %v4549, %v4550
        %vm4552 = vcmp.lt.s32.totalorder %v4533, 1
        %vm4553 = vcmp.lt.s32.totalorder %v4533, 2
        %vm4554 = vcmp.lt.s32.totalorder %v4533, 3
        %vm4555 = vcmp.lt.s32.totalorder %v4533, 4
        %v4556 = vsel %vm4552, %v4536, %v4539
        %v4557 = vsel %vm4555, %v4545, 2102212464
        %v4558 = vsel %vm4554, %v4542, %v4557
        %v4559 = vsel %vm4553, %v4556, %v4558
        %v4560 = vsel %vm4552, %v4539, %v4542
        %v4561 = vsel %vm4555, %v4548, 920167782
        %v4562 = vsel %vm4554, %v4545, %v4561
        %v4563 = vsel %vm4553, %v4560, %v4562
        %v4564 = vsel %vm4552, %v4542, %v4545
        %v4565 = vsel %vm4555, %v4551, 1326507024
        %v4566 = vsel %vm4554, %v4548, %v4565
        %v4567 = vsel %vm4553, %v4564, %v4566
        %v4568 = vshll.u32 %v4528, 8
        %v4569 = vmul.u32.u64.compose %v4568, %v4567
        %v4570 = vextract.low.u32 %v4569
        %v4571 = vextract.high.u32 %v4569
        %v4572 = vmul.u32.u64.compose %v4568, %v4563
        %v4573 = vextract.low.u32 %v4572
        %v4574 = vextract.high.u32 %v4572
        %v4575 = vmul.u32 %v4568, %v4559
        %v4576 = vadd.s32 %v4571, %v4573
        %vm4577 = vc.u32 %v4571, %v4573
        %v4578 = vadd.s32 %v4574, 1
        %v4579 = vsel %vm4577, %v4578, %v4574
        %v4580 = vadd.s32 %v4575, %v4579
        %v4581 = vadd.s32 %v4580, 536870912
        %v4582 = vshrl.u32 %v4581, 30
        %v4583 = vshll.u32 %v4582, 30
        %v4584 = vsub.s32 %v4580, %v4583
        %vm4585 = vcmp.lt.s32.totalorder %v4584, 0
        %v4586 = vsub.s32 0, %v4584
        %v4587 = vsel %vm4585, %v4586, %v4584
        %v4588 = vclz %v4587
        %v4589 = vsub.s32 %v4588, 2
        %vm4590 = vcmp.gt.s32.totalorder 0, %v4589
        %v4591 = vsel %vm4590, 0, %v4589
        %v4592 = vsub.s32 32, %v4591
        %v4593 = vshll.u32 %v4584, %v4591
        %v4594 = vshrl.u32 %v4576, %v4592
        %v4595 = vor.u32 %v4593, %v4594
        %v4596 = vsub.s32 4294967266, %v4591
        %v4597 = vadd.s32 %v4596, 127
        %v4598 = vshll.u32 %v4597, 23
        %v4599 = vor.u32 4788187, %v4598
        %v4600 = vand.u32 2147483647, %v4599
        %v4602 = vcvt.s32.f32 %v4595
        %v4603 = vmul.f32 %v4602, %v4600
        %v4604 = vxor.u32 %v4603, 2147483648
        %v4605 = vsel %vm4522, %v4604, %v4603
        %v4606 = vsub.s32 4, %v4582
        %v4607 = vsel %vm4522, %v4606, %v4582
        %v4608 = vsel %vm4521, %v4514, %v4605
        %v4609 = vsel %vm4521, 0, %v4607
        %v4610 = vcosq.f32.pop %v4608
        %v4611 = vsinq.f32.pop %v4608
        %vm4612 = vweird.f32 %v4514
        %v4613 = vadd.s32 %v4609, 3
        %v4614 = vand.u32 %v4613, 3
        %vm4615 = vcmp.lt.s32.totalorder %v4614, 2
        %vm4616 = vcmp.eq.s32.totalorder %v4614, 0
        %v4617 = vxor.u32 %v4611, 2147483648
        %v4618 = vsel %vm4616, %v4610, %v4617
        %vm4619 = vcmp.eq.s32.totalorder %v4614, 2
        %v4620 = vxor.u32 %v4610, 2147483648
        %v4621 = vsel %vm4619, %v4620, %v4611
        %v4622 = vsel %vm4615, %v4618, %v4621
        %v4623 = vsel %vm4612, nan, %v4622
        %v4624 = vand.u32 2147483647, %v4515
        %vm4625 = vcmp.le.f32.partialorder %v4624, 0.7853982
        %vm4626 = vcmp.lt.s32.totalorder %v4515, 0
        %v4627 = vand.u32 %v4515, 2139095040
        %v4628 = vshrl.u32 %v4627, 23
        %v4629 = vsub.s32 %v4628, 127
        %v4630 = vand.u32 2147483647, %v4515
        %v4631 = vand.u32 %v4630, 8388607
        %v4632 = vor.u32 %v4631, 8388608
        %v4633 = vsub.s32 0, %v4632
        %v4634 = vadd.s32 %v4629, 1
        %vm4635 = vcmp.gt.s32.totalorder %v4634, 0
        %v4636 = vsel %vm4635, %v4634, 0
        %v4637 = vshrl.u32 %v4636, 5
        %v4638 = vand.u32 %v4636, 31
        %v4639 = vsub.s32 32, %v4638
        %v4640 = vshrl.u32 683565275, %v4639
        %v4641 = vshll.u32 683565275, %v4638
        %v4642 = vshrl.u32 2475754826, %v4639
        %v4643 = vor.u32 %v4641, %v4642
        %v4644 = vshll.u32 2475754826, %v4638
        %v4645 = vshrl.u32 2131351028, %v4639
        %v4646 = vor.u32 %v4644, %v4645
        %v4647 = vshll.u32 2131351028, %v4638
        %v4648 = vshrl.u32 2102212464, %v4639
        %v4649 = vor.u32 %v4647, %v4648
        %v4650 = vshll.u32 2102212464, %v4638
        %v4651 = vshrl.u32 920167782, %v4639
        %v4652 = vor.u32 %v4650, %v4651
        %v4653 = vshll.u32 920167782, %v4638
        %v4654 = vshrl.u32 1326507024, %v4639
        %v4655 = vor.u32 %v4653, %v4654
        %vm4656 = vcmp.lt.s32.totalorder %v4637, 1
        %vm4657 = vcmp.lt.s32.totalorder %v4637, 2
        %vm4658 = vcmp.lt.s32.totalorder %v4637, 3
        %vm4659 = vcmp.lt.s32.totalorder %v4637, 4
        %v4660 = vsel %vm4656, %v4640, %v4643
        %v4661 = vsel %vm4659, %v4649, 2102212464
        %v4662 = vsel %vm4658, %v4646, %v4661
        %v4663 = vsel %vm4657, %v4660, %v4662
        %v4664 = vsel %vm4656, %v4643, %v4646
        %v4665 = vsel %vm4659, %v4652, 920167782
        %v4666 = vsel %vm4658, %v4649, %v4665
        %v4667 = vsel %vm4657, %v4664, %v4666
        %v4668 = vsel %vm4656, %v4646, %v4649
        %v4669 = vsel %vm4659, %v4655, 1326507024
        %v4670 = vsel %vm4658, %v4652, %v4669
        %v4671 = vsel %vm4657, %v4668, %v4670
        %v4672 = vshll.u32 %v4632, 8
        %v4673 = vmul.u32.u64.compose %v4672, %v4671
        %v4674 = vextract.low.u32 %v4673
        %v4675 = vextract.high.u32 %v4673
        %v4676 = vmul.u32.u64.compose %v4672, %v4667
        %v4677 = vextract.low.u32 %v4676
        %v4678 = vextract.high.u32 %v4676
        %v4679 = vmul.u32 %v4672, %v4663
        %v4680 = vadd.s32 %v4675, %v4677
        %vm4681 = vc.u32 %v4675, %v4677
        %v4682 = vadd.s32 %v4678, 1
        %v4683 = vsel %vm4681, %v4682, %v4678
        %v4684 = vadd.s32 %v4679, %v4683
        %v4685 = vadd.s32 %v4684, 536870912
        %v4686 = vshrl.u32 %v4685, 30
        %v4687 = vshll.u32 %v4686, 30
        %v4688 = vsub.s32 %v4684, %v4687
        %vm4689 = vcmp.lt.s32.totalorder %v4688, 0
        %v4690 = vsub.s32 0, %v4688
        %v4691 = vsel %vm4689, %v4690, %v4688
        %v4692 = vclz %v4691
        %v4693 = vsub.s32 %v4692, 2
        %vm4694 = vcmp.gt.s32.totalorder 0, %v4693
        %v4695 = vsel %vm4694, 0, %v4693
        %v4696 = vsub.s32 32, %v4695
        %v4697 = vshll.u32 %v4688, %v4695
        %v4698 = vshrl.u32 %v4680, %v4696
        %v4699 = vor.u32 %v4697, %v4698
        %v4700 = vsub.s32 4294967266, %v4695
        %v4701 = vadd.s32 %v4700, 127
        %v4702 = vshll.u32 %v4701, 23
        %v4703 = vor.u32 4788187, %v4702
        %v4704 = vand.u32 2147483647, %v4703
        %v4706 = vcvt.s32.f32 %v4699
        %v4707 = vmul.f32 %v4706, %v4704
        %v4708 = vxor.u32 %v4707, 2147483648
        %v4709 = vsel %vm4626, %v4708, %v4707
        %v4710 = vsub.s32 4, %v4686
        %v4711 = vsel %vm4626, %v4710, %v4686
        %v4712 = vsel %vm4625, %v4515, %v4709
        %v4713 = vsel %vm4625, 0, %v4711
        %v4714 = vcosq.f32.pop %v4712
        %v4715 = vsinq.f32.pop %v4712
        %vm4716 = vweird.f32 %v4515
        %v4717 = vadd.s32 %v4713, 3
        %v4718 = vand.u32 %v4717, 3
        %vm4719 = vcmp.lt.s32.totalorder %v4718, 2
        %vm4720 = vcmp.eq.s32.totalorder %v4718, 0
        %v4721 = vxor.u32 %v4715, 2147483648
        %v4722 = vsel %vm4720, %v4714, %v4721
        %vm4723 = vcmp.eq.s32.totalorder %v4718, 2
        %v4724 = vxor.u32 %v4714, 2147483648
        %v4725 = vsel %vm4723, %v4724, %v4715
        %v4726 = vsel %vm4719, %v4722, %v4725
        %v4727 = vsel %vm4716, nan, %v4726
        %v4728 = vand.u32 2147483647, %v4516
        %vm4729 = vcmp.le.f32.partialorder %v4728, 0.7853982
        %vm4730 = vcmp.lt.s32.totalorder %v4516, 0
        %v4731 = vand.u32 %v4516, 2139095040
        %v4732 = vshrl.u32 %v4731, 23
        %v4733 = vsub.s32 %v4732, 127
        %v4734 = vand.u32 2147483647, %v4516
        %v4735 = vand.u32 %v4734, 8388607
        %v4736 = vor.u32 %v4735, 8388608
        %v4737 = vsub.s32 0, %v4736
        %v4738 = vadd.s32 %v4733, 1
        %vm4739 = vcmp.gt.s32.totalorder %v4738, 0
        %v4740 = vsel %vm4739, %v4738, 0
        %v4741 = vshrl.u32 %v4740, 5
        %v4742 = vand.u32 %v4740, 31
        %v4743 = vsub.s32 32, %v4742
        %v4744 = vshrl.u32 683565275, %v4743
        %v4745 = vshll.u32 683565275, %v4742
        %v4746 = vshrl.u32 2475754826, %v4743
        %v4747 = vor.u32 %v4745, %v4746
        %v4748 = vshll.u32 2475754826, %v4742
        %v4749 = vshrl.u32 2131351028, %v4743
        %v4750 = vor.u32 %v4748, %v4749
        %v4751 = vshll.u32 2131351028, %v4742
        %v4752 = vshrl.u32 2102212464, %v4743
        %v4753 = vor.u32 %v4751, %v4752
        %v4754 = vshll.u32 2102212464, %v4742
        %v4755 = vshrl.u32 920167782, %v4743
        %v4756 = vor.u32 %v4754, %v4755
        %v4757 = vshll.u32 920167782, %v4742
        %v4758 = vshrl.u32 1326507024, %v4743
        %v4759 = vor.u32 %v4757, %v4758
        %vm4760 = vcmp.lt.s32.totalorder %v4741, 1
        %vm4761 = vcmp.lt.s32.totalorder %v4741, 2
        %vm4762 = vcmp.lt.s32.totalorder %v4741, 3
        %vm4763 = vcmp.lt.s32.totalorder %v4741, 4
        %v4764 = vsel %vm4760, %v4744, %v4747
        %v4765 = vsel %vm4763, %v4753, 2102212464
        %v4766 = vsel %vm4762, %v4750, %v4765
        %v4767 = vsel %vm4761, %v4764, %v4766
        %v4768 = vsel %vm4760, %v4747, %v4750
        %v4769 = vsel %vm4763, %v4756, 920167782
        %v4770 = vsel %vm4762, %v4753, %v4769
        %v4771 = vsel %vm4761, %v4768, %v4770
        %v4772 = vsel %vm4760, %v4750, %v4753
        %v4773 = vsel %vm4763, %v4759, 1326507024
        %v4774 = vsel %vm4762, %v4756, %v4773
        %v4775 = vsel %vm4761, %v4772, %v4774
        %v4776 = vshll.u32 %v4736, 8
        %v4777 = vmul.u32.u64.compose %v4776, %v4775
        %v4778 = vextract.low.u32 %v4777
        %v4779 = vextract.high.u32 %v4777
        %v4780 = vmul.u32.u64.compose %v4776, %v4771
        %v4781 = vextract.low.u32 %v4780
        %v4782 = vextract.high.u32 %v4780
        %v4783 = vmul.u32 %v4776, %v4767
        %v4784 = vadd.s32 %v4779, %v4781
        %vm4785 = vc.u32 %v4779, %v4781
        %v4786 = vadd.s32 %v4782, 1
        %v4787 = vsel %vm4785, %v4786, %v4782
        %v4788 = vadd.s32 %v4783, %v4787
        %v4789 = vadd.s32 %v4788, 536870912
        %v4790 = vshrl.u32 %v4789, 30
        %v4791 = vshll.u32 %v4790, 30
        %v4792 = vsub.s32 %v4788, %v4791
        %vm4793 = vcmp.lt.s32.totalorder %v4792, 0
        %v4794 = vsub.s32 0, %v4792
        %v4795 = vsel %vm4793, %v4794, %v4792
        %v4796 = vclz %v4795
        %v4797 = vsub.s32 %v4796, 2
        %vm4798 = vcmp.gt.s32.totalorder 0, %v4797
        %v4799 = vsel %vm4798, 0, %v4797
        %v4800 = vsub.s32 32, %v4799
        %v4801 = vshll.u32 %v4792, %v4799
        %v4802 = vshrl.u32 %v4784, %v4800
        %v4803 = vor.u32 %v4801, %v4802
        %v4804 = vsub.s32 4294967266, %v4799
        %v4805 = vadd.s32 %v4804, 127
        %v4806 = vshll.u32 %v4805, 23
        %v4807 = vor.u32 4788187, %v4806
        %v4808 = vand.u32 2147483647, %v4807
        %v4810 = vcvt.s32.f32 %v4803
        %v4811 = vmul.f32 %v4810, %v4808
        %v4812 = vxor.u32 %v4811, 2147483648
        %v4813 = vsel %vm4730, %v4812, %v4811
        %v4814 = vsub.s32 4, %v4790
        %v4815 = vsel %vm4730, %v4814, %v4790
        %v4816 = vsel %vm4729, %v4516, %v4813
        %v4817 = vsel %vm4729, 0, %v4815
        %v4818 = vcosq.f32.pop %v4816
        %v4819 = vsinq.f32.pop %v4816
        %vm4820 = vweird.f32 %v4516
        %v4821 = vadd.s32 %v4817, 3
        %v4822 = vand.u32 %v4821, 3
        %vm4823 = vcmp.lt.s32.totalorder %v4822, 2
        %vm4824 = vcmp.eq.s32.totalorder %v4822, 0
        %v4825 = vxor.u32 %v4819, 2147483648
        %v4826 = vsel %vm4824, %v4818, %v4825
        %vm4827 = vcmp.eq.s32.totalorder %v4822, 2
        %v4828 = vxor.u32 %v4818, 2147483648
        %v4829 = vsel %vm4827, %v4828, %v4819
        %v4830 = vsel %vm4823, %v4826, %v4829
        %v4831 = vsel %vm4820, nan, %v4830
        %v4832 = vand.u32 2147483647, %v4517
        %vm4833 = vcmp.le.f32.partialorder %v4832, 0.7853982
        %vm4834 = vcmp.lt.s32.totalorder %v4517, 0
        %v4835 = vand.u32 %v4517, 2139095040
        %v4836 = vshrl.u32 %v4835, 23
        %v4837 = vsub.s32 %v4836, 127
        %v4838 = vand.u32 2147483647, %v4517
        %v4839 = vand.u32 %v4838, 8388607
        %v4840 = vor.u32 %v4839, 8388608
        %v4841 = vsub.s32 0, %v4840
        %v4842 = vadd.s32 %v4837, 1
        %vm4843 = vcmp.gt.s32.totalorder %v4842, 0
        %v4844 = vsel %vm4843, %v4842, 0
        %v4845 = vshrl.u32 %v4844, 5
        %v4846 = vand.u32 %v4844, 31
        %v4847 = vsub.s32 32, %v4846
        %v4848 = vshrl.u32 683565275, %v4847
        %v4849 = vshll.u32 683565275, %v4846
        %v4850 = vshrl.u32 2475754826, %v4847
        %v4851 = vor.u32 %v4849, %v4850
        %v4852 = vshll.u32 2475754826, %v4846
        %v4853 = vshrl.u32 2131351028, %v4847
        %v4854 = vor.u32 %v4852, %v4853
        %v4855 = vshll.u32 2131351028, %v4846
        %v4856 = vshrl.u32 2102212464, %v4847
        %v4857 = vor.u32 %v4855, %v4856
        %v4858 = vshll.u32 2102212464, %v4846
        %v4859 = vshrl.u32 920167782, %v4847
        %v4860 = vor.u32 %v4858, %v4859
        %v4861 = vshll.u32 920167782, %v4846
        %v4862 = vshrl.u32 1326507024, %v4847
        %v4863 = vor.u32 %v4861, %v4862
        %vm4864 = vcmp.lt.s32.totalorder %v4845, 1
        %vm4865 = vcmp.lt.s32.totalorder %v4845, 2
        %vm4866 = vcmp.lt.s32.totalorder %v4845, 3
        %vm4867 = vcmp.lt.s32.totalorder %v4845, 4
        %v4868 = vsel %vm4864, %v4848, %v4851
        %v4869 = vsel %vm4867, %v4857, 2102212464
        %v4870 = vsel %vm4866, %v4854, %v4869
        %v4871 = vsel %vm4865, %v4868, %v4870
        %v4872 = vsel %vm4864, %v4851, %v4854
        %v4873 = vsel %vm4867, %v4860, 920167782
        %v4874 = vsel %vm4866, %v4857, %v4873
        %v4875 = vsel %vm4865, %v4872, %v4874
        %v4876 = vsel %vm4864, %v4854, %v4857
        %v4877 = vsel %vm4867, %v4863, 1326507024
        %v4878 = vsel %vm4866, %v4860, %v4877
        %v4879 = vsel %vm4865, %v4876, %v4878
        %v4880 = vshll.u32 %v4840, 8
        %v4881 = vmul.u32.u64.compose %v4880, %v4879
        %v4882 = vextract.low.u32 %v4881
        %v4883 = vextract.high.u32 %v4881
        %v4884 = vmul.u32.u64.compose %v4880, %v4875
        %v4885 = vextract.low.u32 %v4884
        %v4886 = vextract.high.u32 %v4884
        %v4887 = vmul.u32 %v4880, %v4871
        %v4888 = vadd.s32 %v4883, %v4885
        %vm4889 = vc.u32 %v4883, %v4885
        %v4890 = vadd.s32 %v4886, 1
        %v4891 = vsel %vm4889, %v4890, %v4886
        %v4892 = vadd.s32 %v4887, %v4891
        %v4893 = vadd.s32 %v4892, 536870912
        %v4894 = vshrl.u32 %v4893, 30
        %v4895 = vshll.u32 %v4894, 30
        %v4896 = vsub.s32 %v4892, %v4895
        %vm4897 = vcmp.lt.s32.totalorder %v4896, 0
        %v4898 = vsub.s32 0, %v4896
        %v4899 = vsel %vm4897, %v4898, %v4896
        %v4900 = vclz %v4899
        %v4901 = vsub.s32 %v4900, 2
        %vm4902 = vcmp.gt.s32.totalorder 0, %v4901
        %v4903 = vsel %vm4902, 0, %v4901
        %v4904 = vsub.s32 32, %v4903
        %v4905 = vshll.u32 %v4896, %v4903
        %v4906 = vshrl.u32 %v4888, %v4904
        %v4907 = vor.u32 %v4905, %v4906
        %v4908 = vsub.s32 4294967266, %v4903
        %v4909 = vadd.s32 %v4908, 127
        %v4910 = vshll.u32 %v4909, 23
        %v4911 = vor.u32 4788187, %v4910
        %v4912 = vand.u32 2147483647, %v4911
        %v4914 = vcvt.s32.f32 %v4907
        %v4915 = vmul.f32 %v4914, %v4912
        %v4916 = vxor.u32 %v4915, 2147483648
        %v4917 = vsel %vm4834, %v4916, %v4915
        %v4918 = vsub.s32 4, %v4894
        %v4919 = vsel %vm4834, %v4918, %v4894
        %v4920 = vsel %vm4833, %v4517, %v4917
        %v4921 = vsel %vm4833, 0, %v4919
        %v4922 = vcosq.f32.pop %v4920
        %v4923 = vsinq.f32.pop %v4920
        %vm4924 = vweird.f32 %v4517
        %v4925 = vadd.s32 %v4921, 3
        %v4926 = vand.u32 %v4925, 3
        %vm4927 = vcmp.lt.s32.totalorder %v4926, 2
        %vm4928 = vcmp.eq.s32.totalorder %v4926, 0
        %v4929 = vxor.u32 %v4923, 2147483648
        %v4930 = vsel %vm4928, %v4922, %v4929
        %vm4931 = vcmp.eq.s32.totalorder %v4926, 2
        %v4932 = vxor.u32 %v4922, 2147483648
        %v4933 = vsel %vm4931, %v4932, %v4923
        %v4934 = vsel %vm4927, %v4930, %v4933
        %v4935 = vsel %vm4924, nan, %v4934
        %v4936 = vand.u32 2147483647, %v4518
        %vm4937 = vcmp.le.f32.partialorder %v4936, 0.7853982
        %vm4938 = vcmp.lt.s32.totalorder %v4518, 0
        %v4939 = vand.u32 %v4518, 2139095040
        %v4940 = vshrl.u32 %v4939, 23
        %v4941 = vsub.s32 %v4940, 127
        %v4942 = vand.u32 2147483647, %v4518
        %v4943 = vand.u32 %v4942, 8388607
        %v4944 = vor.u32 %v4943, 8388608
        %v4945 = vsub.s32 0, %v4944
        %v4946 = vadd.s32 %v4941, 1
        %vm4947 = vcmp.gt.s32.totalorder %v4946, 0
        %v4948 = vsel %vm4947, %v4946, 0
        %v4949 = vshrl.u32 %v4948, 5
        %v4950 = vand.u32 %v4948, 31
        %v4951 = vsub.s32 32, %v4950
        %v4952 = vshrl.u32 683565275, %v4951
        %v4953 = vshll.u32 683565275, %v4950
        %v4954 = vshrl.u32 2475754826, %v4951
        %v4955 = vor.u32 %v4953, %v4954
        %v4956 = vshll.u32 2475754826, %v4950
        %v4957 = vshrl.u32 2131351028, %v4951
        %v4958 = vor.u32 %v4956, %v4957
        %v4959 = vshll.u32 2131351028, %v4950
        %v4960 = vshrl.u32 2102212464, %v4951
        %v4961 = vor.u32 %v4959, %v4960
        %v4962 = vshll.u32 2102212464, %v4950
        %v4963 = vshrl.u32 920167782, %v4951
        %v4964 = vor.u32 %v4962, %v4963
        %v4965 = vshll.u32 920167782, %v4950
        %v4966 = vshrl.u32 1326507024, %v4951
        %v4967 = vor.u32 %v4965, %v4966
        %vm4968 = vcmp.lt.s32.totalorder %v4949, 1
        %vm4969 = vcmp.lt.s32.totalorder %v4949, 2
        %vm4970 = vcmp.lt.s32.totalorder %v4949, 3
        %vm4971 = vcmp.lt.s32.totalorder %v4949, 4
        %v4972 = vsel %vm4968, %v4952, %v4955
        %v4973 = vsel %vm4971, %v4961, 2102212464
        %v4974 = vsel %vm4970, %v4958, %v4973
        %v4975 = vsel %vm4969, %v4972, %v4974
        %v4976 = vsel %vm4968, %v4955, %v4958
        %v4977 = vsel %vm4971, %v4964, 920167782
        %v4978 = vsel %vm4970, %v4961, %v4977
        %v4979 = vsel %vm4969, %v4976, %v4978
        %v4980 = vsel %vm4968, %v4958, %v4961
        %v4981 = vsel %vm4971, %v4967, 1326507024
        %v4982 = vsel %vm4970, %v4964, %v4981
        %v4983 = vsel %vm4969, %v4980, %v4982
        %v4984 = vshll.u32 %v4944, 8
        %v4985 = vmul.u32.u64.compose %v4984, %v4983
        %v4986 = vextract.low.u32 %v4985
        %v4987 = vextract.high.u32 %v4985
        %v4988 = vmul.u32.u64.compose %v4984, %v4979
        %v4989 = vextract.low.u32 %v4988
        %v4990 = vextract.high.u32 %v4988
        %v4991 = vmul.u32 %v4984, %v4975
        %v4992 = vadd.s32 %v4987, %v4989
        %vm4993 = vc.u32 %v4987, %v4989
        %v4994 = vadd.s32 %v4990, 1
        %v4995 = vsel %vm4993, %v4994, %v4990
        %v4996 = vadd.s32 %v4991, %v4995
        %v4997 = vadd.s32 %v4996, 536870912
        %v4998 = vshrl.u32 %v4997, 30
        %v4999 = vshll.u32 %v4998, 30
        %v5000 = vsub.s32 %v4996, %v4999
        %vm5001 = vcmp.lt.s32.totalorder %v5000, 0
        %v5002 = vsub.s32 0, %v5000
        %v5003 = vsel %vm5001, %v5002, %v5000
        %v5004 = vclz %v5003
        %v5005 = vsub.s32 %v5004, 2
        %vm5006 = vcmp.gt.s32.totalorder 0, %v5005
        %v5007 = vsel %vm5006, 0, %v5005
        %v5008 = vsub.s32 32, %v5007
        %v5009 = vshll.u32 %v5000, %v5007
        %v5010 = vshrl.u32 %v4992, %v5008
        %v5011 = vor.u32 %v5009, %v5010
        %v5012 = vsub.s32 4294967266, %v5007
        %v5013 = vadd.s32 %v5012, 127
        %v5014 = vshll.u32 %v5013, 23
        %v5015 = vor.u32 4788187, %v5014
        %v5016 = vand.u32 2147483647, %v5015
        %v5018 = vcvt.s32.f32 %v5011
        %v5019 = vmul.f32 %v5018, %v5016
        %v5020 = vxor.u32 %v5019, 2147483648
        %v5021 = vsel %vm4938, %v5020, %v5019
        %v5022 = vsub.s32 4, %v4998
        %v5023 = vsel %vm4938, %v5022, %v4998
        %v5024 = vsel %vm4937, %v4518, %v5021
        %v5025 = vsel %vm4937, 0, %v5023
        %v5026 = vcosq.f32.pop %v5024
        %v5027 = vsinq.f32.pop %v5024
        %vm5028 = vweird.f32 %v4518
        %v5029 = vadd.s32 %v5025, 3
        %v5030 = vand.u32 %v5029, 3
        %vm5031 = vcmp.lt.s32.totalorder %v5030, 2
        %vm5032 = vcmp.eq.s32.totalorder %v5030, 0
        %v5033 = vxor.u32 %v5027, 2147483648
        %v5034 = vsel %vm5032, %v5026, %v5033
        %vm5035 = vcmp.eq.s32.totalorder %v5030, 2
        %v5036 = vxor.u32 %v5026, 2147483648
        %v5037 = vsel %vm5035, %v5036, %v5027
        %v5038 = vsel %vm5031, %v5034, %v5037
        %v5039 = vsel %vm5028, nan, %v5038
        %v5040 = vand.u32 2147483647, %v4519
        %vm5041 = vcmp.le.f32.partialorder %v5040, 0.7853982
        %vm5042 = vcmp.lt.s32.totalorder %v4519, 0
        %v5043 = vand.u32 %v4519, 2139095040
        %v5044 = vshrl.u32 %v5043, 23
        %v5045 = vsub.s32 %v5044, 127
        %v5046 = vand.u32 2147483647, %v4519
        %v5047 = vand.u32 %v5046, 8388607
        %v5048 = vor.u32 %v5047, 8388608
        %v5049 = vsub.s32 0, %v5048
        %v5050 = vadd.s32 %v5045, 1
        %vm5051 = vcmp.gt.s32.totalorder %v5050, 0
        %v5052 = vsel %vm5051, %v5050, 0
        %v5053 = vshrl.u32 %v5052, 5
        %v5054 = vand.u32 %v5052, 31
        %v5055 = vsub.s32 32, %v5054
        %v5056 = vshrl.u32 683565275, %v5055
        %v5057 = vshll.u32 683565275, %v5054
        %v5058 = vshrl.u32 2475754826, %v5055
        %v5059 = vor.u32 %v5057, %v5058
        %v5060 = vshll.u32 2475754826, %v5054
        %v5061 = vshrl.u32 2131351028, %v5055
        %v5062 = vor.u32 %v5060, %v5061
        %v5063 = vshll.u32 2131351028, %v5054
        %v5064 = vshrl.u32 2102212464, %v5055
        %v5065 = vor.u32 %v5063, %v5064
        %v5066 = vshll.u32 2102212464, %v5054
        %v5067 = vshrl.u32 920167782, %v5055
        %v5068 = vor.u32 %v5066, %v5067
        %v5069 = vshll.u32 920167782, %v5054
        %v5070 = vshrl.u32 1326507024, %v5055
        %v5071 = vor.u32 %v5069, %v5070
        %vm5072 = vcmp.lt.s32.totalorder %v5053, 1
        %vm5073 = vcmp.lt.s32.totalorder %v5053, 2
        %vm5074 = vcmp.lt.s32.totalorder %v5053, 3
        %vm5075 = vcmp.lt.s32.totalorder %v5053, 4
        %v5076 = vsel %vm5072, %v5056, %v5059
        %v5077 = vsel %vm5075, %v5065, 2102212464
        %v5078 = vsel %vm5074, %v5062, %v5077
        %v5079 = vsel %vm5073, %v5076, %v5078
        %v5080 = vsel %vm5072, %v5059, %v5062
        %v5081 = vsel %vm5075, %v5068, 920167782
        %v5082 = vsel %vm5074, %v5065, %v5081
        %v5083 = vsel %vm5073, %v5080, %v5082
        %v5084 = vsel %vm5072, %v5062, %v5065
        %v5085 = vsel %vm5075, %v5071, 1326507024
        %v5086 = vsel %vm5074, %v5068, %v5085
        %v5087 = vsel %vm5073, %v5084, %v5086
        %v5088 = vshll.u32 %v5048, 8
        %v5089 = vmul.u32.u64.compose %v5088, %v5087
        %v5090 = vextract.low.u32 %v5089
        %v5091 = vextract.high.u32 %v5089
        %v5092 = vmul.u32.u64.compose %v5088, %v5083
        %v5093 = vextract.low.u32 %v5092
        %v5094 = vextract.high.u32 %v5092
        %v5095 = vmul.u32 %v5088, %v5079
        %v5096 = vadd.s32 %v5091, %v5093
        %vm5097 = vc.u32 %v5091, %v5093
        %v5098 = vadd.s32 %v5094, 1
        %v5099 = vsel %vm5097, %v5098, %v5094
        %v5100 = vadd.s32 %v5095, %v5099
        %v5101 = vadd.s32 %v5100, 536870912
        %v5102 = vshrl.u32 %v5101, 30
        %v5103 = vshll.u32 %v5102, 30
        %v5104 = vsub.s32 %v5100, %v5103
        %vm5105 = vcmp.lt.s32.totalorder %v5104, 0
        %v5106 = vsub.s32 0, %v5104
        %v5107 = vsel %vm5105, %v5106, %v5104
        %v5108 = vclz %v5107
        %v5109 = vsub.s32 %v5108, 2
        %vm5110 = vcmp.gt.s32.totalorder 0, %v5109
        %v5111 = vsel %vm5110, 0, %v5109
        %v5112 = vsub.s32 32, %v5111
        %v5113 = vshll.u32 %v5104, %v5111
        %v5114 = vshrl.u32 %v5096, %v5112
        %v5115 = vor.u32 %v5113, %v5114
        %v5116 = vsub.s32 4294967266, %v5111
        %v5117 = vadd.s32 %v5116, 127
        %v5118 = vshll.u32 %v5117, 23
        %v5119 = vor.u32 4788187, %v5118
        %v5120 = vand.u32 2147483647, %v5119
        %v5122 = vcvt.s32.f32 %v5115
        %v5123 = vmul.f32 %v5122, %v5120
        %v5124 = vxor.u32 %v5123, 2147483648
        %v5125 = vsel %vm5042, %v5124, %v5123
        %v5126 = vsub.s32 4, %v5102
        %v5127 = vsel %vm5042, %v5126, %v5102
        %v5128 = vsel %vm5041, %v4519, %v5125
        %v5129 = vsel %vm5041, 0, %v5127
        %v5130 = vcosq.f32.pop %v5128
        %v5131 = vsinq.f32.pop %v5128
        %vm5132 = vweird.f32 %v4519
        %v5133 = vadd.s32 %v5129, 3
        %v5134 = vand.u32 %v5133, 3
        %vm5135 = vcmp.lt.s32.totalorder %v5134, 2
        %vm5136 = vcmp.eq.s32.totalorder %v5134, 0
        %v5137 = vxor.u32 %v5131, 2147483648
        %v5138 = vsel %vm5136, %v5130, %v5137
        %vm5139 = vcmp.eq.s32.totalorder %v5134, 2
        %v5140 = vxor.u32 %v5130, 2147483648
        %v5141 = vsel %vm5139, %v5140, %v5131
        %v5142 = vsel %vm5135, %v5138, %v5141
        %v5143 = vsel %vm5132, nan, %v5142
        %v5144 = vmul.f32 %v4623, %v4623
        %v5145 = vmul.f32 %v4727, %v4727
        %v5146 = vmul.f32 %v4831, %v4831
        %v5147 = vmul.f32 %v4935, %v4935
        %v5148 = vmul.f32 %v5039, %v5039
        %v5149 = vmul.f32 %v5143, %v5143
        %v5151 = vlaneseq
        %v5152 = vshrl.u32 %v5151, 7
        %v5153 = vsub.s32 0, %v5152
        %v5154 = vrot.slane %v4507, %v5153
        %v5156 = vmul.f32 %v5154, %v5144
        %v5157 = vmul.f32 %v5154, %v5145
        %v5158 = vmul.f32 %v5154, %v5146
        %v5159 = vmul.f32 %v5154, %v5147
        %v5160 = vmul.f32 %v5154, %v5148
        %v5161 = vmul.f32 %v5154, %v5149
        %v5162 = vadd.f32 %v4498, %v5156
        %v5163 = vadd.f32 %v4499, %v5157
        %v5164 = vadd.f32 %v4500, %v5158
        %v5165 = vadd.f32 %v4501, %v5159
        %v5166 = vadd.f32 %v4502, %v5160
        %v5167 = vadd.f32 %v4503, %v5161
        %s5168 = scalar_lea.vmem [#allocation7], 2
        %v5169 = vld [vmem:[%s5168] sm:$0x1]
        %v5175 = vrot.slane %v5162, 5
        %v5176 = vrot.slane %v5163, 5
        %v5177 = vsel %vm3567, %v5175, %v5176
        %v5178 = vrot.slane %v5164, 5
        %v5179 = vsel %vm3567, %v5176, %v5178
        %v5180 = vrot.slane %v5165, 5
        %v5181 = vsel %vm3567, %v5178, %v5180
        %v5182 = vrot.slane %v5166, 5
        %v5183 = vsel %vm3567, %v5180, %v5182
        %5184 = vrot.lane.b32.xlu0 %v5177, 64
        %v5185 = vpop.permute.xlu0 %5184
        %5186 = vrot.lane.b32.xlu0 %v5179, 64
        %v5187 = vpop.permute.xlu0 %5186
        %5188 = vrot.lane.b32.xlu0 %v5181, 64
        %v5189 = vpop.permute.xlu0 %5188
        %5190 = vrot.lane.b32.xlu0 %v5183, 64
        %v5191 = vpop.permute.xlu0 %5190
        %5192 = vrot.lane.b32.xlu0 %v5182, 64
        %v5193 = vpop.permute.xlu0 %5192
        %v5200 = vrot.slane %v5163, 2
        %v5201 = vrot.slane %v5164, 2
        %v5202 = vsel %vm1359, %v5200, %v5201
        %v5203 = vrot.slane %v5165, 2
        %v5204 = vsel %vm1359, %v5201, %v5203
        %v5205 = vrot.slane %v5166, 2
        %v5206 = vsel %vm1359, %v5203, %v5205
        %v5207 = vrot.slane %v5167, 2
        %v5208 = vsel %vm1359, %v5205, %v5207
        %v5209 = vsel %vm1373, %v5162, %v5185
        %v5210 = vsel %vm1373, %v5163, %v5187
        %v5211 = vsel %vm1373, %v5164, %v5189
        %v5212 = vsel %vm1373, %v5165, %v5191
        %v5213 = vsel %vm1373, %v5166, %v5193
        %s5214 = scalar_lea.vmem [#allocation5], 384
        %v5215 = vld [vmem:[%s5214] sm:$0xff]
        %v5216 = vld [vmem:[%s5214 + $0x8] sm:$0xff]
        %v5217 = vld [vmem:[%s5214 + $0x10] sm:$0xff]
        %v5218 = vld [vmem:[%s5214 + $0x18] sm:$0xff]
        %v5219 = vld [vmem:[%s5214 + $0x20] sm:$0xff]
        %v5220 = vld [vmem:[%s5214 + $0x28] sm:$0xff]
        %v5221 = vld [vmem:[%s5214 + $0x30] sm:$0xff]
        %v5222 = vld [vmem:[%s5214 + $0x38] sm:$0xff]
        %v5223 = vld [vmem:[%s5214 + $0x40] sm:$0xff]
        %v5224 = vld [vmem:[%s5214 + $0x48] sm:$0xff]
        %v5225 = vld [vmem:[%s5214 + $0x50] sm:$0xff]
        %v5226 = vld [vmem:[%s5214 + $0x58] sm:$0xff]
        %v5227 = vld [vmem:[%s5214 + $0x60] sm:$0xff]
        %v5228 = vld [vmem:[%s5214 + $0x68] sm:$0xff]
        %v5229 = vld [vmem:[%s5214 + $0x70] sm:$0xff]
        %v5230 = vld [vmem:[%s5214 + $0x78] sm:$0xff]
        %v5231 = vld [vmem:[%s5214 + $0x80] sm:$0xff]
        %v5232 = vld [vmem:[%s5214 + $0x88] sm:$0xff]
        %v5233 = vld [vmem:[%s5214 + $0x90] sm:$0xff]
        %v5234 = vld [vmem:[%s5214 + $0x98] sm:$0xff]
        %v5235 = vld [vmem:[%s5214 + $0xa0] sm:$0xff]
        %v5236 = vld [vmem:[%s5214 + $0xa8] sm:$0xff]
        %v5237 = vld [vmem:[%s5214 + $0xb0] sm:$0xff]
        %v5238 = vld [vmem:[%s5214 + $0xb8] sm:$0xff]
        %v5240 = vlaneseq
        %v5241 = vshrl.u32 %v5240, 7
        %v5242 = vsub.s32 0, %v5241
        %v5243 = vrot.slane %v5169, %v5242
        %v5245 = vsel %vm1373, %v5202, 0
        %v5247 = vsel %vm1373, %v5204, 0
        %v5249 = vsel %vm1373, %v5206, 0
        %v5251 = vsel %vm1373, %v5208, 0
        %v5253 = vsel %vm1373, %v5207, 0
        %5255 = vmatprep.subr.mxu0 0.0
        %5256 = vmatpush1.msra.mxu0 %v5215
        %5257 = vmatprep.subr.mxu0 0.0
        %5258 = vmatpush1.msra.mxu0 %v5216
        %5259 = vmatprep.subr.mxu0 0.0
        %5260 = vmatpush1.msra.mxu0 %v5217
        %5261 = vmatprep.subr.mxu0 0.0
        %5262 = vmatpush1.msra.mxu0 %v5218
        %5263 = vmatprep.subr.mxu0 0.0
        %5264 = vmatpush1.msra.mxu0 %v5219
        %5265 = vmatprep.subr.mxu0 0.0
        %5266 = vmatpush1.msra.mxu0 %v5220
        %5267 = vmatprep.subr.mxu0 0.0
        %5268 = vmatpush1.msra.mxu0 %v5221
        %5269 = vmatprep.subr.mxu0 0.0
        %5270 = vmatpush1.msra.mxu0 %v5222
        %5271 = vmatprep.subr.mxu0 0.0
        %5272 = vmatpush1.msra.mxu0 %v5223
        %5273 = vmatprep.subr.mxu0 0.0
        %5274 = vmatpush1.msra.mxu0 %v5224
        %5275 = vmatprep.subr.mxu0 0.0
        %5276 = vmatpush1.msra.mxu0 %v5225
        %5277 = vmatprep.subr.mxu0 0.0
        %5278 = vmatpush1.msra.mxu0 %v5226
        %5279 = vmatprep.subr.mxu0 0.0
        %5280 = vmatpush1.msra.mxu0 %v5227
        %5281 = vmatprep.subr.mxu0 0.0
        %5282 = vmatpush1.msra.mxu0 %v5228
        %5283 = vmatprep.subr.mxu0 0.0
        %5284 = vmatpush1.msra.mxu0 %v5229
        %5285 = vmatprep.subr.mxu0 0.0
        %5286 = vmatpush1.msra.mxu0 %v5230
        %5287 = vmatprep.subr.mxu0 0.0
        %5288 = vmatpush1.msra.mxu0 %v5231
        %5289 = vmatprep.subr.mxu0 0.0
        %5290 = vmatpush1.msra.mxu0 %v5232
        %5291 = vmatprep.subr.mxu0 0.0
        %5292 = vmatpush1.msra.mxu0 %v5233
        %5293 = vmatprep.subr.mxu0 0.0
        %5294 = vmatpush1.msra.mxu0 %v5234
        %5295 = vmatprep.subr.mxu0 0.0
        %5296 = vmatpush1.msra.mxu0 %v5235
        %5297 = vmatprep.subr.mxu0 0.0
        %5298 = vmatpush1.msra.mxu0 %v5236
        %5299 = vmatprep.subr.mxu0 0.0
        %5300 = vmatpush1.msra.mxu0 %v5237
        %5301 = vmatprep.subr.mxu0 0.0
        %5302 = vmatpush1.msra.mxu0 %v5238
        %5303 = vmatprep.subr.mxu0 0.0
        %5304 = vmatpush1.msra.mxu0 0.0
        %5305 = vmatprep.subr.mxu0 0.0
        %5306 = vmatpush1.msra.mxu0 0.0
        %5307 = vmatprep.subr.mxu0 0.0
        %5308 = vmatpush1.msra.mxu0 0.0
        %5309 = vmatprep.subr.mxu0 0.0
        %5310 = vmatpush1.msra.mxu0 0.0
        %5311 = vmatprep.subr.mxu0 0.0
        %5312 = vmatpush1.msra.mxu0 0.0
        %5313 = vmatprep.subr.mxu0 0.0
        %5314 = vmatpush1.msra.mxu0 0.0
        %5315 = vmatprep.subr.mxu0 0.0
        %5316 = vmatpush1.msra.mxu0 0.0
        %5317 = vmatprep.subr.mxu0 0.0
        %5318 = vmatpush1.msra.mxu0 0.0
        %5319 = vmatprep.mubr.f32.mxu0 %v5245
        %5320 = vmatmul.mubr.f32.gmra.mrb[0].mxu0 %v5209
        %v5321 = vpop.f32.mrb[0].mxu0
        %v5322 = vadd.f32 %v5243, %v5321
        %v5323 = vpop.f32.mrb[0].mxu0
        %5324 = vmatprep.mubr.f32.mxu0 %v5247
        %5325 = vmatmul.mubr.f32.gmra.mrb[0].mxu0 %v5210
        %v5326 = vpop.f32.mrb[0].mxu0
        %v5327 = vadd.f32 %v5243, %v5326
        %v5328 = vpop.f32.mrb[0].mxu0
        %5329 = vmatprep.mubr.f32.mxu0 %v5249
        %5330 = vmatmul.mubr.f32.gmra.mrb[0].mxu0 %v5211
        %v5331 = vpop.f32.mrb[0].mxu0
        %v5332 = vadd.f32 %v5243, %v5331
        %v5333 = vpop.f32.mrb[0].mxu0
        %5334 = vmatprep.mubr.f32.mxu0 %v5251
        %5335 = vmatmul.mubr.f32.gmra.mrb[0].mxu0 %v5212
        %v5336 = vpop.f32.mrb[0].mxu0
        %v5337 = vadd.f32 %v5243, %v5336
        %v5338 = vpop.f32.mrb[0].mxu0
        %5339 = vmatprep.mubr.f32.mxu0 %v5253
        %5340 = vmatmul.mubr.f32.gmra.mrb[0].mxu0 %v5213
        %v5341 = vpop.f32.mrb[0].mxu0
        %v5342 = vadd.f32 %v5243, %v5341
        %v5343 = vpop.f32.mrb[0].mxu0
        %5344 = vdwg.mxu0
        %v5345 = vrot.slane %v540, 3
        %v5346 = vrot.slane %v541, 3
        %v5347 = vsel %vm3377, %v5345, %v5346
        %v5348 = vrot.slane %v542, 3
        %v5349 = vsel %vm3377, %v5346, %v5348
        %v5350 = vrot.slane %v543, 3
        %v5351 = vsel %vm3377, %v5348, %v5350
        %v5352 = vrot.slane %v544, 3
        %v5353 = vsel %vm3377, %v5350, %v5352
        %v5359 = vmul.f32 %v5322, %v5347
        %v5360 = vmul.f32 %v5327, %v5349
        %v5361 = vmul.f32 %v5332, %v5351
        %v5362 = vmul.f32 %v5337, %v5353
        %v5363 = vmul.f32 %v5342, %v5352
        %s5364 = scalar_lea.vmem [#allocation14], 2
        %v5365 = vld [vmem:[%s5364] sm:$0x1]
        %s5366 = scalar_lea.vmem [#allocation16], 2
        %v5367 = vld [vmem:[%s5366] sm:$0x1]
        %v5369 = vlaneseq
        %v5370 = vshrl.u32 %v5369, 7
        %v5371 = vsub.s32 0, %v5370
        %v5372 = vrot.slane %v5365, %v5371
        %v5374 = vmul.f32 %v5359, %v5372
        %v5375 = vmul.f32 %v5360, %v5372
        %v5376 = vmul.f32 %v5361, %v5372
        %v5377 = vmul.f32 %v5362, %v5372
        %v5378 = vmul.f32 %v5363, %v5372
        %v5379 = vand.u32 2147483647, %v5374
        %vm5380 = vcmp.le.f32.partialorder %v5379, 0.7853982
        %vm5381 = vcmp.lt.s32.totalorder %v5374, 0
        %v5382 = vand.u32 %v5374, 2139095040
        %v5383 = vshrl.u32 %v5382, 23
        %v5384 = vsub.s32 %v5383, 127
        %v5385 = vand.u32 2147483647, %v5374
        %v5386 = vand.u32 %v5385, 8388607
        %v5387 = vor.u32 %v5386, 8388608
        %v5388 = vsub.s32 0, %v5387
        %v5389 = vadd.s32 %v5384, 1
        %vm5390 = vcmp.gt.s32.totalorder %v5389, 0
        %v5391 = vsel %vm5390, %v5389, 0
        %v5392 = vshrl.u32 %v5391, 5
        %v5393 = vand.u32 %v5391, 31
        %v5394 = vsub.s32 32, %v5393
        %v5395 = vshrl.u32 683565275, %v5394
        %v5396 = vshll.u32 683565275, %v5393
        %v5397 = vshrl.u32 2475754826, %v5394
        %v5398 = vor.u32 %v5396, %v5397
        %v5399 = vshll.u32 2475754826, %v5393
        %v5400 = vshrl.u32 2131351028, %v5394
        %v5401 = vor.u32 %v5399, %v5400
        %v5402 = vshll.u32 2131351028, %v5393
        %v5403 = vshrl.u32 2102212464, %v5394
        %v5404 = vor.u32 %v5402, %v5403
        %v5405 = vshll.u32 2102212464, %v5393
        %v5406 = vshrl.u32 920167782, %v5394
        %v5407 = vor.u32 %v5405, %v5406
        %v5408 = vshll.u32 920167782, %v5393
        %v5409 = vshrl.u32 1326507024, %v5394
        %v5410 = vor.u32 %v5408, %v5409
        %vm5411 = vcmp.lt.s32.totalorder %v5392, 1
        %vm5412 = vcmp.lt.s32.totalorder %v5392, 2
        %vm5413 = vcmp.lt.s32.totalorder %v5392, 3
        %vm5414 = vcmp.lt.s32.totalorder %v5392, 4
        %v5415 = vsel %vm5411, %v5395, %v5398
        %v5416 = vsel %vm5414, %v5404, 2102212464
        %v5417 = vsel %vm5413, %v5401, %v5416
        %v5418 = vsel %vm5412, %v5415, %v5417
        %v5419 = vsel %vm5411, %v5398, %v5401
        %v5420 = vsel %vm5414, %v5407, 920167782
        %v5421 = vsel %vm5413, %v5404, %v5420
        %v5422 = vsel %vm5412, %v5419, %v5421
        %v5423 = vsel %vm5411, %v5401, %v5404
        %v5424 = vsel %vm5414, %v5410, 1326507024
        %v5425 = vsel %vm5413, %v5407, %v5424
        %v5426 = vsel %vm5412, %v5423, %v5425
        %v5427 = vshll.u32 %v5387, 8
        %v5428 = vmul.u32.u64.compose %v5427, %v5426
        %v5429 = vextract.low.u32 %v5428
        %v5430 = vextract.high.u32 %v5428
        %v5431 = vmul.u32.u64.compose %v5427, %v5422
        %v5432 = vextract.low.u32 %v5431
        %v5433 = vextract.high.u32 %v5431
        %v5434 = vmul.u32 %v5427, %v5418
        %v5435 = vadd.s32 %v5430, %v5432
        %vm5436 = vc.u32 %v5430, %v5432
        %v5437 = vadd.s32 %v5433, 1
        %v5438 = vsel %vm5436, %v5437, %v5433
        %v5439 = vadd.s32 %v5434, %v5438
        %v5440 = vadd.s32 %v5439, 536870912
        %v5441 = vshrl.u32 %v5440, 30
        %v5442 = vshll.u32 %v5441, 30
        %v5443 = vsub.s32 %v5439, %v5442
        %vm5444 = vcmp.lt.s32.totalorder %v5443, 0
        %v5445 = vsub.s32 0, %v5443
        %v5446 = vsel %vm5444, %v5445, %v5443
        %v5447 = vclz %v5446
        %v5448 = vsub.s32 %v5447, 2
        %vm5449 = vcmp.gt.s32.totalorder 0, %v5448
        %v5450 = vsel %vm5449, 0, %v5448
        %v5451 = vsub.s32 32, %v5450
        %v5452 = vshll.u32 %v5443, %v5450
        %v5453 = vshrl.u32 %v5435, %v5451
        %v5454 = vor.u32 %v5452, %v5453
        %v5455 = vsub.s32 4294967266, %v5450
        %v5456 = vadd.s32 %v5455, 127
        %v5457 = vshll.u32 %v5456, 23
        %v5458 = vor.u32 4788187, %v5457
        %v5459 = vand.u32 2147483647, %v5458
        %v5461 = vcvt.s32.f32 %v5454
        %v5462 = vmul.f32 %v5461, %v5459
        %v5463 = vxor.u32 %v5462, 2147483648
        %v5464 = vsel %vm5381, %v5463, %v5462
        %v5465 = vsub.s32 4, %v5441
        %v5466 = vsel %vm5381, %v5465, %v5441
        %v5467 = vsel %vm5380, %v5374, %v5464
        %v5468 = vsel %vm5380, 0, %v5466
        %v5469 = vcosq.f32.pop %v5467
        %v5470 = vsinq.f32.pop %v5467
        %vm5471 = vweird.f32 %v5374
        %v5472 = vadd.s32 %v5468, 3
        %v5473 = vand.u32 %v5472, 3
        %vm5474 = vcmp.lt.s32.totalorder %v5473, 2
        %vm5475 = vcmp.eq.s32.totalorder %v5473, 0
        %v5476 = vxor.u32 %v5470, 2147483648
        %v5477 = vsel %vm5475, %v5469, %v5476
        %vm5478 = vcmp.eq.s32.totalorder %v5473, 2
        %v5479 = vxor.u32 %v5469, 2147483648
        %v5480 = vsel %vm5478, %v5479, %v5470
        %v5481 = vsel %vm5474, %v5477, %v5480
        %v5482 = vsel %vm5471, nan, %v5481
        %v5483 = vand.u32 2147483647, %v5375
        %vm5484 = vcmp.le.f32.partialorder %v5483, 0.7853982
        %vm5485 = vcmp.lt.s32.totalorder %v5375, 0
        %v5486 = vand.u32 %v5375, 2139095040
        %v5487 = vshrl.u32 %v5486, 23
        %v5488 = vsub.s32 %v5487, 127
        %v5489 = vand.u32 2147483647, %v5375
        %v5490 = vand.u32 %v5489, 8388607
        %v5491 = vor.u32 %v5490, 8388608
        %v5492 = vsub.s32 0, %v5491
        %v5493 = vadd.s32 %v5488, 1
        %vm5494 = vcmp.gt.s32.totalorder %v5493, 0
        %v5495 = vsel %vm5494, %v5493, 0
        %v5496 = vshrl.u32 %v5495, 5
        %v5497 = vand.u32 %v5495, 31
        %v5498 = vsub.s32 32, %v5497
        %v5499 = vshrl.u32 683565275, %v5498
        %v5500 = vshll.u32 683565275, %v5497
        %v5501 = vshrl.u32 2475754826, %v5498
        %v5502 = vor.u32 %v5500, %v5501
        %v5503 = vshll.u32 2475754826, %v5497
        %v5504 = vshrl.u32 2131351028, %v5498
        %v5505 = vor.u32 %v5503, %v5504
        %v5506 = vshll.u32 2131351028, %v5497
        %v5507 = vshrl.u32 2102212464, %v5498
        %v5508 = vor.u32 %v5506, %v5507
        %v5509 = vshll.u32 2102212464, %v5497
        %v5510 = vshrl.u32 920167782, %v5498
        %v5511 = vor.u32 %v5509, %v5510
        %v5512 = vshll.u32 920167782, %v5497
        %v5513 = vshrl.u32 1326507024, %v5498
        %v5514 = vor.u32 %v5512, %v5513
        %vm5515 = vcmp.lt.s32.totalorder %v5496, 1
        %vm5516 = vcmp.lt.s32.totalorder %v5496, 2
        %vm5517 = vcmp.lt.s32.totalorder %v5496, 3
        %vm5518 = vcmp.lt.s32.totalorder %v5496, 4
        %v5519 = vsel %vm5515, %v5499, %v5502
        %v5520 = vsel %vm5518, %v5508, 2102212464
        %v5521 = vsel %vm5517, %v5505, %v5520
        %v5522 = vsel %vm5516, %v5519, %v5521
        %v5523 = vsel %vm5515, %v5502, %v5505
        %v5524 = vsel %vm5518, %v5511, 920167782
        %v5525 = vsel %vm5517, %v5508, %v5524
        %v5526 = vsel %vm5516, %v5523, %v5525
        %v5527 = vsel %vm5515, %v5505, %v5508
        %v5528 = vsel %vm5518, %v5514, 1326507024
        %v5529 = vsel %vm5517, %v5511, %v5528
        %v5530 = vsel %vm5516, %v5527, %v5529
        %v5531 = vshll.u32 %v5491, 8
        %v5532 = vmul.u32.u64.compose %v5531, %v5530
        %v5533 = vextract.low.u32 %v5532
        %v5534 = vextract.high.u32 %v5532
        %v5535 = vmul.u32.u64.compose %v5531, %v5526
        %v5536 = vextract.low.u32 %v5535
        %v5537 = vextract.high.u32 %v5535
        %v5538 = vmul.u32 %v5531, %v5522
        %v5539 = vadd.s32 %v5534, %v5536
        %vm5540 = vc.u32 %v5534, %v5536
        %v5541 = vadd.s32 %v5537, 1
        %v5542 = vsel %vm5540, %v5541, %v5537
        %v5543 = vadd.s32 %v5538, %v5542
        %v5544 = vadd.s32 %v5543, 536870912
        %v5545 = vshrl.u32 %v5544, 30
        %v5546 = vshll.u32 %v5545, 30
        %v5547 = vsub.s32 %v5543, %v5546
        %vm5548 = vcmp.lt.s32.totalorder %v5547, 0
        %v5549 = vsub.s32 0, %v5547
        %v5550 = vsel %vm5548, %v5549, %v5547
        %v5551 = vclz %v5550
        %v5552 = vsub.s32 %v5551, 2
        %vm5553 = vcmp.gt.s32.totalorder 0, %v5552
        %v5554 = vsel %vm5553, 0, %v5552
        %v5555 = vsub.s32 32, %v5554
        %v5556 = vshll.u32 %v5547, %v5554
        %v5557 = vshrl.u32 %v5539, %v5555
        %v5558 = vor.u32 %v5556, %v5557
        %v5559 = vsub.s32 4294967266, %v5554
        %v5560 = vadd.s32 %v5559, 127
        %v5561 = vshll.u32 %v5560, 23
        %v5562 = vor.u32 4788187, %v5561
        %v5563 = vand.u32 2147483647, %v5562
        %v5565 = vcvt.s32.f32 %v5558
        %v5566 = vmul.f32 %v5565, %v5563
        %v5567 = vxor.u32 %v5566, 2147483648
        %v5568 = vsel %vm5485, %v5567, %v5566
        %v5569 = vsub.s32 4, %v5545
        %v5570 = vsel %vm5485, %v5569, %v5545
        %v5571 = vsel %vm5484, %v5375, %v5568
        %v5572 = vsel %vm5484, 0, %v5570
        %v5573 = vcosq.f32.pop %v5571
        %v5574 = vsinq.f32.pop %v5571
        %vm5575 = vweird.f32 %v5375
        %v5576 = vadd.s32 %v5572, 3
        %v5577 = vand.u32 %v5576, 3
        %vm5578 = vcmp.lt.s32.totalorder %v5577, 2
        %vm5579 = vcmp.eq.s32.totalorder %v5577, 0
        %v5580 = vxor.u32 %v5574, 2147483648
        %v5581 = vsel %vm5579, %v5573, %v5580
        %vm5582 = vcmp.eq.s32.totalorder %v5577, 2
        %v5583 = vxor.u32 %v5573, 2147483648
        %v5584 = vsel %vm5582, %v5583, %v5574
        %v5585 = vsel %vm5578, %v5581, %v5584
        %v5586 = vsel %vm5575, nan, %v5585
        %v5587 = vand.u32 2147483647, %v5376
        %vm5588 = vcmp.le.f32.partialorder %v5587, 0.7853982
        %vm5589 = vcmp.lt.s32.totalorder %v5376, 0
        %v5590 = vand.u32 %v5376, 2139095040
        %v5591 = vshrl.u32 %v5590, 23
        %v5592 = vsub.s32 %v5591, 127
        %v5593 = vand.u32 2147483647, %v5376
        %v5594 = vand.u32 %v5593, 8388607
        %v5595 = vor.u32 %v5594, 8388608
        %v5596 = vsub.s32 0, %v5595
        %v5597 = vadd.s32 %v5592, 1
        %vm5598 = vcmp.gt.s32.totalorder %v5597, 0
        %v5599 = vsel %vm5598, %v5597, 0
        %v5600 = vshrl.u32 %v5599, 5
        %v5601 = vand.u32 %v5599, 31
        %v5602 = vsub.s32 32, %v5601
        %v5603 = vshrl.u32 683565275, %v5602
        %v5604 = vshll.u32 683565275, %v5601
        %v5605 = vshrl.u32 2475754826, %v5602
        %v5606 = vor.u32 %v5604, %v5605
        %v5607 = vshll.u32 2475754826, %v5601
        %v5608 = vshrl.u32 2131351028, %v5602
        %v5609 = vor.u32 %v5607, %v5608
        %v5610 = vshll.u32 2131351028, %v5601
        %v5611 = vshrl.u32 2102212464, %v5602
        %v5612 = vor.u32 %v5610, %v5611
        %v5613 = vshll.u32 2102212464, %v5601
        %v5614 = vshrl.u32 920167782, %v5602
        %v5615 = vor.u32 %v5613, %v5614
        %v5616 = vshll.u32 920167782, %v5601
        %v5617 = vshrl.u32 1326507024, %v5602
        %v5618 = vor.u32 %v5616, %v5617
        %vm5619 = vcmp.lt.s32.totalorder %v5600, 1
        %vm5620 = vcmp.lt.s32.totalorder %v5600, 2
        %vm5621 = vcmp.lt.s32.totalorder %v5600, 3
        %vm5622 = vcmp.lt.s32.totalorder %v5600, 4
        %v5623 = vsel %vm5619, %v5603, %v5606
        %v5624 = vsel %vm5622, %v5612, 2102212464
        %v5625 = vsel %vm5621, %v5609, %v5624
        %v5626 = vsel %vm5620, %v5623, %v5625
        %v5627 = vsel %vm5619, %v5606, %v5609
        %v5628 = vsel %vm5622, %v5615, 920167782
        %v5629 = vsel %vm5621, %v5612, %v5628
        %v5630 = vsel %vm5620, %v5627, %v5629
        %v5631 = vsel %vm5619, %v5609, %v5612
        %v5632 = vsel %vm5622, %v5618, 1326507024
        %v5633 = vsel %vm5621, %v5615, %v5632
        %v5634 = vsel %vm5620, %v5631, %v5633
        %v5635 = vshll.u32 %v5595, 8
        %v5636 = vmul.u32.u64.compose %v5635, %v5634
        %v5637 = vextract.low.u32 %v5636
        %v5638 = vextract.high.u32 %v5636
        %v5639 = vmul.u32.u64.compose %v5635, %v5630
        %v5640 = vextract.low.u32 %v5639
        %v5641 = vextract.high.u32 %v5639
        %v5642 = vmul.u32 %v5635, %v5626
        %v5643 = vadd.s32 %v5638, %v5640
        %vm5644 = vc.u32 %v5638, %v5640
        %v5645 = vadd.s32 %v5641, 1
        %v5646 = vsel %vm5644, %v5645, %v5641
        %v5647 = vadd.s32 %v5642, %v5646
        %v5648 = vadd.s32 %v5647, 536870912
        %v5649 = vshrl.u32 %v5648, 30
        %v5650 = vshll.u32 %v5649, 30
        %v5651 = vsub.s32 %v5647, %v5650
        %vm5652 = vcmp.lt.s32.totalorder %v5651, 0
        %v5653 = vsub.s32 0, %v5651
        %v5654 = vsel %vm5652, %v5653, %v5651
        %v5655 = vclz %v5654
        %v5656 = vsub.s32 %v5655, 2
        %vm5657 = vcmp.gt.s32.totalorder 0, %v5656
        %v5658 = vsel %vm5657, 0, %v5656
        %v5659 = vsub.s32 32, %v5658
        %v5660 = vshll.u32 %v5651, %v5658
        %v5661 = vshrl.u32 %v5643, %v5659
        %v5662 = vor.u32 %v5660, %v5661
        %v5663 = vsub.s32 4294967266, %v5658
        %v5664 = vadd.s32 %v5663, 127
        %v5665 = vshll.u32 %v5664, 23
        %v5666 = vor.u32 4788187, %v5665
        %v5667 = vand.u32 2147483647, %v5666
        %v5669 = vcvt.s32.f32 %v5662
        %v5670 = vmul.f32 %v5669, %v5667
        %v5671 = vxor.u32 %v5670, 2147483648
        %v5672 = vsel %vm5589, %v5671, %v5670
        %v5673 = vsub.s32 4, %v5649
        %v5674 = vsel %vm5589, %v5673, %v5649
        %v5675 = vsel %vm5588, %v5376, %v5672
        %v5676 = vsel %vm5588, 0, %v5674
        %v5677 = vcosq.f32.pop %v5675
        %v5678 = vsinq.f32.pop %v5675
        %vm5679 = vweird.f32 %v5376
        %v5680 = vadd.s32 %v5676, 3
        %v5681 = vand.u32 %v5680, 3
        %vm5682 = vcmp.lt.s32.totalorder %v5681, 2
        %vm5683 = vcmp.eq.s32.totalorder %v5681, 0
        %v5684 = vxor.u32 %v5678, 2147483648
        %v5685 = vsel %vm5683, %v5677, %v5684
        %vm5686 = vcmp.eq.s32.totalorder %v5681, 2
        %v5687 = vxor.u32 %v5677, 2147483648
        %v5688 = vsel %vm5686, %v5687, %v5678
        %v5689 = vsel %vm5682, %v5685, %v5688
        %v5690 = vsel %vm5679, nan, %v5689
        %v5691 = vand.u32 2147483647, %v5377
        %vm5692 = vcmp.le.f32.partialorder %v5691, 0.7853982
        %vm5693 = vcmp.lt.s32.totalorder %v5377, 0
        %v5694 = vand.u32 %v5377, 2139095040
        %v5695 = vshrl.u32 %v5694, 23
        %v5696 = vsub.s32 %v5695, 127
        %v5697 = vand.u32 2147483647, %v5377
        %v5698 = vand.u32 %v5697, 8388607
        %v5699 = vor.u32 %v5698, 8388608
        %v5700 = vsub.s32 0, %v5699
        %v5701 = vadd.s32 %v5696, 1
        %vm5702 = vcmp.gt.s32.totalorder %v5701, 0
        %v5703 = vsel %vm5702, %v5701, 0
        %v5704 = vshrl.u32 %v5703, 5
        %v5705 = vand.u32 %v5703, 31
        %v5706 = vsub.s32 32, %v5705
        %v5707 = vshrl.u32 683565275, %v5706
        %v5708 = vshll.u32 683565275, %v5705
        %v5709 = vshrl.u32 2475754826, %v5706
        %v5710 = vor.u32 %v5708, %v5709
        %v5711 = vshll.u32 2475754826, %v5705
        %v5712 = vshrl.u32 2131351028, %v5706
        %v5713 = vor.u32 %v5711, %v5712
        %v5714 = vshll.u32 2131351028, %v5705
        %v5715 = vshrl.u32 2102212464, %v5706
        %v5716 = vor.u32 %v5714, %v5715
        %v5717 = vshll.u32 2102212464, %v5705
        %v5718 = vshrl.u32 920167782, %v5706
        %v5719 = vor.u32 %v5717, %v5718
        %v5720 = vshll.u32 920167782, %v5705
        %v5721 = vshrl.u32 1326507024, %v5706
        %v5722 = vor.u32 %v5720, %v5721
        %vm5723 = vcmp.lt.s32.totalorder %v5704, 1
        %vm5724 = vcmp.lt.s32.totalorder %v5704, 2
        %vm5725 = vcmp.lt.s32.totalorder %v5704, 3
        %vm5726 = vcmp.lt.s32.totalorder %v5704, 4
        %v5727 = vsel %vm5723, %v5707, %v5710
        %v5728 = vsel %vm5726, %v5716, 2102212464
        %v5729 = vsel %vm5725, %v5713, %v5728
        %v5730 = vsel %vm5724, %v5727, %v5729
        %v5731 = vsel %vm5723, %v5710, %v5713
        %v5732 = vsel %vm5726, %v5719, 920167782
        %v5733 = vsel %vm5725, %v5716, %v5732
        %v5734 = vsel %vm5724, %v5731, %v5733
        %v5735 = vsel %vm5723, %v5713, %v5716
        %v5736 = vsel %vm5726, %v5722, 1326507024
        %v5737 = vsel %vm5725, %v5719, %v5736
        %v5738 = vsel %vm5724, %v5735, %v5737
        %v5739 = vshll.u32 %v5699, 8
        %v5740 = vmul.u32.u64.compose %v5739, %v5738
        %v5741 = vextract.low.u32 %v5740
        %v5742 = vextract.high.u32 %v5740
        %v5743 = vmul.u32.u64.compose %v5739, %v5734
        %v5744 = vextract.low.u32 %v5743
        %v5745 = vextract.high.u32 %v5743
        %v5746 = vmul.u32 %v5739, %v5730
        %v5747 = vadd.s32 %v5742, %v5744
        %vm5748 = vc.u32 %v5742, %v5744
        %v5749 = vadd.s32 %v5745, 1
        %v5750 = vsel %vm5748, %v5749, %v5745
        %v5751 = vadd.s32 %v5746, %v5750
        %v5752 = vadd.s32 %v5751, 536870912
        %v5753 = vshrl.u32 %v5752, 30
        %v5754 = vshll.u32 %v5753, 30
        %v5755 = vsub.s32 %v5751, %v5754
        %vm5756 = vcmp.lt.s32.totalorder %v5755, 0
        %v5757 = vsub.s32 0, %v5755
        %v5758 = vsel %vm5756, %v5757, %v5755
        %v5759 = vclz %v5758
        %v5760 = vsub.s32 %v5759, 2
        %vm5761 = vcmp.gt.s32.totalorder 0, %v5760
        %v5762 = vsel %vm5761, 0, %v5760
        %v5763 = vsub.s32 32, %v5762
        %v5764 = vshll.u32 %v5755, %v5762
        %v5765 = vshrl.u32 %v5747, %v5763
        %v5766 = vor.u32 %v5764, %v5765
        %v5767 = vsub.s32 4294967266, %v5762
        %v5768 = vadd.s32 %v5767, 127
        %v5769 = vshll.u32 %v5768, 23
        %v5770 = vor.u32 4788187, %v5769
        %v5771 = vand.u32 2147483647, %v5770
        %v5773 = vcvt.s32.f32 %v5766
        %v5774 = vmul.f32 %v5773, %v5771
        %v5775 = vxor.u32 %v5774, 2147483648
        %v5776 = vsel %vm5693, %v5775, %v5774
        %v5777 = vsub.s32 4, %v5753
        %v5778 = vsel %vm5693, %v5777, %v5753
        %v5779 = vsel %vm5692, %v5377, %v5776
        %v5780 = vsel %vm5692, 0, %v5778
        %v5781 = vcosq.f32.pop %v5779
        %v5782 = vsinq.f32.pop %v5779
        %vm5783 = vweird.f32 %v5377
        %v5784 = vadd.s32 %v5780, 3
        %v5785 = vand.u32 %v5784, 3
        %vm5786 = vcmp.lt.s32.totalorder %v5785, 2
        %vm5787 = vcmp.eq.s32.totalorder %v5785, 0
        %v5788 = vxor.u32 %v5782, 2147483648
        %v5789 = vsel %vm5787, %v5781, %v5788
        %vm5790 = vcmp.eq.s32.totalorder %v5785, 2
        %v5791 = vxor.u32 %v5781, 2147483648
        %v5792 = vsel %vm5790, %v5791, %v5782
        %v5793 = vsel %vm5786, %v5789, %v5792
        %v5794 = vsel %vm5783, nan, %v5793
        %v5795 = vand.u32 2147483647, %v5378
        %vm5796 = vcmp.le.f32.partialorder %v5795, 0.7853982
        %vm5797 = vcmp.lt.s32.totalorder %v5378, 0
        %v5798 = vand.u32 %v5378, 2139095040
        %v5799 = vshrl.u32 %v5798, 23
        %v5800 = vsub.s32 %v5799, 127
        %v5801 = vand.u32 2147483647, %v5378
        %v5802 = vand.u32 %v5801, 8388607
        %v5803 = vor.u32 %v5802, 8388608
        %v5804 = vsub.s32 0, %v5803
        %v5805 = vadd.s32 %v5800, 1
        %vm5806 = vcmp.gt.s32.totalorder %v5805, 0
        %v5807 = vsel %vm5806, %v5805, 0
        %v5808 = vshrl.u32 %v5807, 5
        %v5809 = vand.u32 %v5807, 31
        %v5810 = vsub.s32 32, %v5809
        %v5811 = vshrl.u32 683565275, %v5810
        %v5812 = vshll.u32 683565275, %v5809
        %v5813 = vshrl.u32 2475754826, %v5810
        %v5814 = vor.u32 %v5812, %v5813
        %v5815 = vshll.u32 2475754826, %v5809
        %v5816 = vshrl.u32 2131351028, %v5810
        %v5817 = vor.u32 %v5815, %v5816
        %v5818 = vshll.u32 2131351028, %v5809
        %v5819 = vshrl.u32 2102212464, %v5810
        %v5820 = vor.u32 %v5818, %v5819
        %v5821 = vshll.u32 2102212464, %v5809
        %v5822 = vshrl.u32 920167782, %v5810
        %v5823 = vor.u32 %v5821, %v5822
        %v5824 = vshll.u32 920167782, %v5809
        %v5825 = vshrl.u32 1326507024, %v5810
        %v5826 = vor.u32 %v5824, %v5825
        %vm5827 = vcmp.lt.s32.totalorder %v5808, 1
        %vm5828 = vcmp.lt.s32.totalorder %v5808, 2
        %vm5829 = vcmp.lt.s32.totalorder %v5808, 3
        %vm5830 = vcmp.lt.s32.totalorder %v5808, 4
        %v5831 = vsel %vm5827, %v5811, %v5814
        %v5832 = vsel %vm5830, %v5820, 2102212464
        %v5833 = vsel %vm5829, %v5817, %v5832
        %v5834 = vsel %vm5828, %v5831, %v5833
        %v5835 = vsel %vm5827, %v5814, %v5817
        %v5836 = vsel %vm5830, %v5823, 920167782
        %v5837 = vsel %vm5829, %v5820, %v5836
        %v5838 = vsel %vm5828, %v5835, %v5837
        %v5839 = vsel %vm5827, %v5817, %v5820
        %v5840 = vsel %vm5830, %v5826, 1326507024
        %v5841 = vsel %vm5829, %v5823, %v5840
        %v5842 = vsel %vm5828, %v5839, %v5841
        %v5843 = vshll.u32 %v5803, 8
        %v5844 = vmul.u32.u64.compose %v5843, %v5842
        %v5845 = vextract.low.u32 %v5844
        %v5846 = vextract.high.u32 %v5844
        %v5847 = vmul.u32.u64.compose %v5843, %v5838
        %v5848 = vextract.low.u32 %v5847
        %v5849 = vextract.high.u32 %v5847
        %v5850 = vmul.u32 %v5843, %v5834
        %v5851 = vadd.s32 %v5846, %v5848
        %vm5852 = vc.u32 %v5846, %v5848
        %v5853 = vadd.s32 %v5849, 1
        %v5854 = vsel %vm5852, %v5853, %v5849
        %v5855 = vadd.s32 %v5850, %v5854
        %v5856 = vadd.s32 %v5855, 536870912
        %v5857 = vshrl.u32 %v5856, 30
        %v5858 = vshll.u32 %v5857, 30
        %v5859 = vsub.s32 %v5855, %v5858
        %vm5860 = vcmp.lt.s32.totalorder %v5859, 0
        %v5861 = vsub.s32 0, %v5859
        %v5862 = vsel %vm5860, %v5861, %v5859
        %v5863 = vclz %v5862
        %v5864 = vsub.s32 %v5863, 2
        %vm5865 = vcmp.gt.s32.totalorder 0, %v5864
        %v5866 = vsel %vm5865, 0, %v5864
        %v5867 = vsub.s32 32, %v5866
        %v5868 = vshll.u32 %v5859, %v5866
        %v5869 = vshrl.u32 %v5851, %v5867
        %v5870 = vor.u32 %v5868, %v5869
        %v5871 = vsub.s32 4294967266, %v5866
        %v5872 = vadd.s32 %v5871, 127
        %v5873 = vshll.u32 %v5872, 23
        %v5874 = vor.u32 4788187, %v5873
        %v5875 = vand.u32 2147483647, %v5874
        %v5877 = vcvt.s32.f32 %v5870
        %v5878 = vmul.f32 %v5877, %v5875
        %v5879 = vxor.u32 %v5878, 2147483648
        %v5880 = vsel %vm5797, %v5879, %v5878
        %v5881 = vsub.s32 4, %v5857
        %v5882 = vsel %vm5797, %v5881, %v5857
        %v5883 = vsel %vm5796, %v5378, %v5880
        %v5884 = vsel %vm5796, 0, %v5882
        %v5885 = vcosq.f32.pop %v5883
        %v5886 = vsinq.f32.pop %v5883
        %vm5887 = vweird.f32 %v5378
        %v5888 = vadd.s32 %v5884, 3
        %v5889 = vand.u32 %v5888, 3
        %vm5890 = vcmp.lt.s32.totalorder %v5889, 2
        %vm5891 = vcmp.eq.s32.totalorder %v5889, 0
        %v5892 = vxor.u32 %v5886, 2147483648
        %v5893 = vsel %vm5891, %v5885, %v5892
        %vm5894 = vcmp.eq.s32.totalorder %v5889, 2
        %v5895 = vxor.u32 %v5885, 2147483648
        %v5896 = vsel %vm5894, %v5895, %v5886
        %v5897 = vsel %vm5890, %v5893, %v5896
        %v5898 = vsel %vm5887, nan, %v5897
        %v5899 = vmul.f32 %v5482, %v5482
        %v5900 = vmul.f32 %v5586, %v5586
        %v5901 = vmul.f32 %v5690, %v5690
        %v5902 = vmul.f32 %v5794, %v5794
        %v5903 = vmul.f32 %v5898, %v5898
        %v5905 = vlaneseq
        %v5906 = vshrl.u32 %v5905, 7
        %v5907 = vsub.s32 0, %v5906
        %v5908 = vrot.slane %v5367, %v5907
        %v5910 = vmul.f32 %v5908, %v5899
        %v5911 = vmul.f32 %v5908, %v5900
        %v5912 = vmul.f32 %v5908, %v5901
        %v5913 = vmul.f32 %v5908, %v5902
        %v5914 = vmul.f32 %v5908, %v5903
        %v5915 = vadd.f32 %v5359, %v5910
        %v5916 = vadd.f32 %v5360, %v5911
        %v5917 = vadd.f32 %v5361, %v5912
        %v5918 = vadd.f32 %v5362, %v5913
        %v5919 = vadd.f32 %v5363, %v5914
        %s5920 = scalar_lea.vmem [#allocation13], 2
        %v5921 = vld [vmem:[%s5920] sm:$0x1]
        %v5927 = vrot.slane %v5915, 1
        %v5928 = vrot.slane %v5916, 1
        %v5929 = vsel %vm1324, %v5927, %v5928
        %v5930 = vrot.slane %v5917, 1
        %v5931 = vsel %vm1324, %v5928, %v5930
        %v5932 = vrot.slane %v5918, 1
        %v5933 = vsel %vm1324, %v5930, %v5932
        %v5934 = vrot.slane %v5919, 1
        %v5935 = vsel %vm1324, %v5932, %v5934
        %5936 = vrot.lane.b32.xlu0 %v5929, 64
        %v5937 = vpop.permute.xlu0 %5936
        %5938 = vrot.lane.b32.xlu0 %v5931, 64
        %v5939 = vpop.permute.xlu0 %5938
        %5940 = vrot.lane.b32.xlu0 %v5933, 64
        %v5941 = vpop.permute.xlu0 %5940
        %5942 = vrot.lane.b32.xlu0 %v5935, 64
        %v5943 = vpop.permute.xlu0 %5942
        %v5948 = vrot.slane %v5915, 2
        %v5949 = vrot.slane %v5916, 2
        %v5950 = vsel %vm1359, %v5948, %v5949
        %v5951 = vrot.slane %v5917, 2
        %v5952 = vsel %vm1359, %v5949, %v5951
        %v5953 = vrot.slane %v5918, 2
        %v5954 = vsel %vm1359, %v5951, %v5953
        %v5955 = vrot.slane %v5919, 2
        %v5956 = vsel %vm1359, %v5953, %v5955
        %v5957 = vsel %vm1373, %v5915, %v5937
        %v5958 = vsel %vm1373, %v5916, %v5939
        %v5959 = vsel %vm1373, %v5917, %v5941
        %v5960 = vsel %vm1373, %v5918, %v5943
        %s5961 = scalar_lea.vmem [#allocation11], 384
        %v5962 = vld [vmem:[%s5961] sm:$0xff]
        %v5963 = vld [vmem:[%s5961 + $0x8] sm:$0xff]
        %v5964 = vld [vmem:[%s5961 + $0x10] sm:$0xff]
        %v5965 = vld [vmem:[%s5961 + $0x18] sm:$0xff]
        %v5966 = vld [vmem:[%s5961 + $0x20] sm:$0xff]
        %v5967 = vld [vmem:[%s5961 + $0x28] sm:$0xff]
        %v5968 = vld [vmem:[%s5961 + $0x30] sm:$0xff]
        %v5969 = vld [vmem:[%s5961 + $0x38] sm:$0xff]
        %v5970 = vld [vmem:[%s5961 + $0x40] sm:$0xff]
        %v5971 = vld [vmem:[%s5961 + $0x48] sm:$0xff]
        %v5972 = vld [vmem:[%s5961 + $0x50] sm:$0xff]
        %v5973 = vld [vmem:[%s5961 + $0x58] sm:$0xff]
        %v5974 = vld [vmem:[%s5961 + $0x60] sm:$0xff]
        %v5975 = vld [vmem:[%s5961 + $0x68] sm:$0xff]
        %v5976 = vld [vmem:[%s5961 + $0x70] sm:$0xff]
        %v5977 = vld [vmem:[%s5961 + $0x78] sm:$0xff]
        %v5978 = vld [vmem:[%s5961 + $0x80] sm:$0xff]
        %v5979 = vld [vmem:[%s5961 + $0x88] sm:$0xff]
        %v5980 = vld [vmem:[%s5961 + $0x90] sm:$0xff]
        %v5981 = vld [vmem:[%s5961 + $0x98] sm:$0xff]
        %v5982 = vld [vmem:[%s5961 + $0xa0] sm:$0xff]
        %v5983 = vld [vmem:[%s5961 + $0xa8] sm:$0xff]
        %v5984 = vld [vmem:[%s5961 + $0xb0] sm:$0xff]
        %v5985 = vld [vmem:[%s5961 + $0xb8] sm:$0xff]
        %v5987 = vlaneseq
        %v5988 = vshrl.u32 %v5987, 7
        %v5989 = vsub.s32 0, %v5988
        %v5990 = vrot.slane %v5921, %v5989
        %v5992 = vsel %vm1373, %v5950, 0
        %v5994 = vsel %vm1373, %v5952, 0
        %v5996 = vsel %vm1373, %v5954, 0
        %v5998 = vsel %vm1373, %v5956, 0
        %6000 = vmatprep.subr.mxu0 0.0
        %6001 = vmatpush1.msra.mxu0 %v5962
        %6002 = vmatprep.subr.mxu0 0.0
        %6003 = vmatpush1.msra.mxu0 %v5963
        %6004 = vmatprep.subr.mxu0 0.0
        %6005 = vmatpush1.msra.mxu0 %v5964
        %6006 = vmatprep.subr.mxu0 0.0
        %6007 = vmatpush1.msra.mxu0 %v5965
        %6008 = vmatprep.subr.mxu0 0.0
        %6009 = vmatpush1.msra.mxu0 %v5966
        %6010 = vmatprep.subr.mxu0 0.0
        %6011 = vmatpush1.msra.mxu0 %v5967
        %6012 = vmatprep.subr.mxu0 0.0
        %6013 = vmatpush1.msra.mxu0 %v5968
        %6014 = vmatprep.subr.mxu0 0.0
        %6015 = vmatpush1.msra.mxu0 %v5969
        %6016 = vmatprep.subr.mxu0 0.0
        %6017 = vmatpush1.msra.mxu0 %v5970
        %6018 = vmatprep.subr.mxu0 0.0
        %6019 = vmatpush1.msra.mxu0 %v5971
        %6020 = vmatprep.subr.mxu0 0.0
        %6021 = vmatpush1.msra.mxu0 %v5972
        %6022 = vmatprep.subr.mxu0 0.0
        %6023 = vmatpush1.msra.mxu0 %v5973
        %6024 = vmatprep.subr.mxu0 0.0
        %6025 = vmatpush1.msra.mxu0 %v5974
        %6026 = vmatprep.subr.mxu0 0.0
        %6027 = vmatpush1.msra.mxu0 %v5975
        %6028 = vmatprep.subr.mxu0 0.0
        %6029 = vmatpush1.msra.mxu0 %v5976
        %6030 = vmatprep.subr.mxu0 0.0
        %6031 = vmatpush1.msra.mxu0 %v5977
        %6032 = vmatprep.subr.mxu0 0.0
        %6033 = vmatpush1.msra.mxu0 %v5978
        %6034 = vmatprep.subr.mxu0 0.0
        %6035 = vmatpush1.msra.mxu0 %v5979
        %6036 = vmatprep.subr.mxu0 0.0
        %6037 = vmatpush1.msra.mxu0 %v5980
        %6038 = vmatprep.subr.mxu0 0.0
        %6039 = vmatpush1.msra.mxu0 %v5981
        %6040 = vmatprep.subr.mxu0 0.0
        %6041 = vmatpush1.msra.mxu0 %v5982
        %6042 = vmatprep.subr.mxu0 0.0
        %6043 = vmatpush1.msra.mxu0 %v5983
        %6044 = vmatprep.subr.mxu0 0.0
        %6045 = vmatpush1.msra.mxu0 %v5984
        %6046 = vmatprep.subr.mxu0 0.0
        %6047 = vmatpush1.msra.mxu0 %v5985
        %6048 = vmatprep.subr.mxu0 0.0
        %6049 = vmatpush1.msra.mxu0 0.0
        %6050 = vmatprep.subr.mxu0 0.0
        %6051 = vmatpush1.msra.mxu0 0.0
        %6052 = vmatprep.subr.mxu0 0.0
        %6053 = vmatpush1.msra.mxu0 0.0
        %6054 = vmatprep.subr.mxu0 0.0
        %6055 = vmatpush1.msra.mxu0 0.0
        %6056 = vmatprep.subr.mxu0 0.0
        %6057 = vmatpush1.msra.mxu0 0.0
        %6058 = vmatprep.subr.mxu0 0.0
        %6059 = vmatpush1.msra.mxu0 0.0
        %6060 = vmatprep.subr.mxu0 0.0
        %6061 = vmatpush1.msra.mxu0 0.0
        %6062 = vmatprep.subr.mxu0 0.0
        %6063 = vmatpush1.msra.mxu0 0.0
        %6064 = vmatprep.mubr.f32.mxu0 %v5992
        %6065 = vmatmul.mubr.f32.gmra.mrb[0].mxu0 %v5957
        %v6066 = vpop.f32.mrb[0].mxu0
        %v6067 = vadd.f32 %v5990, %v6066
        %v6068 = vpop.f32.mrb[0].mxu0
        %6069 = vmatprep.mubr.f32.mxu0 %v5994
        %6070 = vmatmul.mubr.f32.gmra.mrb[0].mxu0 %v5958
        %v6071 = vpop.f32.mrb[0].mxu0
        %v6072 = vadd.f32 %v5990, %v6071
        %v6073 = vpop.f32.mrb[0].mxu0
        %6074 = vmatprep.mubr.f32.mxu0 %v5996
        %6075 = vmatmul.mubr.f32.gmra.mrb[0].mxu0 %v5959
        %v6076 = vpop.f32.mrb[0].mxu0
        %v6077 = vadd.f32 %v5990, %v6076
        %v6078 = vpop.f32.mrb[0].mxu0
        %6079 = vmatprep.mubr.f32.mxu0 %v5998
        %6080 = vmatmul.mubr.f32.gmra.mrb[0].mxu0 %v5960
        %v6081 = vpop.f32.mrb[0].mxu0
        %v6082 = vadd.f32 %v5990, %v6081
        %v6083 = vpop.f32.mrb[0].mxu0
        %6084 = vdwg.mxu0
        %v6090 = vrot.slane %v4498, 6
        %v6091 = vrot.slane %v4499, 6
        %v6092 = vsel %vm3409, %v6090, %v6091
        %v6093 = vrot.slane %v4500, 6
        %v6094 = vsel %vm3409, %v6091, %v6093
        %v6095 = vrot.slane %v4501, 6
        %v6096 = vsel %vm3409, %v6093, %v6095
        %v6097 = vrot.slane %v4502, 6
        %v6098 = vsel %vm3409, %v6095, %v6097
        %v6103 = vadd.f32 %v6067, %v6092
        %v6104 = vadd.f32 %v6072, %v6094
        %v6105 = vadd.f32 %v6077, %v6096
        %v6106 = vadd.f32 %v6082, %v6098
        %6107 = vst.msk [vmem:[%s484] sm:$0xff] %vm1373, %v6103
        %6108 = vst.msk [vmem:[%s484 + $0x8] sm:$0xff] %vm1373, %v6104
        %6109 = vst.msk [vmem:[%s484 + $0x10] sm:$0xff] %vm1373, %v6105
        %6110 = vst.msk [vmem:[%s484 + $0x18] sm:$0xff] %vm1373, %v6106
        %s6111 = sand.u32 %s248, 1
        %s6112 = scalar_lea.sflag [#allocation4], %s6111
        %s6113 = sand.u32 %s248, 1
        %s6114 = smul.addr %s6113, 32
        %s6115 = scalar_lea.vmem [#allocation17], %s6114
        // Predicated region
        $region93: #{amp_block_forward.1} parent=55 // pred_check
          %p6116 = pneg %p258
        $region94: #{amp_block_forward.1} parent=55 // pred_check_branch
          %6118 = sbr.rel (%p6116) target = $region96
        $region95: #{amp_block_forward.1} parent=55 // pred_region
          %s6119 = smul.u32 4, %s35
          %s6121 = ssub.s32 512, 512
          %6122 = vsyncadd %s6112, %s6121
          %s6123 = smul.addr %s34, 16
          %s6124 = sadd.s32 %s6119, %s6123
          %s6125 = smul.addr %s6124, 128
          %s6126 = scalar_lea.hbm %s9, %s6125
          %s6127 = sshll.u32 %s6115, 4
          %s6128 = int_to_ptr.vmem [resolvable:$true] %s6127
          %6133 = dma.vmem_to_hbm [thread:$0]  %s6128, 512, %s6126, %s6112, 128, 128, 8
        $region96: #{amp_block_forward.1} parent=55 // pred_fallthru
          _
      $region56: #{amp_block_forward.1} parent=5 // pred_fallthru
        _
      %p6134 = scmp.le.s32.totalorder 2, %s25
      // Predicated region
      $region97: #{amp_block_forward.1} parent=5 // pred_check
        %p6135 = pneg %p6134
      $region98: #{amp_block_forward.1} parent=5 // pred_check_branch
        %6137 = sbr.rel (%p6135) target = $region100
      $region99: #{amp_block_forward.1} parent=5 // pred_region
        %s6138 = ssub.s32 %s25, 2
        // Predicated region
        $region101: #{amp_block_forward.1} parent=99 // pred_check
          %p6139 = pneg %p264
        $region102: #{amp_block_forward.1} parent=99 // pred_check_branch
          %6141 = sbr.rel (%p6139) target = $region104
        $region103: #{amp_block_forward.1} parent=99 // pred_region
          %s6142 = sand.u32 %s249, 1
          %s6143 = scalar_lea.sflag [#allocation4], %s6142
          %s6144 = sand.u32 %s249, 1
          %s6145 = smul.addr %s6144, 32
          %s6146 = scalar_lea.vmem [#allocation17], %s6145
          %6147 = dma.done %s6143, 512
        $region104: #{amp_block_forward.1} parent=99 // pred_fallthru
          _
      $region100: #{amp_block_forward.1} parent=5 // pred_fallthru
        _
    $region6: #{amp_block_forward.1} parent=1 // loop_footer
      %s29 = sadd.s32 1, %s25
    $region7: #{amp_block_forward.1} parent=1 // loop_footer_branch
      %24 = sbr.rel target = $region3
    $region8: #{amp_block_forward.1} parent=1 // loop_exit
      _
    %6148 = vsyncpa [#allocation3], 1
    %s6149 = scalar_lea.sflag [#allocation3], 1
    %6150 = vsyncpa %s6149, 1
    %6151 = vsyncpa [#allocation6], 1
    %6152 = vsyncpa [#allocation9], 1
    %6153 = vsyncpa [#allocation12], 1
    %6154 = vsyncpa [#allocation15], 1
    %6155 = vsyncpa [#allocation4], 1
    %s6156 = scalar_lea.sflag [#allocation4], 1
    %6157 = vsyncpa %s6156, 1

</llo_original>
